<compile_context>
chip_gen: v5e
topology: v5e:2x2
jax: 0.10.0
libtpu: 0.0.40
codegen_flags: <defaults>
</compile_context>

<pallas_src>
import functools

import jax
import jax.numpy as jnp
from jax.experimental import pallas as pl
from jax.experimental.pallas import tpu as pltpu

LANE = 128


def _round_up(x, m):
    return ((x + m - 1) // m) * m


def _cdiv(a, b):
    return -(-a // b)


def _vmem_capacity_bytes():
    """Physical VMEM of the local TPU generation (fallback: v7x's 64 MiB)."""
    try:
        info = pltpu.get_tpu_info()
        cap = getattr(info, "vmem_capacity_bytes", None)
        if cap:
            return int(cap)
    except Exception:
        pass
    return 64 << 20


def _tile_vmem_bytes(TH, W, W_out, cin_p, cout_p, K, padding):
    """Real per-grid-step VMEM footprint: 2x double-buffered in/out tiles, the
    f32 accumulator, concatenated-patch temporaries, and the resident
    (single-buffered) weights + folded-BN scale/bias."""
    TH_in = TH + K - 1                         # kernel is always stride-1
    Wp = W + 2 * padding
    in_tile = TH_in * Wp * cin_p * 2           # bf16
    out_tile = TH * W_out * cout_p * 2         # bf16
    acc = TH * W_out * cout_p * 4              # f32 accumulator
    patch = TH * W_out * K * cin_p * 2         # bf16 kw-concatenated patch (+relayout)
    weights = K * K * cin_p * cout_p * 2       # bf16, Buffered(1) -> one copy
    scalebias = 2 * cout_p * 4
    return 2 * in_tile + 2 * out_tile + acc + 2 * patch + weights + scalebias


def _pick_row_tile(N, H_out, W, W_out, cin_p, cout_p, K, padding):
    """Largest output-row tile that (a) fits a generation-aware VMEM budget,
    (b) divides H_out (no wasted rows / trailing slice), and (c) keeps the grid
    product N*R >= 2 (preferably even) so both v7x TensorCores have work."""
    budget = int(_vmem_capacity_bytes() * 0.6)   # headroom for Mosaic scratch

    def fits(t):
        return _tile_vmem_bytes(t, W, W_out, cin_p, cout_p, K, padding) <= budget

    divisors = [t for t in range(1, H_out + 1) if H_out % t == 0 and fits(t)]
    if divisors:
        pref = divisors
        if N < 2:
            two_step = [t for t in divisors if H_out // t >= 2]
            pref = two_step or divisors
        even = [t for t in pref if (N * (H_out // t)) % 2 == 0]
        return max(even or pref)
    for t in range(H_out, 0, -1):                # no divisor fits: best effort
        if fits(t):
            return t
    return 1


def _conv_bn_relu_kernel(x_ref, w_ref, scale_ref, bias_ref, o_ref, *, TH, W_out, K):
    """One (batch, row-tile) step of Conv(KxK, stride 1) -> folded BN -> ReLU.

    x_ref:     (1, TH+K-1, Wp, Cin_p)   bf16 input slab incl. halo rows (VMEM)
    w_ref:     (K, K*Cin_p, Cout_p)     bf16 weights (VMEM-resident)
    scale_ref: (1, Cout_p)              f32 folded BN scale
    bias_ref:  (1, Cout_p)              f32 folded BN bias
    o_ref:     (1, TH, W_out, Cout_p)   bf16 output slab
    """
    cin_p = x_ref.shape[-1]
    cout_p = o_ref.shape[-1]

    acc = jnp.zeros((TH * W_out, cout_p), jnp.float32)
    for kh in range(K):
        row_slab = x_ref[0, kh:kh + TH, :, :]                     # (TH, Wp, cin_p)
        taps = [row_slab[:, kw:kw + W_out, :] for kw in range(K)]
        patch = taps[0] if K == 1 else jnp.concatenate(taps, axis=-1)
        patch = patch.reshape(TH * W_out, K * cin_p)
        # Deep (K*cin_p) contraction fills the MXU; only K accumulator updates.
        acc = acc + jnp.dot(patch, w_ref[kh], preferred_element_type=jnp.float32)

    y = acc * scale_ref[...] + bias_ref[...]        # folded BN (inference), f32
    y = jnp.maximum(y, 0.0)                         # ReLU
    o_ref[0] = y.reshape(TH, W_out, cout_p).astype(o_ref.dtype)


def conv_bn_relu_nhwc(x_nhwc, weight, scale, bias, *, kernel_size=3,
                      padding=1, row_tile=None):
    """One ConvModule (stride-1 conv -> BN -> ReLU), lane-padded NHWC bf16 I/O.

    x_nhwc: (N, H, W, Cin_p) bf16, Cin_p % 128 == 0
    weight: (K, K*Cin_p, Cout_p) bf16   (rows ordered kw-major within each kh)
    scale/bias: (1, Cout_p) f32 folded BN
    returns (N, H_out, W_out, Cout_p) bf16
    """
    N, H, W, cin_p = x_nhwc.shape
    K = kernel_size
    Kw, KC, cout_p = weight.shape
    assert Kw == K and KC == K * cin_p
    assert cin_p % LANE == 0 and cout_p % LANE == 0

    H_out = H + 2 * padding - K + 1
    W_out = W + 2 * padding - K + 1
    Wp = W + 2 * padding

    TH = row_tile if row_tile is not None else _pick_row_tile(
        N, H_out, W, W_out, cin_p, cout_p, K, padding)
    TH = max(1, min(int(TH), H_out))
    R = _cdiv(H_out, TH)
    TH_in = TH + K - 1

    footprint = _tile_vmem_bytes(TH, W, W_out, cin_p, cout_p, K, padding)
    cap = _vmem_capacity_bytes()
    vmem_limit = int(min(0.9 * cap, max(32 << 20, footprint * 1.5 + (4 << 20))))

    # Fused prep: zero-pad spatially and gather each row tile with its K-1 halo
    # rows so every grid block is an independent Blocked tile.
    # TODO(synk): replace with an in-kernel halo DMA (pl.ANY + make_async_copy)
    # to remove the ~(K-1)/TH HBM duplication and the extra XLA pass.
    Hp_needed = R * TH + K - 1
    extra_h = max(0, Hp_needed - (H + 2 * padding))
    x_pad = jnp.pad(x_nhwc, ((0, 0), (padding, padding + extra_h),
                             (padding, padding), (0, 0)))
    if TH_in == TH and x_pad.shape[1] == R * TH_in:
        # K == 1: non-overlapping tiles, pure reshape (no pre-gather copy).
        x_tiles = x_pad.reshape(N * R, TH_in, Wp, cin_p)
    else:
        x_tiles = jnp.stack(
            [x_pad[:, r * TH: r * TH + TH_in] for r in range(R)],
            axis=1).reshape(N * R, TH_in, Wp, cin_p)

    kernel = functools.partial(_conv_bn_relu_kernel, TH=TH, W_out=W_out, K=K)

    out = pl.pallas_call(
        kernel,
        out_shape=jax.ShapeDtypeStruct((N, R * TH, W_out, cout_p), jnp.bfloat16),
        grid_spec=pltpu.PrefetchScalarGridSpec(
            num_scalar_prefetch=0,
            grid=(N, R),
            in_specs=[
                pl.BlockSpec((1, TH_in, Wp, cin_p),
                             lambda n, r: (n * R + r, 0, 0, 0)),
                # Constant index_map => resident; Buffered(1) frees the 2nd buffer.
                pl.BlockSpec((K, K * cin_p, cout_p), lambda n, r: (0, 0, 0),
                             pipeline_mode=pl.Buffered(1)),
                pl.BlockSpec((1, cout_p), lambda n, r: (0, 0),
                             pipeline_mode=pl.Buffered(1)),
                pl.BlockSpec((1, cout_p), lambda n, r: (0, 0),
                             pipeline_mode=pl.Buffered(1)),
            ],
            out_specs=pl.BlockSpec((1, TH, W_out, cout_p),
                                   lambda n, r: (n, r, 0, 0)),
        ),
        compiler_params=pltpu.CompilerParams(
            dimension_semantics=("parallel", "parallel"),
            vmem_limit_bytes=vmem_limit),
    )(x_tiles, weight, scale, bias)

    return out if R * TH == H_out else out[:, :H_out]


def _im2col_nhwc(x, K, stride, padding):
    """(N,H,W,C) -> (N,H_out,W_out,K*K*C) patches, channel order (kh, kw, c)."""
    N, H, W, C = x.shape
    H_out = (H + 2 * padding - K) // stride + 1
    W_out = (W + 2 * padding - K) // stride + 1
    xp = jnp.pad(x, ((0, 0), (padding, padding), (padding, padding), (0, 0)))
    cols = []
    for kh in range(K):
        for kw in range(K):
            cols.append(xp[:, kh:kh + (H_out - 1) * stride + 1:stride,
                           kw:kw + (W_out - 1) * stride + 1:stride, :])
    return jnp.concatenate(cols, axis=-1)


def make_basic_conv_block_params(key, in_channels, out_channels, num_convs=2,
                                 kernel_size=3, stride=1, eps=1e-5):
    """Deterministic parameter init (shapes match the PyTorch module), plus the
    kernel-ready layouts: bf16 weights as (K, K*Cin_p, Cout_p) (or im2col stem
    layout (1, KKCin_p, Cout_p)), folded-BN scale/bias as (1, Cout_p) f32."""
    params = []
    cout_p = _round_up(out_channels, LANE)
    for i in range(num_convs):
        cin = in_channels if i == 0 else out_channels
        key, kw_, kg, kb, km, kv = jax.random.split(key, 6)
        w_torch = jax.random.normal(
            kw_, (out_channels, cin, kernel_size, kernel_size), jnp.float32) * 0.1
        gamma = 1.0 + 0.1 * jax.random.normal(kg, (out_channels,), jnp.float32)
        beta = 0.1 * jax.random.normal(kb, (out_channels,), jnp.float32)
        mean = 0.1 * jax.random.normal(km, (out_channels,), jnp.float32)
        var = jnp.abs(jax.random.normal(kv, (out_channels,), jnp.float32)) + 0.5
        scale = gamma / jnp.sqrt(var + eps)           # folded BN (inference form)
        bias = beta - mean * scale

        # (Cout,Cin,K,K) -> (K,K,Cin,Cout): contraction-row order (kh, kw, cin)
        # matches both the wrapper im2col and the in-kernel kw-concatenated patch.
        w_khwc = jnp.transpose(w_torch, (2, 3, 1, 0))
        stem = (i == 0) and (stride != 1 or kernel_size * kernel_size * cin <= LANE)
        if stem:
            kkc = kernel_size * kernel_size * cin
            kkc_p = _round_up(kkc, LANE)
            w = jnp.pad(w_khwc.reshape(kkc, out_channels),
                        ((0, kkc_p - kkc), (0, cout_p - out_channels)))
            w = w.reshape(1, kkc_p, cout_p).astype(jnp.bfloat16)
        else:
            cin_p = _round_up(cin, LANE)
            w = jnp.pad(w_khwc, ((0, 0), (0, 0), (0, cin_p - cin),
                                 (0, cout_p - out_channels)))
            w = w.reshape(kernel_size, kernel_size * cin_p,
                          cout_p).astype(jnp.bfloat16)

        scale_p = jnp.pad(scale, (0, cout_p - out_channels)).reshape(1, cout_p)
        bias_p = jnp.pad(bias, (0, cout_p - out_channels)).reshape(1, cout_p)
        params.append(dict(
            weight=w, scale=scale_p.astype(jnp.float32),
            bias=bias_p.astype(jnp.float32),
            w_torch=w_torch, scale_raw=scale, bias_raw=bias,
            in_channels=cin, out_channels=out_channels,
            kernel_size=kernel_size, stem_im2col=stem,
            stride=stride if i == 0 else 1))
    return params


def basic_conv_block_forward(x_nchw, params, *, padding=1, row_tile=None):
    """Forward pass matching BasicConvBlock.forward (NCHW in / NCHW out)."""
    x = jnp.transpose(x_nchw, (0, 2, 3, 1)).astype(jnp.bfloat16)   # NHWC bf16
    for p in params:
        K = p["kernel_size"]
        if p["stem_im2col"]:
            # Small-Cin / strided stem: im2col in the wrapper, 1x1-matmul kernel.
            # TODO(synk): for large-Cin strided convs an in-kernel strided DMA
            # (or space-to-depth phase split) would avoid the K*K im2col blow-up.
            x = _im2col_nhwc(x, K, p["stride"], padding)
            kkc_p = p["weight"].shape[1]
            x = jnp.pad(x, ((0, 0), (0, 0), (0, 0), (0, kkc_p - x.shape[-1])))
            x = conv_bn_relu_nhwc(x, p["weight"], p["scale"], p["bias"],
                                  kernel_size=1, padding=0, row_tile=row_tile)
        else:
            # TODO(synk): stride>1 / dilation>1 on non-stem convs not implemented
            # (the module only strides the first conv; default dilation=1).
            assert p["stride"] == 1
            cin_p = p["weight"].shape[1] // K
            if x.shape[-1] != cin_p:
                x = jnp.pad(x, ((0, 0), (0, 0), (0, 0), (0, cin_p - x.shape[-1])))
            x = conv_bn_relu_nhwc(x, p["weight"], p["scale"], p["bias"],
                                  kernel_size=K, padding=padding,
                                  row_tile=row_tile)
        # TODO(synk): fuse consecutive ConvModules into one pallas_call to remove
        # this inter-conv HBM round trip.
    out = x[..., :params[-1]["out_channels"]].astype(x_nchw.dtype)
    return jnp.transpose(out, (0, 3, 1, 2))            # NHWC -> NCHW


def _reference_forward(x_nchw, params, *, padding=1):
    """Pure-XLA reference with the same precision policy as the kernel (bf16
    inputs/weights, f32 accumulation + BN/ReLU epilogue, bf16 between layers)."""
    x = x_nchw.astype(jnp.bfloat16)
    for p in params:
        w = p["w_torch"].astype(jnp.bfloat16)
        s = p["stride"]
        y = jax.lax.conv_general_dilated(
            x, w, window_strides=(s, s), padding=[(padding, padding)] * 2,
            dimension_numbers=("NCHW", "OIHW", "NCHW"),
            preferred_element_type=jnp.float32)
        y = y * p["scale_raw"][None, :, None, None] + p["bias_raw"][None, :, None, None]
        x = jnp.maximum(y, 0.0).astype(jnp.bfloat16)
    return x.astype(jnp.float32)


if __name__ == "__main__":
    key = jax.random.PRNGKey(0)
    k_x, k_x2, k_p, k_p2 = jax.random.split(key, 4)

    N, Cin, Cout = 2, 4, 8
    x1 = jax.random.normal(k_x, (N, Cin, 16, 16), jnp.float32)

    # 1) default config: stride=1, padding=1, 16x16
    params1 = make_basic_conv_block_params(k_p, Cin, Cout, num_convs=2,
                                           kernel_size=3, stride=1)
    fwd1 = jax.jit(lambda x: basic_conv_block_forward(x, params1, padding=1))
    out1 = jax.block_until_ready(fwd1(x1))
    ref1 = _reference_forward(x1, params1, padding=1)
    assert out1.shape == (N, Cout, 16, 16), out1.shape
    err1 = float(jnp.max(jnp.abs(out1 - ref1)))
    assert jnp.allclose(out1, ref1, atol=2e-2, rtol=2e-2), f"stride=1 mismatch {err1}"

    # 2) strided first conv (the module's downsampling option)
    params2 = make_basic_conv_block_params(k_p2, Cin, Cout, num_convs=2,
                                           kernel_size=3, stride=2)
    fwd2 = jax.jit(lambda x: basic_conv_block_forward(x, params2, padding=1))
    out2 = jax.block_until_ready(fwd2(x1))
    ref2 = _reference_forward(x1, params2, padding=1)
    assert out2.shape == (N, Cout, 8, 8), out2.shape
    err2 = float(jnp.max(jnp.abs(out2 - ref2)))
    assert jnp.allclose(out2, ref2, atol=2e-2, rtol=2e-2), f"stride=2 mismatch {err2}"

    # 3) non-square input + a row tile that does NOT divide H_out
    x3 = jax.random.normal(k_x2, (N, Cin, 12, 16), jnp.float32)
    fwd3 = jax.jit(lambda x: basic_conv_block_forward(x, params1, padding=1,
                                                      row_tile=5))
    out3 = jax.block_until_ready(fwd3(x3))
    ref3 = _reference_forward(x3, params1, padding=1)
    assert out3.shape == (N, Cout, 12, 16), out3.shape
    err3 = float(jnp.max(jnp.abs(out3 - ref3)))
    assert jnp.allclose(out3, ref3, atol=2e-2, rtol=2e-2), f"non-square mismatch {err3}"

    print("KERNEL_OK")
</pallas_src>

<mosaic_0001>
module attributes {stable_mosaic.version = 11 : i64} {
  func.func @_conv_bn_relu_kernel(%arg0: i32, %arg1: i32, %arg2: memref<1x16x16x128xbf16, #tpu.memory_space<vmem>>, %arg3: memref<1x128x128xbf16, #tpu.memory_space<vmem>>, %arg4: memref<1x128xf32, #tpu.memory_space<vmem>>, %arg5: memref<1x128xf32, #tpu.memory_space<vmem>>, %arg6: memref<1x16x16x128xbf16, #tpu.memory_space<vmem>>) attributes {dimension_semantics = [#tpu.dimension_semantics<parallel>, #tpu.dimension_semantics<parallel>], iteration_bounds = array<i64: 2, 1>, scalar_prefetch = 0 : i64, scratch_operands = 0 : i64, tpu.core_type = #tpu.core_type<tc>, window_params = [{transform_indices = @transform_0, window_bounds = array<i64: 1, 16, 16, 128>}, {pipeline_mode = #tpu.pipeline_mode<synchronous>, transform_indices = @transform_1, window_bounds = array<i64: 1, 128, 128>}, {pipeline_mode = #tpu.pipeline_mode<synchronous>, transform_indices = @transform_2, window_bounds = array<i64: 1, 128>}, {pipeline_mode = #tpu.pipeline_mode<synchronous>, transform_indices = @transform_3, window_bounds = array<i64: 1, 128>}, {transform_indices = @transform_4, window_bounds = array<i64: 1, 16, 16, 128>}]} {
    %cst = arith.constant 0.000000e+00 : f32
    %0 = vector.broadcast %cst : f32 to vector<256x128xf32>
    %c0 = arith.constant 0 : index
    %c0_0 = arith.constant 0 : index
    %c0_1 = arith.constant 0 : index
    %c0_2 = arith.constant 0 : index
    %1 = vector.load %arg2[%c0, %c0_0, %c0_1, %c0_2] : memref<1x16x16x128xbf16, #tpu.memory_space<vmem>>, vector<1x16x16x128xbf16>
    %2 = vector.shape_cast %1 : vector<1x16x16x128xbf16> to vector<16x16x128xbf16>
    %3 = vector.shape_cast %2 : vector<16x16x128xbf16> to vector<256x128xbf16>
    %c0_3 = arith.constant 0 : index
    %c0_4 = arith.constant 0 : index
    %c0_5 = arith.constant 0 : index
    %4 = vector.load %arg3[%c0_3, %c0_4, %c0_5] : memref<1x128x128xbf16, #tpu.memory_space<vmem>>, vector<1x128x128xbf16>
    %5 = vector.shape_cast %4 : vector<1x128x128xbf16> to vector<128x128xbf16>
    %cst_6 = arith.constant dense<0.000000e+00> : vector<256x128xf32>
    %6 = tpu.matmul %3, %5, %cst_6 {dimension_numbers = #tpu.dot_dimension_numbers<[1], [0], [0], [1], [0, 0, 1, 1], [], []>} : vector<256x128xbf16>, vector<128x128xbf16>, vector<256x128xf32> -> vector<256x128xf32>
    %7 = arith.addf %0, %6 : vector<256x128xf32>
    %c0_7 = arith.constant 0 : index
    %c0_8 = arith.constant 0 : index
    %8 = vector.load %arg4[%c0_7, %c0_8] : memref<1x128xf32, #tpu.memory_space<vmem>>, vector<1x128xf32>
    %9 = vector.broadcast %8 : vector<1x128xf32> to vector<256x128xf32>
    %10 = arith.mulf %7, %9 : vector<256x128xf32>
    %c0_9 = arith.constant 0 : index
    %c0_10 = arith.constant 0 : index
    %11 = vector.load %arg5[%c0_9, %c0_10] : memref<1x128xf32, #tpu.memory_space<vmem>>, vector<1x128xf32>
    %12 = vector.broadcast %11 : vector<1x128xf32> to vector<256x128xf32>
    %13 = arith.addf %10, %12 : vector<256x128xf32>
    %cst_11 = arith.constant 0.000000e+00 : f32
    %14 = vector.broadcast %cst_11 : f32 to vector<256x128xf32>
    %15 = arith.maximumf %13, %14 : vector<256x128xf32>
    %16 = vector.shape_cast %15 : vector<256x128xf32> to vector<16x16x128xf32>
    %17 = arith.truncf %16 : vector<16x16x128xf32> to vector<16x16x128xbf16>
    %c0_12 = arith.constant 0 : index
    %c0_13 = arith.constant 0 : index
    %c0_14 = arith.constant 0 : index
    %c0_15 = arith.constant 0 : index
    %18 = vector.load %arg6[%c0_12, %c0_13, %c0_14, %c0_15] : memref<1x16x16x128xbf16, #tpu.memory_space<vmem>>, vector<1x16x16x128xbf16>
    %19 = vector.shape_cast %18 : vector<1x16x16x128xbf16> to vector<16x16x128xbf16>
    %20 = vector.shape_cast %17 : vector<16x16x128xbf16> to vector<1x16x16x128xbf16>
    tpu.vector_store %arg6[%c0_12, %c0_13, %c0_14, %c0_15], %20 {strides = array<i32>} : memref<1x16x16x128xbf16, #tpu.memory_space<vmem>>, vector<1x16x16x128xbf16>,
    return
  }
  func.func @transform_0(%arg0: i32, %arg1: i32) -> (i32, i32, i32, i32) {
    %c1_i32 = arith.constant 1 : i32
    %0 = arith.muli %arg0, %c1_i32 : i32
    %1 = arith.addi %0, %arg1 : i32
    %c0_i32 = arith.constant 0 : i32
    %c0_i32_0 = arith.constant 0 : i32
    %c0_i32_1 = arith.constant 0 : i32
    %c0_i32_2 = arith.constant 0 : i32
    return %1, %c0_i32, %c0_i32_0, %c0_i32_1 : i32, i32, i32, i32
  }
  func.func @transform_1(%arg0: i32, %arg1: i32) -> (i32, i32, i32) {
    %c0_i32 = arith.constant 0 : i32
    %c0_i32_0 = arith.constant 0 : i32
    %c0_i32_1 = arith.constant 0 : i32
    %c0_i32_2 = arith.constant 0 : i32
    return %c0_i32, %c0_i32_0, %c0_i32_1 : i32, i32, i32
  }
  func.func @transform_2(%arg0: i32, %arg1: i32) -> (i32, i32) {
    %c0_i32 = arith.constant 0 : i32
    %c0_i32_0 = arith.constant 0 : i32
    %c0_i32_1 = arith.constant 0 : i32
    return %c0_i32, %c0_i32_0 : i32, i32
  }
  func.func @transform_3(%arg0: i32, %arg1: i32) -> (i32, i32) {
    %c0_i32 = arith.constant 0 : i32
    %c0_i32_0 = arith.constant 0 : i32
    %c0_i32_1 = arith.constant 0 : i32
    return %c0_i32, %c0_i32_0 : i32, i32
  }
  func.func @transform_4(%arg0: i32, %arg1: i32) -> (i32, i32, i32, i32) {
    %c0_i32 = arith.constant 0 : i32
    %c0_i32_0 = arith.constant 0 : i32
    %c0_i32_1 = arith.constant 0 : i32
    return %arg0, %arg1, %c0_i32, %c0_i32_0 : i32, i32, i32, i32
  }
}

module attributes {stable_mosaic.version = 11 : i64} {
  func.func @_conv_bn_relu_kernel(%arg0: i32, %arg1: i32, %arg2: memref<1x18x18x128xbf16, #tpu.memory_space<vmem>>, %arg3: memref<3x384x128xbf16, #tpu.memory_space<vmem>>, %arg4: memref<1x128xf32, #tpu.memory_space<vmem>>, %arg5: memref<1x128xf32, #tpu.memory_space<vmem>>, %arg6: memref<1x16x16x128xbf16, #tpu.memory_space<vmem>>) attributes {dimension_semantics = [#tpu.dimension_semantics<parallel>, #tpu.dimension_semantics<parallel>], iteration_bounds = array<i64: 2, 1>, scalar_prefetch = 0 : i64, scratch_operands = 0 : i64, tpu.core_type = #tpu.core_type<tc>, window_params = [{transform_indices = @transform_0, window_bounds = array<i64: 1, 18, 18, 128>}, {pipeline_mode = #tpu.pipeline_mode<synchronous>, transform_indices = @transform_1, window_bounds = array<i64: 3, 384, 128>}, {pipeline_mode = #tpu.pipeline_mode<synchronous>, transform_indices = @transform_2, window_bounds = array<i64: 1, 128>}, {pipeline_mode = #tpu.pipeline_mode<synchronous>, transform_indices = @transform_3, window_bounds = array<i64: 1, 128>}, {transform_indices = @transform_4, window_bounds = array<i64: 1, 16, 16, 128>}]} {
    %cst = arith.constant 0.000000e+00 : f32
    %0 = vector.broadcast %cst : f32 to vector<256x128xf32>
    %c0 = arith.constant 0 : index
    %c0_0 = arith.constant 0 : index
    %c0_1 = arith.constant 0 : index
    %c0_2 = arith.constant 0 : index
    %1 = vector.load %arg2[%c0, %c0_0, %c0_1, %c0_2] : memref<1x18x18x128xbf16, #tpu.memory_space<vmem>>, vector<1x16x18x128xbf16>
    %2 = vector.shape_cast %1 : vector<1x16x18x128xbf16> to vector<16x18x128xbf16>
    %3 = vector.extract_strided_slice %2 {offsets = [0, 0, 0], sizes = [16, 16, 128], strides = [1, 1, 1]} : vector<16x18x128xbf16> to vector<16x16x128xbf16>
    %4 = vector.extract_strided_slice %2 {offsets = [0, 1, 0], sizes = [16, 16, 128], strides = [1, 1, 1]} : vector<16x18x128xbf16> to vector<16x16x128xbf16>
    %5 = vector.extract_strided_slice %2 {offsets = [0, 2, 0], sizes = [16, 16, 128], strides = [1, 1, 1]} : vector<16x18x128xbf16> to vector<16x16x128xbf16>
    %6 = tpu.concatenate %3, %4, %5 in 2 : vector<16x16x128xbf16>, vector<16x16x128xbf16>, vector<16x16x128xbf16> -> vector<16x16x384xbf16>
    %7 = vector.shape_cast %6 : vector<16x16x384xbf16> to vector<256x384xbf16>
    %c0_3 = arith.constant 0 : index
    %c0_4 = arith.constant 0 : index
    %c0_5 = arith.constant 0 : index
    %8 = vector.load %arg3[%c0_3, %c0_4, %c0_5] : memref<3x384x128xbf16, #tpu.memory_space<vmem>>, vector<1x384x128xbf16>
    %9 = vector.shape_cast %8 : vector<1x384x128xbf16> to vector<384x128xbf16>
    %cst_6 = arith.constant dense<0.000000e+00> : vector<256x128xf32>
    %10 = tpu.matmul %7, %9, %cst_6 {dimension_numbers = #tpu.dot_dimension_numbers<[1], [0], [0], [1], [0, 0, 1, 1], [], []>} : vector<256x384xbf16>, vector<384x128xbf16>, vector<256x128xf32> -> vector<256x128xf32>
    %11 = arith.addf %0, %10 : vector<256x128xf32>
    %c0_7 = arith.constant 0 : index
    %c1 = arith.constant 1 : index
    %c0_8 = arith.constant 0 : index
    %c0_9 = arith.constant 0 : index
    %12 = vector.load %arg2[%c0_7, %c1, %c0_8, %c0_9] : memref<1x18x18x128xbf16, #tpu.memory_space<vmem>>, vector<1x16x18x128xbf16>
    %13 = vector.shape_cast %12 : vector<1x16x18x128xbf16> to vector<16x18x128xbf16>
    %14 = vector.extract_strided_slice %13 {offsets = [0, 0, 0], sizes = [16, 16, 128], strides = [1, 1, 1]} : vector<16x18x128xbf16> to vector<16x16x128xbf16>
    %15 = vector.extract_strided_slice %13 {offsets = [0, 1, 0], sizes = [16, 16, 128], strides = [1, 1, 1]} : vector<16x18x128xbf16> to vector<16x16x128xbf16>
    %16 = vector.extract_strided_slice %13 {offsets = [0, 2, 0], sizes = [16, 16, 128], strides = [1, 1, 1]} : vector<16x18x128xbf16> to vector<16x16x128xbf16>
    %17 = tpu.concatenate %14, %15, %16 in 2 : vector<16x16x128xbf16>, vector<16x16x128xbf16>, vector<16x16x128xbf16> -> vector<16x16x384xbf16>
    %18 = vector.shape_cast %17 : vector<16x16x384xbf16> to vector<256x384xbf16>
    %c1_10 = arith.constant 1 : index
    %c0_11 = arith.constant 0 : index
    %c0_12 = arith.constant 0 : index
    %19 = vector.load %arg3[%c1_10, %c0_11, %c0_12] : memref<3x384x128xbf16, #tpu.memory_space<vmem>>, vector<1x384x128xbf16>
    %20 = vector.shape_cast %19 : vector<1x384x128xbf16> to vector<384x128xbf16>
    %cst_13 = arith.constant dense<0.000000e+00> : vector<256x128xf32>
    %21 = tpu.matmul %18, %20, %cst_13 {dimension_numbers = #tpu.dot_dimension_numbers<[1], [0], [0], [1], [0, 0, 1, 1], [], []>} : vector<256x384xbf16>, vector<384x128xbf16>, vector<256x128xf32> -> vector<256x128xf32>
    %22 = arith.addf %11, %21 : vector<256x128xf32>
    %c0_14 = arith.constant 0 : index
    %c2 = arith.constant 2 : index
    %c0_15 = arith.constant 0 : index
    %c0_16 = arith.constant 0 : index
    %23 = vector.load %arg2[%c0_14, %c2, %c0_15, %c0_16] : memref<1x18x18x128xbf16, #tpu.memory_space<vmem>>, vector<1x16x18x128xbf16>
    %24 = vector.shape_cast %23 : vector<1x16x18x128xbf16> to vector<16x18x128xbf16>
    %25 = vector.extract_strided_slice %24 {offsets = [0, 0, 0], sizes = [16, 16, 128], strides = [1, 1, 1]} : vector<16x18x128xbf16> to vector<16x16x128xbf16>
    %26 = vector.extract_strided_slice %24 {offsets = [0, 1, 0], sizes = [16, 16, 128], strides = [1, 1, 1]} : vector<16x18x128xbf16> to vector<16x16x128xbf16>
    %27 = vector.extract_strided_slice %24 {offsets = [0, 2, 0], sizes = [16, 16, 128], strides = [1, 1, 1]} : vector<16x18x128xbf16> to vector<16x16x128xbf16>
    %28 = tpu.concatenate %25, %26, %27 in 2 : vector<16x16x128xbf16>, vector<16x16x128xbf16>, vector<16x16x128xbf16> -> vector<16x16x384xbf16>
    %29 = vector.shape_cast %28 : vector<16x16x384xbf16> to vector<256x384xbf16>
    %c2_17 = arith.constant 2 : index
    %c0_18 = arith.constant 0 : index
    %c0_19 = arith.constant 0 : index
    %30 = vector.load %arg3[%c2_17, %c0_18, %c0_19] : memref<3x384x128xbf16, #tpu.memory_space<vmem>>, vector<1x384x128xbf16>
    %31 = vector.shape_cast %30 : vector<1x384x128xbf16> to vector<384x128xbf16>
    %cst_20 = arith.constant dense<0.000000e+00> : vector<256x128xf32>
    %32 = tpu.matmul %29, %31, %cst_20 {dimension_numbers = #tpu.dot_dimension_numbers<[1], [0], [0], [1], [0, 0, 1, 1], [], []>} : vector<256x384xbf16>, vector<384x128xbf16>, vector<256x128xf32> -> vector<256x128xf32>
    %33 = arith.addf %22, %32 : vector<256x128xf32>
    %c0_21 = arith.constant 0 : index
    %c0_22 = arith.constant 0 : index
    %34 = vector.load %arg4[%c0_21, %c0_22] : memref<1x128xf32, #tpu.memory_space<vmem>>, vector<1x128xf32>
    %35 = vector.broadcast %34 : vector<1x128xf32> to vector<256x128xf32>
    %36 = arith.mulf %33, %35 : vector<256x128xf32>
    %c0_23 = arith.constant 0 : index
    %c0_24 = arith.constant 0 : index
    %37 = vector.load %arg5[%c0_23, %c0_24] : memref<1x128xf32, #tpu.memory_space<vmem>>, vector<1x128xf32>
    %38 = vector.broadcast %37 : vector<1x128xf32> to vector<256x128xf32>
    %39 = arith.addf %36, %38 : vector<256x128xf32>
    %cst_25 = arith.constant 0.000000e+00 : f32
    %40 = vector.broadcast %cst_25 : f32 to vector<256x128xf32>
    %41 = arith.maximumf %39, %40 : vector<256x128xf32>
    %42 = vector.shape_cast %41 : vector<256x128xf32> to vector<16x16x128xf32>
    %43 = arith.truncf %42 : vector<16x16x128xf32> to vector<16x16x128xbf16>
    %c0_26 = arith.constant 0 : index
    %c0_27 = arith.constant 0 : index
    %c0_28 = arith.constant 0 : index
    %c0_29 = arith.constant 0 : index
    %44 = vector.load %arg6[%c0_26, %c0_27, %c0_28, %c0_29] : memref<1x16x16x128xbf16, #tpu.memory_space<vmem>>, vector<1x16x16x128xbf16>
    %45 = vector.shape_cast %44 : vector<1x16x16x128xbf16> to vector<16x16x128xbf16>
    %46 = vector.shape_cast %43 : vector<16x16x128xbf16> to vector<1x16x16x128xbf16>
    tpu.vector_store %arg6[%c0_26, %c0_27, %c0_28, %c0_29], %46 {strides = array<i32>} : memref<1x16x16x128xbf16, #tpu.memory_space<vmem>>, vector<1x16x16x128xbf16>,
    return
  }
  func.func @transform_0(%arg0: i32, %arg1: i32) -> (i32, i32, i32, i32) {
    %c1_i32 = arith.constant 1 : i32
    %0 = arith.muli %arg0, %c1_i32 : i32
    %1 = arith.addi %0, %arg1 : i32
    %c0_i32 = arith.constant 0 : i32
    %c0_i32_0 = arith.constant 0 : i32
    %c0_i32_1 = arith.constant 0 : i32
    %c0_i32_2 = arith.constant 0 : i32
    return %1, %c0_i32, %c0_i32_0, %c0_i32_1 : i32, i32, i32, i32
  }
  func.func @transform_1(%arg0: i32, %arg1: i32) -> (i32, i32, i32) {
    %c0_i32 = arith.constant 0 : i32
    %c0_i32_0 = arith.constant 0 : i32
    %c0_i32_1 = arith.constant 0 : i32
    %c0_i32_2 = arith.constant 0 : i32
    return %c0_i32, %c0_i32_0, %c0_i32_1 : i32, i32, i32
  }
  func.func @transform_2(%arg0: i32, %arg1: i32) -> (i32, i32) {
    %c0_i32 = arith.constant 0 : i32
    %c0_i32_0 = arith.constant 0 : i32
    %c0_i32_1 = arith.constant 0 : i32
    return %c0_i32, %c0_i32_0 : i32, i32
  }
  func.func @transform_3(%arg0: i32, %arg1: i32) -> (i32, i32) {
    %c0_i32 = arith.constant 0 : i32
    %c0_i32_0 = arith.constant 0 : i32
    %c0_i32_1 = arith.constant 0 : i32
    return %c0_i32, %c0_i32_0 : i32, i32
  }
  func.func @transform_4(%arg0: i32, %arg1: i32) -> (i32, i32, i32, i32) {
    %c0_i32 = arith.constant 0 : i32
    %c0_i32_0 = arith.constant 0 : i32
    %c0_i32_1 = arith.constant 0 : i32
    return %arg0, %arg1, %c0_i32, %c0_i32_0 : i32, i32, i32, i32
  }
}

</mosaic_0001>

<llo_original>
// kernel: _lambda_.2
$region0: #{_lambda_.2}
  #allocation0 [shape = 'u32[]', space=smem, size = 0x4, offset = 0x4, fixed_abs, tag = 'smem constant byte address 0x4 - core index']
  #allocation1 [shape = 'u32[72,128]{1,0:T(1,128)}', space=vmem, size = 0x9000, scoped, tag = 'internal scratch']
  %s0 = inlined_call_operand.vmem [shape: bf16[2,16,16,128], index: 0, kind: input, shape index: {}]
  %s1 = inlined_call_operand.vmem [shape: bf16[1,128,128], index: 1, kind: input, shape index: {}]
  %s2 = inlined_call_operand.vmem [shape: f32[1,128], index: 2, kind: input, shape index: {}]
  %s3 = inlined_call_operand.vmem [shape: f32[1,128], index: 3, kind: input, shape index: {}]
  %s4 = inlined_call_operand.vmem [shape: bf16[2,16,16,128], index: 4, kind: output, shape index: {}]
  %s5 = sld [smem:[#allocation0]]
  $region49: #{_lambda_.2} parent=0
    _
  %s7 = ssub.s32 1, %s5
  %s8 = scalar_select 0, %s7, %s5
  loop: start=0, step=1, limit=4
  $region2: #{_lambda_.2} parent=0 // loop_pre_header
    _
  $region3: #{_lambda_.2} parent=0 // loop_header
    %s10 = sphi 0, %s14
    %p11 = scmp.ge.s32.totalorder %s10, 4
    %s17 = sphi 0, %s29
    %s18 = sphi 0, %s25
    %s19 = sphi 0, %s17
    %s20 = sphi 0, %s18
    %s21 = sphi 0, %s19
    %s22 = sphi 0, %s20
    %s34 = sphi 0, %s36
    %s37 = sphi 0, %s34
    %s38 = sphi 0, %s37
    %s54 = sphi 0, %s38
    %s58 = sphi 0, %s58
    %s60 = sphi 0, %s58
    %s61 = sphi 0, %s60
    %s75 = sphi 0, %s61
    %s79 = sphi 0, %s79
    %s81 = sphi 0, %s79
    %s82 = sphi 0, %s81
    %s96 = sphi 0, %s82
    %s100 = sphi 0, %s100
    %s102 = sphi 0, %s100
    %s103 = sphi 0, %s102
    %s117 = sphi 0, %s103
    %s125 = sphi 0, %s127
    %s128 = sphi 0, %s125
    %s129 = sphi 0, %s128
    %s145 = sphi 0, %s129
  $region4: #{_lambda_.2} parent=0 // loop_header_branch
    %13 = sbr.rel (%p11) target = $region8
  $region5: #{_lambda_.2} parent=0 // loop_body
    %s15 = ssub.s32 %s10, 1
    %s16 = ssub.s32 %s10, 2
    %s23 = sadd.s32 1, %s18
    %p24 = scmp.ge.s32.totalorder %s23, 1
    %s25 = scalar_select %p24, 0, %s23
    %s26 = sadd.s32 1, %s17
    %s27 = scalar_select %p24, %s26, %s17
    %p28 = scmp.ge.s32.totalorder %s27, 2
    %s29 = scalar_select %p28, 0, %s27
    %s30 = sadd.s32 %s17, %s18
    %s31 = sadd.s32 %s29, %s25
    %s32 = ssub.s32 %s30, %s31
    %p33 = scmp.eq.s32.totalorder %s32, 0
    %s35 = sadd.s32 %s34, 1
    %s36 = scalar_select %p33, %s34, %s35
    %p39 = pneg %p33
    %p40 = scmp.eq.s32.totalorder %s10, 1
    %p41 = por %p39, %p40
    %p42 = scmp.ne.s32.totalorder %s34, %s37
    %p43 = scmp.eq.s32.totalorder %s10, 0
    %p44 = por %p42, %p43
    %p45 = scmp.ne.s32.totalorder %s34, %s37
    %p46 = scmp.eq.s32.totalorder %s15, 1
    %p47 = por %p45, %p46
    %p48 = scmp.ne.s32.totalorder %s37, %s38
    %p49 = scmp.eq.s32.totalorder %s15, 0
    %p50 = por %p48, %p49
    %p51 = scmp.ne.s32.totalorder %s37, %s38
    %p52 = scmp.eq.s32.totalorder %s16, 1
    %p53 = por %p51, %p52
    %p55 = scmp.ne.s32.totalorder %s38, %s54
    %p56 = scmp.eq.s32.totalorder %s16, 0
    %p57 = por %p55, %p56
    %s59 = sadd.s32 %s58, 1
    %p62 = scmp.eq.s32.totalorder %s10, 1
    %p63 = scmp.ne.s32.totalorder %s58, %s60
    %p64 = scmp.eq.s32.totalorder %s10, 0
    %p65 = por %p63, %p64
    %p66 = scmp.ne.s32.totalorder %s58, %s60
    %p67 = scmp.eq.s32.totalorder %s15, 1
    %p68 = por %p66, %p67
    %p69 = scmp.ne.s32.totalorder %s60, %s61
    %p70 = scmp.eq.s32.totalorder %s15, 0
    %p71 = por %p69, %p70
    %p72 = scmp.ne.s32.totalorder %s60, %s61
    %p73 = scmp.eq.s32.totalorder %s16, 1
    %p74 = por %p72, %p73
    %p76 = scmp.ne.s32.totalorder %s61, %s75
    %p77 = scmp.eq.s32.totalorder %s16, 0
    %p78 = por %p76, %p77
    %s80 = sadd.s32 %s79, 1
    %p83 = scmp.eq.s32.totalorder %s10, 1
    %p84 = scmp.ne.s32.totalorder %s79, %s81
    %p85 = scmp.eq.s32.totalorder %s10, 0
    %p86 = por %p84, %p85
    %p87 = scmp.ne.s32.totalorder %s79, %s81
    %p88 = scmp.eq.s32.totalorder %s15, 1
    %p89 = por %p87, %p88
    %p90 = scmp.ne.s32.totalorder %s81, %s82
    %p91 = scmp.eq.s32.totalorder %s15, 0
    %p92 = por %p90, %p91
    %p93 = scmp.ne.s32.totalorder %s81, %s82
    %p94 = scmp.eq.s32.totalorder %s16, 1
    %p95 = por %p93, %p94
    %p97 = scmp.ne.s32.totalorder %s82, %s96
    %p98 = scmp.eq.s32.totalorder %s16, 0
    %p99 = por %p97, %p98
    %s101 = sadd.s32 %s100, 1
    %p104 = scmp.eq.s32.totalorder %s10, 1
    %p105 = scmp.ne.s32.totalorder %s100, %s102
    %p106 = scmp.eq.s32.totalorder %s10, 0
    %p107 = por %p105, %p106
    %p108 = scmp.ne.s32.totalorder %s100, %s102
    %p109 = scmp.eq.s32.totalorder %s15, 1
    %p110 = por %p108, %p109
    %p111 = scmp.ne.s32.totalorder %s102, %s103
    %p112 = scmp.eq.s32.totalorder %s15, 0
    %p113 = por %p111, %p112
    %p114 = scmp.ne.s32.totalorder %s102, %s103
    %p115 = scmp.eq.s32.totalorder %s16, 1
    %p116 = por %p114, %p115
    %p118 = scmp.ne.s32.totalorder %s103, %s117
    %p119 = scmp.eq.s32.totalorder %s16, 0
    %p120 = por %p118, %p119
    %s121 = ssub.s32 %s17, %s29
    %s122 = ssub.s32 %s18, %s25
    %s123 = sor.u32 %s121, %s122
    %p124 = scmp.eq.s32.totalorder %s123, 0
    %s126 = sadd.s32 %s125, 1
    %s127 = scalar_select %p124, %s125, %s126
    %p130 = pneg %p124
    %p131 = scmp.eq.s32.totalorder %s10, 1
    %p132 = por %p130, %p131
    %p133 = scmp.ne.s32.totalorder %s125, %s128
    %p134 = scmp.eq.s32.totalorder %s10, 0
    %p135 = por %p133, %p134
    %p136 = scmp.ne.s32.totalorder %s125, %s128
    %p137 = scmp.eq.s32.totalorder %s15, 1
    %p138 = por %p136, %p137
    %p139 = scmp.ne.s32.totalorder %s128, %s129
    %p140 = scmp.eq.s32.totalorder %s15, 0
    %p141 = por %p139, %p140
    %p142 = scmp.ne.s32.totalorder %s128, %s129
    %p143 = scmp.eq.s32.totalorder %s16, 1
    %p144 = por %p142, %p143
    %p146 = scmp.ne.s32.totalorder %s129, %s145
    %p147 = scmp.eq.s32.totalorder %s16, 0
    %p148 = por %p146, %p147
    %p149 = scmp.le.s32.totalorder 1, %s10
    %p150 = scmp.lt.s32.totalorder %s10, 3
    %p151 = pnand %p149, %p150
    %p152 = pneg %p151
    // Predicated region
    $region9: #{_lambda_.2} parent=5 // pred_check
      _
    $region10: #{_lambda_.2} parent=5 // pred_check_branch
      %154 = sbr.rel (%p151) target = $region12
    $region11: #{_lambda_.2} parent=5 // pred_region
      %s155 = ssub.s32 %s10, 1
      // Predicated region
      $region13: #{_lambda_.2} parent=11 // pred_check
        %p156 = pneg %p71
      $region14: #{_lambda_.2} parent=11 // pred_check_branch
        %158 = sbr.rel (%p156) target = $region16
      $region15: #{_lambda_.2} parent=11 // pred_region
        _
      $region16: #{_lambda_.2} parent=11 // pred_fallthru
        _
      // Predicated region
      $region17: #{_lambda_.2} parent=11 // pred_check
        %p159 = pneg %p92
      $region18: #{_lambda_.2} parent=11 // pred_check_branch
        %161 = sbr.rel (%p159) target = $region20
      $region19: #{_lambda_.2} parent=11 // pred_region
        _
      $region20: #{_lambda_.2} parent=11 // pred_fallthru
        _
      // Predicated region
      $region21: #{_lambda_.2} parent=11 // pred_check
        %p162 = pneg %p113
      $region22: #{_lambda_.2} parent=11 // pred_check_branch
        %164 = sbr.rel (%p162) target = $region24
      $region23: #{_lambda_.2} parent=11 // pred_region
        _
      $region24: #{_lambda_.2} parent=11 // pred_fallthru
        _
    $region12: #{_lambda_.2} parent=5 // pred_fallthru
      _
    %p165 = scmp.lt.s32.totalorder %s10, 2
    // Predicated region
    $region25: #{_lambda_.2} parent=5 // pred_check
      %p166 = pneg %p165
    $region26: #{_lambda_.2} parent=5 // pred_check_branch
      %168 = sbr.rel (%p166) target = $region28
    $region27: #{_lambda_.2} parent=5 // pred_region
      // Predicated region
      $region29: #{_lambda_.2} parent=27 // pred_check
        %p169 = pneg %p44
      $region30: #{_lambda_.2} parent=27 // pred_check_branch
        %171 = sbr.rel (%p169) target = $region32
      $region31: #{_lambda_.2} parent=27 // pred_region
        %s172 = sadd.s32 %s17, %s18
        %p173 = scmp.lt.s32.totalorder %s172, 1
        %s174 = scalar_select %p173, %s172, 1
        %s175 = smul.addr %s174, 32
        %s176 = smul.addr %s175, 4
        %s177 = scalar_lea.vmem %s0, %s176
        %s178 = sadd.s32 %s17, %s18
      $region32: #{_lambda_.2} parent=27 // pred_fallthru
        _
    $region28: #{_lambda_.2} parent=5 // pred_fallthru
      _
    %p179 = scmp.le.s32.totalorder 1, %s10
    %p180 = scmp.lt.s32.totalorder %s10, 3
    %p181 = pnand %p179, %p180
    %p182 = pneg %p181
    // Predicated region
    $region33: #{_lambda_.2} parent=5 // pred_check
      _
    $region34: #{_lambda_.2} parent=5 // pred_check_branch
      %184 = sbr.rel (%p181) target = $region36
    $region35: #{_lambda_.2} parent=5 // pred_region
      %s185 = ssub.s32 %s10, 1
      %s186 = sadd.s32 %s19, %s20
      %p187 = scmp.lt.s32.totalorder %s186, 1
      %s188 = scalar_select %p187, %s186, 1
      %s189 = smul.addr %s188, 32
      %s190 = smul.addr %s189, 4
      %s191 = scalar_lea.vmem %s0, %s190
      %p192 = pneg %p50
      %p193 = pneg %p47
      %p194 = pneg %p71
      %p195 = pneg %p68
      %p196 = pneg %p92
      %p197 = pneg %p89
      %p198 = pneg %p113
      %p199 = pneg %p110
      %p200 = pneg %p141
      %p201 = pneg %p138
      %s202 = smul.u32 16, %s20
      %p203 = scmp.lt.s32.totalorder %s19, 1
      %s204 = scalar_select %p203, %s19, 1
      %p205 = scmp.lt.s32.totalorder %s202, 15
      %s206 = scalar_select %p205, %s202, 15
      %s207 = smul.addr %s206, 2
      %s208 = smul.addr %s204, 32
      %s209 = sadd.s32 %s207, %s208
      %s210 = smul.addr %s209, 4
      %s211 = scalar_lea.vmem %s4, %s210
      %s212 = sadd.s32 %s19, %s20
      %p213 = scmp.lt.s32.totalorder %s212, 1
      %s214 = scalar_select %p213, %s212, 1
      %s215 = smul.addr %s214, 32
      %s216 = smul.addr %s215, 4
      %s217 = scalar_lea.vmem %s0, %s216
      %s218 = sadd.s32 %s19, %s20
      %s219 = smul.u32 16, %s20
      %p220 = scmp.lt.s32.totalorder %s19, 1
      %s221 = scalar_select %p220, %s19, 1
      %p222 = scmp.lt.s32.totalorder %s219, 15
      %s223 = scalar_select %p222, %s219, 15
      %s224 = smul.addr %s223, 2
      %s225 = smul.addr %s221, 32
      %s226 = sadd.s32 %s224, %s225
      %s227 = smul.addr %s226, 4
      %s228 = scalar_lea.vmem %s4, %s227
      %s229 = smul.u32 16, %s20
      %v230 = vld [vmem:[%s217] sm:$0xf]
      %v231 = vld [vmem:[%s217 + $0x4] sm:$0xf]
      %v232 = vld [vmem:[%s217 + $0x8] sm:$0xf]
      %v233 = vld [vmem:[%s217 + $0xc] sm:$0xf]
      %v234 = vld [vmem:[%s217 + $0x10] sm:$0xf]
      %v235 = vld [vmem:[%s217 + $0x14] sm:$0xf]
      %v236 = vld [vmem:[%s217 + $0x18] sm:$0xf]
      %v237 = vld [vmem:[%s217 + $0x1c] sm:$0xf]
      %v238 = vld [vmem:[%s217 + $0x20] sm:$0xf]
      %v239 = vld [vmem:[%s217 + $0x24] sm:$0xf]
      %v240 = vld [vmem:[%s217 + $0x28] sm:$0xf]
      %v241 = vld [vmem:[%s217 + $0x2c] sm:$0xf]
      %v242 = vld [vmem:[%s217 + $0x30] sm:$0xf]
      %v243 = vld [vmem:[%s217 + $0x34] sm:$0xf]
      %v244 = vld [vmem:[%s217 + $0x38] sm:$0xf]
      %v245 = vld [vmem:[%s217 + $0x3c] sm:$0xf]
      %v246 = vld [vmem:[%s217 + $0x40] sm:$0xf]
      %v247 = vld [vmem:[%s217 + $0x44] sm:$0xf]
      %v248 = vld [vmem:[%s217 + $0x48] sm:$0xf]
      %v249 = vld [vmem:[%s217 + $0x4c] sm:$0xf]
      %v250 = vld [vmem:[%s217 + $0x50] sm:$0xf]
      %v251 = vld [vmem:[%s217 + $0x54] sm:$0xf]
      %v252 = vld [vmem:[%s217 + $0x58] sm:$0xf]
      %v253 = vld [vmem:[%s217 + $0x5c] sm:$0xf]
      %v254 = vld [vmem:[%s217 + $0x60] sm:$0xf]
      %v255 = vld [vmem:[%s217 + $0x64] sm:$0xf]
      %v256 = vld [vmem:[%s217 + $0x68] sm:$0xf]
      %v257 = vld [vmem:[%s217 + $0x6c] sm:$0xf]
      %v258 = vld [vmem:[%s217 + $0x70] sm:$0xf]
      %v259 = vld [vmem:[%s217 + $0x74] sm:$0xf]
      %v260 = vld [vmem:[%s217 + $0x78] sm:$0xf]
      %v261 = vld [vmem:[%s217 + $0x7c] sm:$0xf]
      %v262 = vld [vmem:[%s1] sm:$0xf]
      %v263 = vld [vmem:[%s1 + $0x4] sm:$0xf]
      %v264 = vld [vmem:[%s1 + $0x8] sm:$0xf]
      %v265 = vld [vmem:[%s1 + $0xc] sm:$0xf]
      %v266 = vld [vmem:[%s1 + $0x10] sm:$0xf]
      %v267 = vld [vmem:[%s1 + $0x14] sm:$0xf]
      %v268 = vld [vmem:[%s1 + $0x18] sm:$0xf]
      %v269 = vld [vmem:[%s1 + $0x1c] sm:$0xf]
      %v270 = vld [vmem:[%s1 + $0x20] sm:$0xf]
      %v271 = vld [vmem:[%s1 + $0x24] sm:$0xf]
      %v272 = vld [vmem:[%s1 + $0x28] sm:$0xf]
      %v273 = vld [vmem:[%s1 + $0x2c] sm:$0xf]
      %v274 = vld [vmem:[%s1 + $0x30] sm:$0xf]
      %v275 = vld [vmem:[%s1 + $0x34] sm:$0xf]
      %v276 = vld [vmem:[%s1 + $0x38] sm:$0xf]
      %v277 = vld [vmem:[%s1 + $0x3c] sm:$0xf]
      %v310 = vunpack.c.l.b16 %v230
      %v311 = vunpack.c.l.b16 %v231
      %v312 = vunpack.c.l.b16 %v232
      %v313 = vunpack.c.l.b16 %v233
      %v314 = vunpack.c.l.b16 %v234
      %v315 = vunpack.c.l.b16 %v235
      %v316 = vunpack.c.l.b16 %v236
      %v317 = vunpack.c.l.b16 %v237
      %v318 = vunpack.c.l.b16 %v238
      %v319 = vunpack.c.l.b16 %v239
      %v320 = vunpack.c.l.b16 %v240
      %v321 = vunpack.c.l.b16 %v241
      %v322 = vunpack.c.l.b16 %v242
      %v323 = vunpack.c.l.b16 %v243
      %v324 = vunpack.c.l.b16 %v244
      %v325 = vunpack.c.l.b16 %v245
      %v326 = vunpack.c.l.b16 %v246
      %v327 = vunpack.c.l.b16 %v247
      %v328 = vunpack.c.l.b16 %v248
      %v329 = vunpack.c.l.b16 %v249
      %v330 = vunpack.c.l.b16 %v250
      %v331 = vunpack.c.l.b16 %v251
      %v332 = vunpack.c.l.b16 %v252
      %v333 = vunpack.c.l.b16 %v253
      %v334 = vunpack.c.l.b16 %v254
      %v335 = vunpack.c.l.b16 %v255
      %v336 = vunpack.c.l.b16 %v256
      %v337 = vunpack.c.l.b16 %v257
      %v338 = vunpack.c.l.b16 %v258
      %v339 = vunpack.c.l.b16 %v259
      %v340 = vunpack.c.l.b16 %v260
      %v341 = vunpack.c.l.b16 %v261
      %v342 = vpack.c.b16 %v311, %v310
      %v343 = vpack.c.b16 %v313, %v312
      %v344 = vpack.c.b16 %v315, %v314
      %v345 = vpack.c.b16 %v317, %v316
      %v346 = vpack.c.b16 %v319, %v318
      %v347 = vpack.c.b16 %v321, %v320
      %v348 = vpack.c.b16 %v323, %v322
      %v349 = vpack.c.b16 %v325, %v324
      %v350 = vpack.c.b16 %v327, %v326
      %v351 = vpack.c.b16 %v329, %v328
      %v352 = vpack.c.b16 %v331, %v330
      %v353 = vpack.c.b16 %v333, %v332
      %v354 = vpack.c.b16 %v335, %v334
      %v355 = vpack.c.b16 %v337, %v336
      %v356 = vpack.c.b16 %v339, %v338
      %v357 = vpack.c.b16 %v341, %v340
      %v390 = vunpack.c.l.b16 %v262
      %v391 = vunpack.c.l.b16 %v263
      %v392 = vunpack.c.l.b16 %v264
      %v393 = vunpack.c.l.b16 %v265
      %v394 = vunpack.c.l.b16 %v266
      %v395 = vunpack.c.l.b16 %v267
      %v396 = vunpack.c.l.b16 %v268
      %v397 = vunpack.c.l.b16 %v269
      %v398 = vunpack.c.l.b16 %v270
      %v399 = vunpack.c.l.b16 %v271
      %v400 = vunpack.c.l.b16 %v272
      %v401 = vunpack.c.l.b16 %v273
      %v402 = vunpack.c.l.b16 %v274
      %v403 = vunpack.c.l.b16 %v275
      %v404 = vunpack.c.l.b16 %v276
      %v405 = vunpack.c.l.b16 %v277
      %v406 = vpack.c.b16 %v391, %v390
      %v407 = vpack.c.b16 %v393, %v392
      %v408 = vpack.c.b16 %v395, %v394
      %v409 = vpack.c.b16 %v397, %v396
      %v410 = vpack.c.b16 %v399, %v398
      %v411 = vpack.c.b16 %v401, %v400
      %v412 = vpack.c.b16 %v403, %v402
      %v413 = vpack.c.b16 %v405, %v404
      %422 = vmatpush.bf16.msra.mxu0 %v413
      %423 = vmatpush.bf16.msra.mxu0 %v412
      %424 = vmatpush.bf16.msra.mxu0 %v411
      %425 = vmatpush.bf16.msra.mxu0 %v410
      %426 = vmatpush.bf16.msra.mxu0 %v409
      %427 = vmatpush.bf16.msra.mxu0 %v408
      %428 = vmatpush.bf16.msra.mxu0 %v407
      %429 = vmatpush.bf16.msra.mxu0 %v406
      %430 = vmatmul.bf16.gmra.mxu0 %v342
      %v431 = vpop.f32.mrf.mxu0
      %v432 = vadd.f32 0.0, %v431
      %v433 = vpop.f32.mrf.mxu0
      %v434 = vadd.f32 0.0, %v433
      %435 = vmatmul.bf16.gmra.mxu0 %v343
      %v436 = vpop.f32.mrf.mxu0
      %v437 = vadd.f32 0.0, %v436
      %v438 = vpop.f32.mrf.mxu0
      %v439 = vadd.f32 0.0, %v438
      %440 = vmatmul.bf16.gmra.mxu0 %v344
      %v441 = vpop.f32.mrf.mxu0
      %v442 = vadd.f32 0.0, %v441
      %v443 = vpop.f32.mrf.mxu0
      %v444 = vadd.f32 0.0, %v443
      %445 = vmatmul.bf16.gmra.mxu0 %v345
      %v446 = vpop.f32.mrf.mxu0
      %v447 = vadd.f32 0.0, %v446
      %v448 = vpop.f32.mrf.mxu0
      %v449 = vadd.f32 0.0, %v448
      %450 = vmatmul.bf16.gmra.mxu0 %v346
      %v451 = vpop.f32.mrf.mxu0
      %v452 = vadd.f32 0.0, %v451
      %v453 = vpop.f32.mrf.mxu0
      %v454 = vadd.f32 0.0, %v453
      %455 = vmatmul.bf16.gmra.mxu0 %v347
      %v456 = vpop.f32.mrf.mxu0
      %v457 = vadd.f32 0.0, %v456
      %v458 = vpop.f32.mrf.mxu0
      %v459 = vadd.f32 0.0, %v458
      %460 = vmatmul.bf16.gmra.mxu0 %v348
      %v461 = vpop.f32.mrf.mxu0
      %v462 = vadd.f32 0.0, %v461
      %v463 = vpop.f32.mrf.mxu0
      %v464 = vadd.f32 0.0, %v463
      %465 = vmatmul.bf16.gmra.mxu0 %v349
      %v466 = vpop.f32.mrf.mxu0
      %v467 = vadd.f32 0.0, %v466
      %v468 = vpop.f32.mrf.mxu0
      %v469 = vadd.f32 0.0, %v468
      %470 = vmatmul.bf16.gmra.mxu0 %v350
      %v471 = vpop.f32.mrf.mxu0
      %v472 = vadd.f32 0.0, %v471
      %v473 = vpop.f32.mrf.mxu0
      %v474 = vadd.f32 0.0, %v473
      %475 = vmatmul.bf16.gmra.mxu0 %v351
      %v476 = vpop.f32.mrf.mxu0
      %v477 = vadd.f32 0.0, %v476
      %v478 = vpop.f32.mrf.mxu0
      %v479 = vadd.f32 0.0, %v478
      %480 = vmatmul.bf16.gmra.mxu0 %v352
      %v481 = vpop.f32.mrf.mxu0
      %v482 = vadd.f32 0.0, %v481
      %v483 = vpop.f32.mrf.mxu0
      %v484 = vadd.f32 0.0, %v483
      %485 = vmatmul.bf16.gmra.mxu0 %v353
      %v486 = vpop.f32.mrf.mxu0
      %v487 = vadd.f32 0.0, %v486
      %v488 = vpop.f32.mrf.mxu0
      %v489 = vadd.f32 0.0, %v488
      %490 = vmatmul.bf16.gmra.mxu0 %v354
      %v491 = vpop.f32.mrf.mxu0
      %v492 = vadd.f32 0.0, %v491
      %v493 = vpop.f32.mrf.mxu0
      %v494 = vadd.f32 0.0, %v493
      %495 = vmatmul.bf16.gmra.mxu0 %v355
      %v496 = vpop.f32.mrf.mxu0
      %v497 = vadd.f32 0.0, %v496
      %v498 = vpop.f32.mrf.mxu0
      %v499 = vadd.f32 0.0, %v498
      %500 = vmatmul.bf16.gmra.mxu0 %v356
      %v501 = vpop.f32.mrf.mxu0
      %v502 = vadd.f32 0.0, %v501
      %v503 = vpop.f32.mrf.mxu0
      %v504 = vadd.f32 0.0, %v503
      %505 = vmatmul.bf16.gmra.mxu0 %v357
      %v506 = vpop.f32.mrf.mxu0
      %v507 = vadd.f32 0.0, %v506
      %v508 = vpop.f32.mrf.mxu0
      %v509 = vadd.f32 0.0, %v508
      %510 = vdwg.mxu0
      %v511 = vld [vmem:[%s2] sm:$0x1]
      %v513 = vperm.slane %v511, 0
      %v515 = vmul.f32 %v432, %v513
      %v516 = vmul.f32 %v434, %v513
      %v517 = vmul.f32 %v437, %v513
      %v518 = vmul.f32 %v439, %v513
      %v519 = vmul.f32 %v442, %v513
      %v520 = vmul.f32 %v444, %v513
      %v521 = vmul.f32 %v447, %v513
      %v522 = vmul.f32 %v449, %v513
      %v523 = vmul.f32 %v452, %v513
      %v524 = vmul.f32 %v454, %v513
      %v525 = vmul.f32 %v457, %v513
      %v526 = vmul.f32 %v459, %v513
      %v527 = vmul.f32 %v462, %v513
      %v528 = vmul.f32 %v464, %v513
      %v529 = vmul.f32 %v467, %v513
      %v530 = vmul.f32 %v469, %v513
      %v531 = vmul.f32 %v472, %v513
      %v532 = vmul.f32 %v474, %v513
      %v533 = vmul.f32 %v477, %v513
      %v534 = vmul.f32 %v479, %v513
      %v535 = vmul.f32 %v482, %v513
      %v536 = vmul.f32 %v484, %v513
      %v537 = vmul.f32 %v487, %v513
      %v538 = vmul.f32 %v489, %v513
      %v539 = vmul.f32 %v492, %v513
      %v540 = vmul.f32 %v494, %v513
      %v541 = vmul.f32 %v497, %v513
      %v542 = vmul.f32 %v499, %v513
      %v543 = vmul.f32 %v502, %v513
      %v544 = vmul.f32 %v504, %v513
      %v545 = vmul.f32 %v507, %v513
      %v546 = vmul.f32 %v509, %v513
      %v547 = vld [vmem:[%s3] sm:$0x1]
      %v549 = vperm.slane %v547, 0
      %v551 = vadd.f32 %v515, %v549
      %v552 = vadd.f32 %v516, %v549
      %v553 = vadd.f32 %v517, %v549
      %v554 = vadd.f32 %v518, %v549
      %v555 = vadd.f32 %v519, %v549
      %v556 = vadd.f32 %v520, %v549
      %v557 = vadd.f32 %v521, %v549
      %v558 = vadd.f32 %v522, %v549
      %v559 = vadd.f32 %v523, %v549
      %v560 = vadd.f32 %v524, %v549
      %v561 = vadd.f32 %v525, %v549
      %v562 = vadd.f32 %v526, %v549
      %v563 = vadd.f32 %v527, %v549
      %v564 = vadd.f32 %v528, %v549
      %v565 = vadd.f32 %v529, %v549
      %v566 = vadd.f32 %v530, %v549
      %v567 = vadd.f32 %v531, %v549
      %v568 = vadd.f32 %v532, %v549
      %v569 = vadd.f32 %v533, %v549
      %v570 = vadd.f32 %v534, %v549
      %v571 = vadd.f32 %v535, %v549
      %v572 = vadd.f32 %v536, %v549
      %v573 = vadd.f32 %v537, %v549
      %v574 = vadd.f32 %v538, %v549
      %v575 = vadd.f32 %v539, %v549
      %v576 = vadd.f32 %v540, %v549
      %v577 = vadd.f32 %v541, %v549
      %v578 = vadd.f32 %v542, %v549
      %v579 = vadd.f32 %v543, %v549
      %v580 = vadd.f32 %v544, %v549
      %v581 = vadd.f32 %v545, %v549
      %v582 = vadd.f32 %v546, %v549
      %v583 = vmax.f32 %v551, 0.0
      %v584 = vmax.f32 %v552, 0.0
      %v585 = vmax.f32 %v553, 0.0
      %v586 = vmax.f32 %v554, 0.0
      %v587 = vmax.f32 %v555, 0.0
      %v588 = vmax.f32 %v556, 0.0
      %v589 = vmax.f32 %v557, 0.0
      %v590 = vmax.f32 %v558, 0.0
      %v591 = vmax.f32 %v559, 0.0
      %v592 = vmax.f32 %v560, 0.0
      %v593 = vmax.f32 %v561, 0.0
      %v594 = vmax.f32 %v562, 0.0
      %v595 = vmax.f32 %v563, 0.0
      %v596 = vmax.f32 %v564, 0.0
      %v597 = vmax.f32 %v565, 0.0
      %v598 = vmax.f32 %v566, 0.0
      %v599 = vmax.f32 %v567, 0.0
      %v600 = vmax.f32 %v568, 0.0
      %v601 = vmax.f32 %v569, 0.0
      %v602 = vmax.f32 %v570, 0.0
      %v603 = vmax.f32 %v571, 0.0
      %v604 = vmax.f32 %v572, 0.0
      %v605 = vmax.f32 %v573, 0.0
      %v606 = vmax.f32 %v574, 0.0
      %v607 = vmax.f32 %v575, 0.0
      %v608 = vmax.f32 %v576, 0.0
      %v609 = vmax.f32 %v577, 0.0
      %v610 = vmax.f32 %v578, 0.0
      %v611 = vmax.f32 %v579, 0.0
      %v612 = vmax.f32 %v580, 0.0
      %v613 = vmax.f32 %v581, 0.0
      %v614 = vmax.f32 %v582, 0.0
      %v615 = vpack.c.bf16 %v583, %v583
      %v616 = vpack.c.bf16 %v584, %v584
      %v617 = vpack.c.bf16 %v585, %v585
      %v618 = vpack.c.bf16 %v586, %v586
      %v619 = vpack.c.bf16 %v587, %v587
      %v620 = vpack.c.bf16 %v588, %v588
      %v621 = vpack.c.bf16 %v589, %v589
      %v622 = vpack.c.bf16 %v590, %v590
      %v623 = vpack.c.bf16 %v591, %v591
      %v624 = vpack.c.bf16 %v592, %v592
      %v625 = vpack.c.bf16 %v593, %v593
      %v626 = vpack.c.bf16 %v594, %v594
      %v627 = vpack.c.bf16 %v595, %v595
      %v628 = vpack.c.bf16 %v596, %v596
      %v629 = vpack.c.bf16 %v597, %v597
      %v630 = vpack.c.bf16 %v598, %v598
      %v631 = vpack.c.bf16 %v599, %v599
      %v632 = vpack.c.bf16 %v600, %v600
      %v633 = vpack.c.bf16 %v601, %v601
      %v634 = vpack.c.bf16 %v602, %v602
      %v635 = vpack.c.bf16 %v603, %v603
      %v636 = vpack.c.bf16 %v604, %v604
      %v637 = vpack.c.bf16 %v605, %v605
      %v638 = vpack.c.bf16 %v606, %v606
      %v639 = vpack.c.bf16 %v607, %v607
      %v640 = vpack.c.bf16 %v608, %v608
      %v641 = vpack.c.bf16 %v609, %v609
      %v642 = vpack.c.bf16 %v610, %v610
      %v643 = vpack.c.bf16 %v611, %v611
      %v644 = vpack.c.bf16 %v612, %v612
      %v645 = vpack.c.bf16 %v613, %v613
      %v646 = vpack.c.bf16 %v614, %v614
      %647 = vst [vmem:[%s228] sm:$0xf] %v615
      %648 = vst [vmem:[%s228 + $0x4] sm:$0xf] %v616
      %649 = vst [vmem:[%s228 + $0x8] sm:$0xf] %v617
      %650 = vst [vmem:[%s228 + $0xc] sm:$0xf] %v618
      %651 = vst [vmem:[%s228 + $0x10] sm:$0xf] %v619
      %652 = vst [vmem:[%s228 + $0x14] sm:$0xf] %v620
      %653 = vst [vmem:[%s228 + $0x18] sm:$0xf] %v621
      %654 = vst [vmem:[%s228 + $0x1c] sm:$0xf] %v622
      %655 = vst [vmem:[%s228 + $0x20] sm:$0xf] %v623
      %656 = vst [vmem:[%s228 + $0x24] sm:$0xf] %v624
      %657 = vst [vmem:[%s228 + $0x28] sm:$0xf] %v625
      %658 = vst [vmem:[%s228 + $0x2c] sm:$0xf] %v626
      %659 = vst [vmem:[%s228 + $0x30] sm:$0xf] %v627
      %660 = vst [vmem:[%s228 + $0x34] sm:$0xf] %v628
      %661 = vst [vmem:[%s228 + $0x38] sm:$0xf] %v629
      %662 = vst [vmem:[%s228 + $0x3c] sm:$0xf] %v630
      %663 = vst [vmem:[%s228 + $0x40] sm:$0xf] %v631
      %664 = vst [vmem:[%s228 + $0x44] sm:$0xf] %v632
      %665 = vst [vmem:[%s228 + $0x48] sm:$0xf] %v633
      %666 = vst [vmem:[%s228 + $0x4c] sm:$0xf] %v634
      %667 = vst [vmem:[%s228 + $0x50] sm:$0xf] %v635
      %668 = vst [vmem:[%s228 + $0x54] sm:$0xf] %v636
      %669 = vst [vmem:[%s228 + $0x58] sm:$0xf] %v637
      %670 = vst [vmem:[%s228 + $0x5c] sm:$0xf] %v638
      %671 = vst [vmem:[%s228 + $0x60] sm:$0xf] %v639
      %672 = vst [vmem:[%s228 + $0x64] sm:$0xf] %v640
      %673 = vst [vmem:[%s228 + $0x68] sm:$0xf] %v641
      %674 = vst [vmem:[%s228 + $0x6c] sm:$0xf] %v642
      %675 = vst [vmem:[%s228 + $0x70] sm:$0xf] %v643
      %676 = vst [vmem:[%s228 + $0x74] sm:$0xf] %v644
      %677 = vst [vmem:[%s228 + $0x78] sm:$0xf] %v645
      %678 = vst [vmem:[%s228 + $0x7c] sm:$0xf] %v646
      %s679 = smul.u32 16, %s20
      %p680 = scmp.lt.s32.totalorder %s19, 1
      %s681 = scalar_select %p680, %s19, 1
      %p682 = scmp.lt.s32.totalorder %s679, 15
      %s683 = scalar_select %p682, %s679, 15
      %s684 = smul.addr %s683, 2
      %s685 = smul.addr %s681, 32
      %s686 = sadd.s32 %s684, %s685
      %s687 = smul.addr %s686, 4
      %s688 = scalar_lea.vmem %s4, %s687
      // Predicated region
      $region37: #{_lambda_.2} parent=35 // pred_check
        %p689 = pneg %p138
      $region38: #{_lambda_.2} parent=35 // pred_check_branch
        %691 = sbr.rel (%p689) target = $region40
      $region39: #{_lambda_.2} parent=35 // pred_region
        %s692 = smul.u32 16, %s20
      $region40: #{_lambda_.2} parent=35 // pred_fallthru
        _
    $region36: #{_lambda_.2} parent=5 // pred_fallthru
      _
    %p693 = scmp.le.s32.totalorder 2, %s10
    // Predicated region
    $region41: #{_lambda_.2} parent=5 // pred_check
      %p694 = pneg %p693
    $region42: #{_lambda_.2} parent=5 // pred_check_branch
      %696 = sbr.rel (%p694) target = $region44
    $region43: #{_lambda_.2} parent=5 // pred_region
      %s697 = ssub.s32 %s10, 2
      // Predicated region
      $region45: #{_lambda_.2} parent=43 // pred_check
        %p698 = pneg %p144
      $region46: #{_lambda_.2} parent=43 // pred_check_branch
        %700 = sbr.rel (%p698) target = $region48
      $region47: #{_lambda_.2} parent=43 // pred_region
        %s701 = smul.u32 16, %s22
        %p702 = scmp.lt.s32.totalorder %s21, 1
        %s703 = scalar_select %p702, %s21, 1
        %p704 = scmp.lt.s32.totalorder %s701, 15
        %s705 = scalar_select %p704, %s701, 15
        %s706 = smul.addr %s705, 2
        %s707 = smul.addr %s703, 32
        %s708 = sadd.s32 %s706, %s707
        %s709 = smul.addr %s708, 4
        %s710 = scalar_lea.vmem %s4, %s709
      $region48: #{_lambda_.2} parent=43 // pred_fallthru
        _
    $region44: #{_lambda_.2} parent=5 // pred_fallthru
      _
  $region6: #{_lambda_.2} parent=0 // loop_footer
    %s14 = sadd.s32 1, %s10
  $region7: #{_lambda_.2} parent=0 // loop_footer_branch
    %9 = sbr.rel target = $region3
  $region8: #{_lambda_.2} parent=0 // loop_exit
    _

// kernel: _lambda_.3
$region0: #{_lambda_.3}
  #allocation0 [shape = 'u32[]', space=smem, size = 0x4, offset = 0x4, fixed_abs, tag = 'smem constant byte address 0x4 - core index']
  #allocation1 [shape = 'u32[72,128]{1,0:T(1,128)}', space=vmem, size = 0x9000, scoped, tag = 'internal scratch']
  %s0 = inlined_call_operand.vmem [shape: bf16[2,18,18,128], index: 0, kind: input, shape index: {}]
  %s1 = inlined_call_operand.vmem [shape: bf16[3,384,128], index: 1, kind: input, shape index: {}]
  %s2 = inlined_call_operand.vmem [shape: f32[1,128], index: 2, kind: input, shape index: {}]
  %s3 = inlined_call_operand.vmem [shape: f32[1,128], index: 3, kind: input, shape index: {}]
  %s4 = inlined_call_operand.vmem [shape: bf16[2,16,16,128], index: 4, kind: output, shape index: {}]
  %s5 = sld [smem:[#allocation0]]
  $region49: #{_lambda_.3} parent=0
    _
  %s7 = ssub.s32 1, %s5
  %s8 = scalar_select 0, %s7, %s5
  loop: start=0, step=1, limit=4
  $region2: #{_lambda_.3} parent=0 // loop_pre_header
    _
  $region3: #{_lambda_.3} parent=0 // loop_header
    %s10 = sphi 0, %s14
    %p11 = scmp.ge.s32.totalorder %s10, 4
    %s17 = sphi 0, %s29
    %s18 = sphi 0, %s25
    %s19 = sphi 0, %s17
    %s20 = sphi 0, %s18
    %s21 = sphi 0, %s19
    %s22 = sphi 0, %s20
    %s34 = sphi 0, %s36
    %s37 = sphi 0, %s34
    %s38 = sphi 0, %s37
    %s54 = sphi 0, %s38
    %s58 = sphi 0, %s58
    %s60 = sphi 0, %s58
    %s61 = sphi 0, %s60
    %s75 = sphi 0, %s61
    %s79 = sphi 0, %s79
    %s81 = sphi 0, %s79
    %s82 = sphi 0, %s81
    %s96 = sphi 0, %s82
    %s100 = sphi 0, %s100
    %s102 = sphi 0, %s100
    %s103 = sphi 0, %s102
    %s117 = sphi 0, %s103
    %s125 = sphi 0, %s127
    %s128 = sphi 0, %s125
    %s129 = sphi 0, %s128
    %s145 = sphi 0, %s129
  $region4: #{_lambda_.3} parent=0 // loop_header_branch
    %13 = sbr.rel (%p11) target = $region8
  $region5: #{_lambda_.3} parent=0 // loop_body
    %s15 = ssub.s32 %s10, 1
    %s16 = ssub.s32 %s10, 2
    %s23 = sadd.s32 1, %s18
    %p24 = scmp.ge.s32.totalorder %s23, 1
    %s25 = scalar_select %p24, 0, %s23
    %s26 = sadd.s32 1, %s17
    %s27 = scalar_select %p24, %s26, %s17
    %p28 = scmp.ge.s32.totalorder %s27, 2
    %s29 = scalar_select %p28, 0, %s27
    %s30 = sadd.s32 %s17, %s18
    %s31 = sadd.s32 %s29, %s25
    %s32 = ssub.s32 %s30, %s31
    %p33 = scmp.eq.s32.totalorder %s32, 0
    %s35 = sadd.s32 %s34, 1
    %s36 = scalar_select %p33, %s34, %s35
    %p39 = pneg %p33
    %p40 = scmp.eq.s32.totalorder %s10, 1
    %p41 = por %p39, %p40
    %p42 = scmp.ne.s32.totalorder %s34, %s37
    %p43 = scmp.eq.s32.totalorder %s10, 0
    %p44 = por %p42, %p43
    %p45 = scmp.ne.s32.totalorder %s34, %s37
    %p46 = scmp.eq.s32.totalorder %s15, 1
    %p47 = por %p45, %p46
    %p48 = scmp.ne.s32.totalorder %s37, %s38
    %p49 = scmp.eq.s32.totalorder %s15, 0
    %p50 = por %p48, %p49
    %p51 = scmp.ne.s32.totalorder %s37, %s38
    %p52 = scmp.eq.s32.totalorder %s16, 1
    %p53 = por %p51, %p52
    %p55 = scmp.ne.s32.totalorder %s38, %s54
    %p56 = scmp.eq.s32.totalorder %s16, 0
    %p57 = por %p55, %p56
    %s59 = sadd.s32 %s58, 1
    %p62 = scmp.eq.s32.totalorder %s10, 1
    %p63 = scmp.ne.s32.totalorder %s58, %s60
    %p64 = scmp.eq.s32.totalorder %s10, 0
    %p65 = por %p63, %p64
    %p66 = scmp.ne.s32.totalorder %s58, %s60
    %p67 = scmp.eq.s32.totalorder %s15, 1
    %p68 = por %p66, %p67
    %p69 = scmp.ne.s32.totalorder %s60, %s61
    %p70 = scmp.eq.s32.totalorder %s15, 0
    %p71 = por %p69, %p70
    %p72 = scmp.ne.s32.totalorder %s60, %s61
    %p73 = scmp.eq.s32.totalorder %s16, 1
    %p74 = por %p72, %p73
    %p76 = scmp.ne.s32.totalorder %s61, %s75
    %p77 = scmp.eq.s32.totalorder %s16, 0
    %p78 = por %p76, %p77
    %s80 = sadd.s32 %s79, 1
    %p83 = scmp.eq.s32.totalorder %s10, 1
    %p84 = scmp.ne.s32.totalorder %s79, %s81
    %p85 = scmp.eq.s32.totalorder %s10, 0
    %p86 = por %p84, %p85
    %p87 = scmp.ne.s32.totalorder %s79, %s81
    %p88 = scmp.eq.s32.totalorder %s15, 1
    %p89 = por %p87, %p88
    %p90 = scmp.ne.s32.totalorder %s81, %s82
    %p91 = scmp.eq.s32.totalorder %s15, 0
    %p92 = por %p90, %p91
    %p93 = scmp.ne.s32.totalorder %s81, %s82
    %p94 = scmp.eq.s32.totalorder %s16, 1
    %p95 = por %p93, %p94
    %p97 = scmp.ne.s32.totalorder %s82, %s96
    %p98 = scmp.eq.s32.totalorder %s16, 0
    %p99 = por %p97, %p98
    %s101 = sadd.s32 %s100, 1
    %p104 = scmp.eq.s32.totalorder %s10, 1
    %p105 = scmp.ne.s32.totalorder %s100, %s102
    %p106 = scmp.eq.s32.totalorder %s10, 0
    %p107 = por %p105, %p106
    %p108 = scmp.ne.s32.totalorder %s100, %s102
    %p109 = scmp.eq.s32.totalorder %s15, 1
    %p110 = por %p108, %p109
    %p111 = scmp.ne.s32.totalorder %s102, %s103
    %p112 = scmp.eq.s32.totalorder %s15, 0
    %p113 = por %p111, %p112
    %p114 = scmp.ne.s32.totalorder %s102, %s103
    %p115 = scmp.eq.s32.totalorder %s16, 1
    %p116 = por %p114, %p115
    %p118 = scmp.ne.s32.totalorder %s103, %s117
    %p119 = scmp.eq.s32.totalorder %s16, 0
    %p120 = por %p118, %p119
    %s121 = ssub.s32 %s17, %s29
    %s122 = ssub.s32 %s18, %s25
    %s123 = sor.u32 %s121, %s122
    %p124 = scmp.eq.s32.totalorder %s123, 0
    %s126 = sadd.s32 %s125, 1
    %s127 = scalar_select %p124, %s125, %s126
    %p130 = pneg %p124
    %p131 = scmp.eq.s32.totalorder %s10, 1
    %p132 = por %p130, %p131
    %p133 = scmp.ne.s32.totalorder %s125, %s128
    %p134 = scmp.eq.s32.totalorder %s10, 0
    %p135 = por %p133, %p134
    %p136 = scmp.ne.s32.totalorder %s125, %s128
    %p137 = scmp.eq.s32.totalorder %s15, 1
    %p138 = por %p136, %p137
    %p139 = scmp.ne.s32.totalorder %s128, %s129
    %p140 = scmp.eq.s32.totalorder %s15, 0
    %p141 = por %p139, %p140
    %p142 = scmp.ne.s32.totalorder %s128, %s129
    %p143 = scmp.eq.s32.totalorder %s16, 1
    %p144 = por %p142, %p143
    %p146 = scmp.ne.s32.totalorder %s129, %s145
    %p147 = scmp.eq.s32.totalorder %s16, 0
    %p148 = por %p146, %p147
    %p149 = scmp.le.s32.totalorder 1, %s10
    %p150 = scmp.lt.s32.totalorder %s10, 3
    %p151 = pnand %p149, %p150
    %p152 = pneg %p151
    // Predicated region
    $region9: #{_lambda_.3} parent=5 // pred_check
      _
    $region10: #{_lambda_.3} parent=5 // pred_check_branch
      %154 = sbr.rel (%p151) target = $region12
    $region11: #{_lambda_.3} parent=5 // pred_region
      %s155 = ssub.s32 %s10, 1
      // Predicated region
      $region13: #{_lambda_.3} parent=11 // pred_check
        %p156 = pneg %p71
      $region14: #{_lambda_.3} parent=11 // pred_check_branch
        %158 = sbr.rel (%p156) target = $region16
      $region15: #{_lambda_.3} parent=11 // pred_region
        _
      $region16: #{_lambda_.3} parent=11 // pred_fallthru
        _
      // Predicated region
      $region17: #{_lambda_.3} parent=11 // pred_check
        %p159 = pneg %p92
      $region18: #{_lambda_.3} parent=11 // pred_check_branch
        %161 = sbr.rel (%p159) target = $region20
      $region19: #{_lambda_.3} parent=11 // pred_region
        _
      $region20: #{_lambda_.3} parent=11 // pred_fallthru
        _
      // Predicated region
      $region21: #{_lambda_.3} parent=11 // pred_check
        %p162 = pneg %p113
      $region22: #{_lambda_.3} parent=11 // pred_check_branch
        %164 = sbr.rel (%p162) target = $region24
      $region23: #{_lambda_.3} parent=11 // pred_region
        _
      $region24: #{_lambda_.3} parent=11 // pred_fallthru
        _
    $region12: #{_lambda_.3} parent=5 // pred_fallthru
      _
    %p165 = scmp.lt.s32.totalorder %s10, 2
    // Predicated region
    $region25: #{_lambda_.3} parent=5 // pred_check
      %p166 = pneg %p165
    $region26: #{_lambda_.3} parent=5 // pred_check_branch
      %168 = sbr.rel (%p166) target = $region28
    $region27: #{_lambda_.3} parent=5 // pred_region
      // Predicated region
      $region29: #{_lambda_.3} parent=27 // pred_check
        %p169 = pneg %p44
      $region30: #{_lambda_.3} parent=27 // pred_check_branch
        %171 = sbr.rel (%p169) target = $region32
      $region31: #{_lambda_.3} parent=27 // pred_region
        %s172 = sadd.s32 %s17, %s18
        %p173 = scmp.lt.s32.totalorder %s172, 1
        %s174 = scalar_select %p173, %s172, 1
        %s175 = smul.addr %s174, 54
        %s176 = smul.addr %s175, 4
        %s177 = scalar_lea.vmem %s0, %s176
        %s178 = sadd.s32 %s17, %s18
      $region32: #{_lambda_.3} parent=27 // pred_fallthru
        _
    $region28: #{_lambda_.3} parent=5 // pred_fallthru
      _
    %p179 = scmp.le.s32.totalorder 1, %s10
    %p180 = scmp.lt.s32.totalorder %s10, 3
    %p181 = pnand %p179, %p180
    %p182 = pneg %p181
    // Predicated region
    $region33: #{_lambda_.3} parent=5 // pred_check
      _
    $region34: #{_lambda_.3} parent=5 // pred_check_branch
      %184 = sbr.rel (%p181) target = $region36
    $region35: #{_lambda_.3} parent=5 // pred_region
      %s185 = ssub.s32 %s10, 1
      %s186 = sadd.s32 %s19, %s20
      %p187 = scmp.lt.s32.totalorder %s186, 1
      %s188 = scalar_select %p187, %s186, 1
      %s189 = smul.addr %s188, 54
      %s190 = smul.addr %s189, 4
      %s191 = scalar_lea.vmem %s0, %s190
      %p192 = pneg %p50
      %p193 = pneg %p47
      %p194 = pneg %p71
      %p195 = pneg %p68
      %p196 = pneg %p92
      %p197 = pneg %p89
      %p198 = pneg %p113
      %p199 = pneg %p110
      %p200 = pneg %p141
      %p201 = pneg %p138
      %s202 = smul.u32 16, %s20
      %p203 = scmp.lt.s32.totalorder %s19, 1
      %s204 = scalar_select %p203, %s19, 1
      %p205 = scmp.lt.s32.totalorder %s202, 15
      %s206 = scalar_select %p205, %s202, 15
      %s207 = smul.addr %s206, 2
      %s208 = smul.addr %s204, 32
      %s209 = sadd.s32 %s207, %s208
      %s210 = smul.addr %s209, 4
      %s211 = scalar_lea.vmem %s4, %s210
      %s212 = sadd.s32 %s19, %s20
      %p213 = scmp.lt.s32.totalorder %s212, 1
      %s214 = scalar_select %p213, %s212, 1
      %s215 = smul.addr %s214, 54
      %s216 = smul.addr %s215, 4
      %s217 = scalar_lea.vmem %s0, %s216
      %s218 = sadd.s32 %s19, %s20
      %s219 = smul.u32 16, %s20
      %p220 = scmp.lt.s32.totalorder %s19, 1
      %s221 = scalar_select %p220, %s19, 1
      %p222 = scmp.lt.s32.totalorder %s219, 15
      %s223 = scalar_select %p222, %s219, 15
      %s224 = smul.addr %s223, 2
      %s225 = smul.addr %s221, 32
      %s226 = sadd.s32 %s224, %s225
      %s227 = smul.addr %s226, 4
      %s228 = scalar_lea.vmem %s4, %s227
      %s229 = smul.u32 16, %s20
      %v230 = vld [vmem:[%s217] sm:$0xf]
      %v231 = vld [vmem:[%s217 + $0x4] sm:$0xf]
      %v232 = vld [vmem:[%s217 + $0x8] sm:$0x1]
      %v233 = vld [vmem:[%s217 + $0xc] sm:$0xf]
      %v234 = vld [vmem:[%s217 + $0x10] sm:$0xf]
      %v235 = vld [vmem:[%s217 + $0x14] sm:$0x1]
      %v236 = vld [vmem:[%s217 + $0x18] sm:$0xf]
      %v237 = vld [vmem:[%s217 + $0x1c] sm:$0xf]
      %v238 = vld [vmem:[%s217 + $0x20] sm:$0x1]
      %v239 = vld [vmem:[%s217 + $0x24] sm:$0xf]
      %v240 = vld [vmem:[%s217 + $0x28] sm:$0xf]
      %v241 = vld [vmem:[%s217 + $0x2c] sm:$0x1]
      %v242 = vld [vmem:[%s217 + $0x30] sm:$0xf]
      %v243 = vld [vmem:[%s217 + $0x34] sm:$0xf]
      %v244 = vld [vmem:[%s217 + $0x38] sm:$0x1]
      %v245 = vld [vmem:[%s217 + $0x3c] sm:$0xf]
      %v246 = vld [vmem:[%s217 + $0x40] sm:$0xf]
      %v247 = vld [vmem:[%s217 + $0x44] sm:$0x1]
      %v248 = vld [vmem:[%s217 + $0x48] sm:$0xf]
      %v249 = vld [vmem:[%s217 + $0x4c] sm:$0xf]
      %v250 = vld [vmem:[%s217 + $0x50] sm:$0x1]
      %v251 = vld [vmem:[%s217 + $0x54] sm:$0xf]
      %v252 = vld [vmem:[%s217 + $0x58] sm:$0xf]
      %v253 = vld [vmem:[%s217 + $0x5c] sm:$0x1]
      %v254 = vld [vmem:[%s217 + $0x60] sm:$0xf]
      %v255 = vld [vmem:[%s217 + $0x64] sm:$0xf]
      %v256 = vld [vmem:[%s217 + $0x68] sm:$0x1]
      %v257 = vld [vmem:[%s217 + $0x6c] sm:$0xf]
      %v258 = vld [vmem:[%s217 + $0x70] sm:$0xf]
      %v259 = vld [vmem:[%s217 + $0x74] sm:$0x1]
      %v260 = vld [vmem:[%s217 + $0x78] sm:$0xf]
      %v261 = vld [vmem:[%s217 + $0x7c] sm:$0xf]
      %v262 = vld [vmem:[%s217 + $0x80] sm:$0x1]
      %v263 = vld [vmem:[%s217 + $0x84] sm:$0xf]
      %v264 = vld [vmem:[%s217 + $0x88] sm:$0xf]
      %v265 = vld [vmem:[%s217 + $0x8c] sm:$0x1]
      %v266 = vld [vmem:[%s217 + $0x90] sm:$0xf]
      %v267 = vld [vmem:[%s217 + $0x94] sm:$0xf]
      %v268 = vld [vmem:[%s217 + $0x98] sm:$0x1]
      %v269 = vld [vmem:[%s217 + $0x9c] sm:$0xf]
      %v270 = vld [vmem:[%s217 + $0xa0] sm:$0xf]
      %v271 = vld [vmem:[%s217 + $0xa4] sm:$0x1]
      %v272 = vld [vmem:[%s217 + $0xa8] sm:$0xf]
      %v273 = vld [vmem:[%s217 + $0xac] sm:$0xf]
      %v274 = vld [vmem:[%s217 + $0xb0] sm:$0x1]
      %v275 = vld [vmem:[%s217 + $0xb4] sm:$0xf]
      %v276 = vld [vmem:[%s217 + $0xb8] sm:$0xf]
      %v277 = vld [vmem:[%s217 + $0xbc] sm:$0x1]
      %v310 = vunpack.c.l.b16 %v230
      %v311 = vunpack.c.l.b16 %v231
      %v312 = vunpack.c.l.b16 %v233
      %v313 = vunpack.c.l.b16 %v234
      %v314 = vunpack.c.l.b16 %v236
      %v315 = vunpack.c.l.b16 %v237
      %v316 = vunpack.c.l.b16 %v239
      %v317 = vunpack.c.l.b16 %v240
      %v318 = vunpack.c.l.b16 %v242
      %v319 = vunpack.c.l.b16 %v243
      %v320 = vunpack.c.l.b16 %v245
      %v321 = vunpack.c.l.b16 %v246
      %v322 = vunpack.c.l.b16 %v248
      %v323 = vunpack.c.l.b16 %v249
      %v324 = vunpack.c.l.b16 %v251
      %v325 = vunpack.c.l.b16 %v252
      %v326 = vunpack.c.l.b16 %v254
      %v327 = vunpack.c.l.b16 %v255
      %v328 = vunpack.c.l.b16 %v257
      %v329 = vunpack.c.l.b16 %v258
      %v330 = vunpack.c.l.b16 %v260
      %v331 = vunpack.c.l.b16 %v261
      %v332 = vunpack.c.l.b16 %v263
      %v333 = vunpack.c.l.b16 %v264
      %v334 = vunpack.c.l.b16 %v266
      %v335 = vunpack.c.l.b16 %v267
      %v336 = vunpack.c.l.b16 %v269
      %v337 = vunpack.c.l.b16 %v270
      %v338 = vunpack.c.l.b16 %v272
      %v339 = vunpack.c.l.b16 %v273
      %v340 = vunpack.c.l.b16 %v275
      %v341 = vunpack.c.l.b16 %v276
      %v342 = vpack.c.b16 %v311, %v310
      %v343 = vpack.c.b16 %v313, %v312
      %v344 = vpack.c.b16 %v315, %v314
      %v345 = vpack.c.b16 %v317, %v316
      %v346 = vpack.c.b16 %v319, %v318
      %v347 = vpack.c.b16 %v321, %v320
      %v348 = vpack.c.b16 %v323, %v322
      %v349 = vpack.c.b16 %v325, %v324
      %v350 = vpack.c.b16 %v327, %v326
      %v351 = vpack.c.b16 %v329, %v328
      %v352 = vpack.c.b16 %v331, %v330
      %v353 = vpack.c.b16 %v333, %v332
      %v354 = vpack.c.b16 %v335, %v334
      %v355 = vpack.c.b16 %v337, %v336
      %v356 = vpack.c.b16 %v339, %v338
      %v357 = vpack.c.b16 %v341, %v340
      %v390 = vunpack.c.l.b16 %v232
      %v391 = vunpack.c.l.b16 %v235
      %v392 = vunpack.c.l.b16 %v238
      %v393 = vunpack.c.l.b16 %v241
      %v394 = vunpack.c.l.b16 %v244
      %v395 = vunpack.c.l.b16 %v247
      %v396 = vunpack.c.l.b16 %v250
      %v397 = vunpack.c.l.b16 %v253
      %v398 = vunpack.c.l.b16 %v256
      %v399 = vunpack.c.l.b16 %v259
      %v400 = vunpack.c.l.b16 %v262
      %v401 = vunpack.c.l.b16 %v265
      %v402 = vunpack.c.l.b16 %v268
      %v403 = vunpack.c.l.b16 %v271
      %v404 = vunpack.c.l.b16 %v274
      %v405 = vunpack.c.l.b16 %v277
      %v406 = vpack.c.b16 %v390, %v390
      %v407 = vpack.c.b16 %v391, %v391
      %v408 = vpack.c.b16 %v392, %v392
      %v409 = vpack.c.b16 %v393, %v393
      %v410 = vpack.c.b16 %v394, %v394
      %v411 = vpack.c.b16 %v395, %v395
      %v412 = vpack.c.b16 %v396, %v396
      %v413 = vpack.c.b16 %v397, %v397
      %v414 = vpack.c.b16 %v398, %v398
      %v415 = vpack.c.b16 %v399, %v399
      %v416 = vpack.c.b16 %v400, %v400
      %v417 = vpack.c.b16 %v401, %v401
      %v418 = vpack.c.b16 %v402, %v402
      %v419 = vpack.c.b16 %v403, %v403
      %v420 = vpack.c.b16 %v404, %v404
      %v421 = vpack.c.b16 %v405, %v405
      %vm422 = vsmask.f32 7424
      %v424 = vshrl.u32 %v342, 16
      %v426 = vshll.u32 %v342, 16
      %v428 = vrot.slane %v426, 1
      %v429 = vor.u32 %v424, %v428
      %v431 = vshll.u32 %v406, 16
      %v433 = vrot.slane %v431, 1
      %v434 = vsel %vm422, %v429, %v433
      %v436 = vshrl.u32 %v343, 16
      %v438 = vshll.u32 %v343, 16
      %v440 = vrot.slane %v438, 1
      %v441 = vor.u32 %v436, %v440
      %v443 = vshll.u32 %v407, 16
      %v445 = vrot.slane %v443, 1
      %v446 = vsel %vm422, %v441, %v445
      %v448 = vshrl.u32 %v344, 16
      %v450 = vshll.u32 %v344, 16
      %v452 = vrot.slane %v450, 1
      %v453 = vor.u32 %v448, %v452
      %v455 = vshll.u32 %v408, 16
      %v457 = vrot.slane %v455, 1
      %v458 = vsel %vm422, %v453, %v457
      %v460 = vshrl.u32 %v345, 16
      %v462 = vshll.u32 %v345, 16
      %v464 = vrot.slane %v462, 1
      %v465 = vor.u32 %v460, %v464
      %v467 = vshll.u32 %v409, 16
      %v469 = vrot.slane %v467, 1
      %v470 = vsel %vm422, %v465, %v469
      %v472 = vshrl.u32 %v346, 16
      %v474 = vshll.u32 %v346, 16
      %v476 = vrot.slane %v474, 1
      %v477 = vor.u32 %v472, %v476
      %v479 = vshll.u32 %v410, 16
      %v481 = vrot.slane %v479, 1
      %v482 = vsel %vm422, %v477, %v481
      %v484 = vshrl.u32 %v347, 16
      %v486 = vshll.u32 %v347, 16
      %v488 = vrot.slane %v486, 1
      %v489 = vor.u32 %v484, %v488
      %v491 = vshll.u32 %v411, 16
      %v493 = vrot.slane %v491, 1
      %v494 = vsel %vm422, %v489, %v493
      %v496 = vshrl.u32 %v348, 16
      %v498 = vshll.u32 %v348, 16
      %v500 = vrot.slane %v498, 1
      %v501 = vor.u32 %v496, %v500
      %v503 = vshll.u32 %v412, 16
      %v505 = vrot.slane %v503, 1
      %v506 = vsel %vm422, %v501, %v505
      %v508 = vshrl.u32 %v349, 16
      %v510 = vshll.u32 %v349, 16
      %v512 = vrot.slane %v510, 1
      %v513 = vor.u32 %v508, %v512
      %v515 = vshll.u32 %v413, 16
      %v517 = vrot.slane %v515, 1
      %v518 = vsel %vm422, %v513, %v517
      %v520 = vshrl.u32 %v350, 16
      %v522 = vshll.u32 %v350, 16
      %v524 = vrot.slane %v522, 1
      %v525 = vor.u32 %v520, %v524
      %v527 = vshll.u32 %v414, 16
      %v529 = vrot.slane %v527, 1
      %v530 = vsel %vm422, %v525, %v529
      %v532 = vshrl.u32 %v351, 16
      %v534 = vshll.u32 %v351, 16
      %v536 = vrot.slane %v534, 1
      %v537 = vor.u32 %v532, %v536
      %v539 = vshll.u32 %v415, 16
      %v541 = vrot.slane %v539, 1
      %v542 = vsel %vm422, %v537, %v541
      %v544 = vshrl.u32 %v352, 16
      %v546 = vshll.u32 %v352, 16
      %v548 = vrot.slane %v546, 1
      %v549 = vor.u32 %v544, %v548
      %v551 = vshll.u32 %v416, 16
      %v553 = vrot.slane %v551, 1
      %v554 = vsel %vm422, %v549, %v553
      %v556 = vshrl.u32 %v353, 16
      %v558 = vshll.u32 %v353, 16
      %v560 = vrot.slane %v558, 1
      %v561 = vor.u32 %v556, %v560
      %v563 = vshll.u32 %v417, 16
      %v565 = vrot.slane %v563, 1
      %v566 = vsel %vm422, %v561, %v565
      %v568 = vshrl.u32 %v354, 16
      %v570 = vshll.u32 %v354, 16
      %v572 = vrot.slane %v570, 1
      %v573 = vor.u32 %v568, %v572
      %v575 = vshll.u32 %v418, 16
      %v577 = vrot.slane %v575, 1
      %v578 = vsel %vm422, %v573, %v577
      %v580 = vshrl.u32 %v355, 16
      %v582 = vshll.u32 %v355, 16
      %v584 = vrot.slane %v582, 1
      %v585 = vor.u32 %v580, %v584
      %v587 = vshll.u32 %v419, 16
      %v589 = vrot.slane %v587, 1
      %v590 = vsel %vm422, %v585, %v589
      %v592 = vshrl.u32 %v356, 16
      %v594 = vshll.u32 %v356, 16
      %v596 = vrot.slane %v594, 1
      %v597 = vor.u32 %v592, %v596
      %v599 = vshll.u32 %v420, 16
      %v601 = vrot.slane %v599, 1
      %v602 = vsel %vm422, %v597, %v601
      %v604 = vshrl.u32 %v357, 16
      %v606 = vshll.u32 %v357, 16
      %v608 = vrot.slane %v606, 1
      %v609 = vor.u32 %v604, %v608
      %v611 = vshll.u32 %v421, 16
      %v613 = vrot.slane %v611, 1
      %v614 = vsel %vm422, %v609, %v613
      %vm631 = vcmask 1046528
      %v632 = vrot.slane %v342, 1
      %v633 = vrot.slane %v406, 1
      %v634 = vsel %vm631, %v632, %v633
      %v635 = vrot.slane %v343, 1
      %v636 = vrot.slane %v407, 1
      %v637 = vsel %vm631, %v635, %v636
      %v638 = vrot.slane %v344, 1
      %v639 = vrot.slane %v408, 1
      %v640 = vsel %vm631, %v638, %v639
      %v641 = vrot.slane %v345, 1
      %v642 = vrot.slane %v409, 1
      %v643 = vsel %vm631, %v641, %v642
      %v644 = vrot.slane %v346, 1
      %v645 = vrot.slane %v410, 1
      %v646 = vsel %vm631, %v644, %v645
      %v647 = vrot.slane %v347, 1
      %v648 = vrot.slane %v411, 1
      %v649 = vsel %vm631, %v647, %v648
      %v650 = vrot.slane %v348, 1
      %v651 = vrot.slane %v412, 1
      %v652 = vsel %vm631, %v650, %v651
      %v653 = vrot.slane %v349, 1
      %v654 = vrot.slane %v413, 1
      %v655 = vsel %vm631, %v653, %v654
      %v656 = vrot.slane %v350, 1
      %v657 = vrot.slane %v414, 1
      %v658 = vsel %vm631, %v656, %v657
      %v659 = vrot.slane %v351, 1
      %v660 = vrot.slane %v415, 1
      %v661 = vsel %vm631, %v659, %v660
      %v662 = vrot.slane %v352, 1
      %v663 = vrot.slane %v416, 1
      %v664 = vsel %vm631, %v662, %v663
      %v665 = vrot.slane %v353, 1
      %v666 = vrot.slane %v417, 1
      %v667 = vsel %vm631, %v665, %v666
      %v668 = vrot.slane %v354, 1
      %v669 = vrot.slane %v418, 1
      %v670 = vsel %vm631, %v668, %v669
      %v671 = vrot.slane %v355, 1
      %v672 = vrot.slane %v419, 1
      %v673 = vsel %vm631, %v671, %v672
      %v674 = vrot.slane %v356, 1
      %v675 = vrot.slane %v420, 1
      %v676 = vsel %vm631, %v674, %v675
      %v677 = vrot.slane %v357, 1
      %v678 = vrot.slane %v421, 1
      %v679 = vsel %vm631, %v677, %v678
      %v696 = vld [vmem:[%s1] sm:$0xf]
      %v697 = vld [vmem:[%s1 + $0x4] sm:$0xf]
      %v698 = vld [vmem:[%s1 + $0x8] sm:$0xf]
      %v699 = vld [vmem:[%s1 + $0xc] sm:$0xf]
      %v700 = vld [vmem:[%s1 + $0x10] sm:$0xf]
      %v701 = vld [vmem:[%s1 + $0x14] sm:$0xf]
      %v702 = vld [vmem:[%s1 + $0x18] sm:$0xf]
      %v703 = vld [vmem:[%s1 + $0x1c] sm:$0xf]
      %v704 = vld [vmem:[%s1 + $0x20] sm:$0xf]
      %v705 = vld [vmem:[%s1 + $0x24] sm:$0xf]
      %v706 = vld [vmem:[%s1 + $0x28] sm:$0xf]
      %v707 = vld [vmem:[%s1 + $0x2c] sm:$0xf]
      %v708 = vld [vmem:[%s1 + $0x30] sm:$0xf]
      %v709 = vld [vmem:[%s1 + $0x34] sm:$0xf]
      %v710 = vld [vmem:[%s1 + $0x38] sm:$0xf]
      %v711 = vld [vmem:[%s1 + $0x3c] sm:$0xf]
      %v712 = vld [vmem:[%s1 + $0x40] sm:$0xf]
      %v713 = vld [vmem:[%s1 + $0x44] sm:$0xf]
      %v714 = vld [vmem:[%s1 + $0x48] sm:$0xf]
      %v715 = vld [vmem:[%s1 + $0x4c] sm:$0xf]
      %v716 = vld [vmem:[%s1 + $0x50] sm:$0xf]
      %v717 = vld [vmem:[%s1 + $0x54] sm:$0xf]
      %v718 = vld [vmem:[%s1 + $0x58] sm:$0xf]
      %v719 = vld [vmem:[%s1 + $0x5c] sm:$0xf]
      %v720 = vld [vmem:[%s1 + $0x60] sm:$0xf]
      %v721 = vld [vmem:[%s1 + $0x64] sm:$0xf]
      %v722 = vld [vmem:[%s1 + $0x68] sm:$0xf]
      %v723 = vld [vmem:[%s1 + $0x6c] sm:$0xf]
      %v724 = vld [vmem:[%s1 + $0x70] sm:$0xf]
      %v725 = vld [vmem:[%s1 + $0x74] sm:$0xf]
      %v726 = vld [vmem:[%s1 + $0x78] sm:$0xf]
      %v727 = vld [vmem:[%s1 + $0x7c] sm:$0xf]
      %v728 = vld [vmem:[%s1 + $0x80] sm:$0xf]
      %v729 = vld [vmem:[%s1 + $0x84] sm:$0xf]
      %v730 = vld [vmem:[%s1 + $0x88] sm:$0xf]
      %v731 = vld [vmem:[%s1 + $0x8c] sm:$0xf]
      %v732 = vld [vmem:[%s1 + $0x90] sm:$0xf]
      %v733 = vld [vmem:[%s1 + $0x94] sm:$0xf]
      %v734 = vld [vmem:[%s1 + $0x98] sm:$0xf]
      %v735 = vld [vmem:[%s1 + $0x9c] sm:$0xf]
      %v736 = vld [vmem:[%s1 + $0xa0] sm:$0xf]
      %v737 = vld [vmem:[%s1 + $0xa4] sm:$0xf]
      %v738 = vld [vmem:[%s1 + $0xa8] sm:$0xf]
      %v739 = vld [vmem:[%s1 + $0xac] sm:$0xf]
      %v740 = vld [vmem:[%s1 + $0xb0] sm:$0xf]
      %v741 = vld [vmem:[%s1 + $0xb4] sm:$0xf]
      %v742 = vld [vmem:[%s1 + $0xb8] sm:$0xf]
      %v743 = vld [vmem:[%s1 + $0xbc] sm:$0xf]
      %s744 = scalar_lea.vmem %s217, 12
      %v745 = vld [vmem:[%s744] sm:$0xf]
      %v746 = vld [vmem:[%s744 + $0x4] sm:$0xf]
      %v747 = vld [vmem:[%s744 + $0x8] sm:$0x1]
      %v748 = vld [vmem:[%s744 + $0xc] sm:$0xf]
      %v749 = vld [vmem:[%s744 + $0x10] sm:$0xf]
      %v750 = vld [vmem:[%s744 + $0x14] sm:$0x1]
      %v751 = vld [vmem:[%s744 + $0x18] sm:$0xf]
      %v752 = vld [vmem:[%s744 + $0x1c] sm:$0xf]
      %v753 = vld [vmem:[%s744 + $0x20] sm:$0x1]
      %v754 = vld [vmem:[%s744 + $0x24] sm:$0xf]
      %v755 = vld [vmem:[%s744 + $0x28] sm:$0xf]
      %v756 = vld [vmem:[%s744 + $0x2c] sm:$0x1]
      %v757 = vld [vmem:[%s744 + $0x30] sm:$0xf]
      %v758 = vld [vmem:[%s744 + $0x34] sm:$0xf]
      %v759 = vld [vmem:[%s744 + $0x38] sm:$0x1]
      %v760 = vld [vmem:[%s744 + $0x3c] sm:$0xf]
      %v761 = vld [vmem:[%s744 + $0x40] sm:$0xf]
      %v762 = vld [vmem:[%s744 + $0x44] sm:$0x1]
      %v763 = vld [vmem:[%s744 + $0x48] sm:$0xf]
      %v764 = vld [vmem:[%s744 + $0x4c] sm:$0xf]
      %v765 = vld [vmem:[%s744 + $0x50] sm:$0x1]
      %v766 = vld [vmem:[%s744 + $0x54] sm:$0xf]
      %v767 = vld [vmem:[%s744 + $0x58] sm:$0xf]
      %v768 = vld [vmem:[%s744 + $0x5c] sm:$0x1]
      %v769 = vld [vmem:[%s744 + $0x60] sm:$0xf]
      %v770 = vld [vmem:[%s744 + $0x64] sm:$0xf]
      %v771 = vld [vmem:[%s744 + $0x68] sm:$0x1]
      %v772 = vld [vmem:[%s744 + $0x6c] sm:$0xf]
      %v773 = vld [vmem:[%s744 + $0x70] sm:$0xf]
      %v774 = vld [vmem:[%s744 + $0x74] sm:$0x1]
      %v775 = vld [vmem:[%s744 + $0x78] sm:$0xf]
      %v776 = vld [vmem:[%s744 + $0x7c] sm:$0xf]
      %v777 = vld [vmem:[%s744 + $0x80] sm:$0x1]
      %v778 = vld [vmem:[%s744 + $0x84] sm:$0xf]
      %v779 = vld [vmem:[%s744 + $0x88] sm:$0xf]
      %v780 = vld [vmem:[%s744 + $0x8c] sm:$0x1]
      %v781 = vld [vmem:[%s744 + $0x90] sm:$0xf]
      %v782 = vld [vmem:[%s744 + $0x94] sm:$0xf]
      %v783 = vld [vmem:[%s744 + $0x98] sm:$0x1]
      %v784 = vld [vmem:[%s744 + $0x9c] sm:$0xf]
      %v785 = vld [vmem:[%s744 + $0xa0] sm:$0xf]
      %v786 = vld [vmem:[%s744 + $0xa4] sm:$0x1]
      %v787 = vld [vmem:[%s744 + $0xa8] sm:$0xf]
      %v788 = vld [vmem:[%s744 + $0xac] sm:$0xf]
      %v789 = vld [vmem:[%s744 + $0xb0] sm:$0x1]
      %v790 = vld [vmem:[%s744 + $0xb4] sm:$0xf]
      %v791 = vld [vmem:[%s744 + $0xb8] sm:$0xf]
      %v792 = vld [vmem:[%s744 + $0xbc] sm:$0x1]
      %v825 = vunpack.c.l.b16 %v745
      %v826 = vunpack.c.l.b16 %v746
      %v827 = vunpack.c.l.b16 %v748
      %v828 = vunpack.c.l.b16 %v749
      %v829 = vunpack.c.l.b16 %v751
      %v830 = vunpack.c.l.b16 %v752
      %v831 = vunpack.c.l.b16 %v754
      %v832 = vunpack.c.l.b16 %v755
      %v833 = vunpack.c.l.b16 %v757
      %v834 = vunpack.c.l.b16 %v758
      %v835 = vunpack.c.l.b16 %v760
      %v836 = vunpack.c.l.b16 %v761
      %v837 = vunpack.c.l.b16 %v763
      %v838 = vunpack.c.l.b16 %v764
      %v839 = vunpack.c.l.b16 %v766
      %v840 = vunpack.c.l.b16 %v767
      %v841 = vunpack.c.l.b16 %v769
      %v842 = vunpack.c.l.b16 %v770
      %v843 = vunpack.c.l.b16 %v772
      %v844 = vunpack.c.l.b16 %v773
      %v845 = vunpack.c.l.b16 %v775
      %v846 = vunpack.c.l.b16 %v776
      %v847 = vunpack.c.l.b16 %v778
      %v848 = vunpack.c.l.b16 %v779
      %v849 = vunpack.c.l.b16 %v781
      %v850 = vunpack.c.l.b16 %v782
      %v851 = vunpack.c.l.b16 %v784
      %v852 = vunpack.c.l.b16 %v785
      %v853 = vunpack.c.l.b16 %v787
      %v854 = vunpack.c.l.b16 %v788
      %v855 = vunpack.c.l.b16 %v790
      %v856 = vunpack.c.l.b16 %v791
      %v857 = vpack.c.b16 %v826, %v825
      %v858 = vpack.c.b16 %v828, %v827
      %v859 = vpack.c.b16 %v830, %v829
      %v860 = vpack.c.b16 %v832, %v831
      %v861 = vpack.c.b16 %v834, %v833
      %v862 = vpack.c.b16 %v836, %v835
      %v863 = vpack.c.b16 %v838, %v837
      %v864 = vpack.c.b16 %v840, %v839
      %v865 = vpack.c.b16 %v842, %v841
      %v866 = vpack.c.b16 %v844, %v843
      %v867 = vpack.c.b16 %v846, %v845
      %v868 = vpack.c.b16 %v848, %v847
      %v869 = vpack.c.b16 %v850, %v849
      %v870 = vpack.c.b16 %v852, %v851
      %v871 = vpack.c.b16 %v854, %v853
      %v872 = vpack.c.b16 %v856, %v855
      %v905 = vunpack.c.l.b16 %v747
      %v906 = vunpack.c.l.b16 %v750
      %v907 = vunpack.c.l.b16 %v753
      %v908 = vunpack.c.l.b16 %v756
      %v909 = vunpack.c.l.b16 %v759
      %v910 = vunpack.c.l.b16 %v762
      %v911 = vunpack.c.l.b16 %v765
      %v912 = vunpack.c.l.b16 %v768
      %v913 = vunpack.c.l.b16 %v771
      %v914 = vunpack.c.l.b16 %v774
      %v915 = vunpack.c.l.b16 %v777
      %v916 = vunpack.c.l.b16 %v780
      %v917 = vunpack.c.l.b16 %v783
      %v918 = vunpack.c.l.b16 %v786
      %v919 = vunpack.c.l.b16 %v789
      %v920 = vunpack.c.l.b16 %v792
      %v921 = vpack.c.b16 %v905, %v905
      %v922 = vpack.c.b16 %v906, %v906
      %v923 = vpack.c.b16 %v907, %v907
      %v924 = vpack.c.b16 %v908, %v908
      %v925 = vpack.c.b16 %v909, %v909
      %v926 = vpack.c.b16 %v910, %v910
      %v927 = vpack.c.b16 %v911, %v911
      %v928 = vpack.c.b16 %v912, %v912
      %v929 = vpack.c.b16 %v913, %v913
      %v930 = vpack.c.b16 %v914, %v914
      %v931 = vpack.c.b16 %v915, %v915
      %v932 = vpack.c.b16 %v916, %v916
      %v933 = vpack.c.b16 %v917, %v917
      %v934 = vpack.c.b16 %v918, %v918
      %v935 = vpack.c.b16 %v919, %v919
      %v936 = vpack.c.b16 %v920, %v920
      %v938 = vshrl.u32 %v857, 16
      %v940 = vshll.u32 %v857, 16
      %v942 = vrot.slane %v940, 1
      %v943 = vor.u32 %v938, %v942
      %v945 = vshll.u32 %v921, 16
      %v947 = vrot.slane %v945, 1
      %v948 = vsel %vm422, %v943, %v947
      %v950 = vshrl.u32 %v858, 16
      %v952 = vshll.u32 %v858, 16
      %v954 = vrot.slane %v952, 1
      %v955 = vor.u32 %v950, %v954
      %v957 = vshll.u32 %v922, 16
      %v959 = vrot.slane %v957, 1
      %v960 = vsel %vm422, %v955, %v959
      %v962 = vshrl.u32 %v859, 16
      %v964 = vshll.u32 %v859, 16
      %v966 = vrot.slane %v964, 1
      %v967 = vor.u32 %v962, %v966
      %v969 = vshll.u32 %v923, 16
      %v971 = vrot.slane %v969, 1
      %v972 = vsel %vm422, %v967, %v971
      %v974 = vshrl.u32 %v860, 16
      %v976 = vshll.u32 %v860, 16
      %v978 = vrot.slane %v976, 1
      %v979 = vor.u32 %v974, %v978
      %v981 = vshll.u32 %v924, 16
      %v983 = vrot.slane %v981, 1
      %v984 = vsel %vm422, %v979, %v983
      %v986 = vshrl.u32 %v861, 16
      %v988 = vshll.u32 %v861, 16
      %v990 = vrot.slane %v988, 1
      %v991 = vor.u32 %v986, %v990
      %v993 = vshll.u32 %v925, 16
      %v995 = vrot.slane %v993, 1
      %v996 = vsel %vm422, %v991, %v995
      %v998 = vshrl.u32 %v862, 16
      %v1000 = vshll.u32 %v862, 16
      %v1002 = vrot.slane %v1000, 1
      %v1003 = vor.u32 %v998, %v1002
      %v1005 = vshll.u32 %v926, 16
      %v1007 = vrot.slane %v1005, 1
      %v1008 = vsel %vm422, %v1003, %v1007
      %v1010 = vshrl.u32 %v863, 16
      %v1012 = vshll.u32 %v863, 16
      %v1014 = vrot.slane %v1012, 1
      %v1015 = vor.u32 %v1010, %v1014
      %v1017 = vshll.u32 %v927, 16
      %v1019 = vrot.slane %v1017, 1
      %v1020 = vsel %vm422, %v1015, %v1019
      %v1022 = vshrl.u32 %v864, 16
      %v1024 = vshll.u32 %v864, 16
      %v1026 = vrot.slane %v1024, 1
      %v1027 = vor.u32 %v1022, %v1026
      %v1029 = vshll.u32 %v928, 16
      %v1031 = vrot.slane %v1029, 1
      %v1032 = vsel %vm422, %v1027, %v1031
      %v1034 = vshrl.u32 %v865, 16
      %v1036 = vshll.u32 %v865, 16
      %v1038 = vrot.slane %v1036, 1
      %v1039 = vor.u32 %v1034, %v1038
      %v1041 = vshll.u32 %v929, 16
      %v1043 = vrot.slane %v1041, 1
      %v1044 = vsel %vm422, %v1039, %v1043
      %v1046 = vshrl.u32 %v866, 16
      %v1048 = vshll.u32 %v866, 16
      %v1050 = vrot.slane %v1048, 1
      %v1051 = vor.u32 %v1046, %v1050
      %v1053 = vshll.u32 %v930, 16
      %v1055 = vrot.slane %v1053, 1
      %v1056 = vsel %vm422, %v1051, %v1055
      %v1058 = vshrl.u32 %v867, 16
      %v1060 = vshll.u32 %v867, 16
      %v1062 = vrot.slane %v1060, 1
      %v1063 = vor.u32 %v1058, %v1062
      %v1065 = vshll.u32 %v931, 16
      %v1067 = vrot.slane %v1065, 1
      %v1068 = vsel %vm422, %v1063, %v1067
      %v1070 = vshrl.u32 %v868, 16
      %v1072 = vshll.u32 %v868, 16
      %v1074 = vrot.slane %v1072, 1
      %v1075 = vor.u32 %v1070, %v1074
      %v1077 = vshll.u32 %v932, 16
      %v1079 = vrot.slane %v1077, 1
      %v1080 = vsel %vm422, %v1075, %v1079
      %v1082 = vshrl.u32 %v869, 16
      %v1084 = vshll.u32 %v869, 16
      %v1086 = vrot.slane %v1084, 1
      %v1087 = vor.u32 %v1082, %v1086
      %v1089 = vshll.u32 %v933, 16
      %v1091 = vrot.slane %v1089, 1
      %v1092 = vsel %vm422, %v1087, %v1091
      %v1094 = vshrl.u32 %v870, 16
      %v1096 = vshll.u32 %v870, 16
      %v1098 = vrot.slane %v1096, 1
      %v1099 = vor.u32 %v1094, %v1098
      %v1101 = vshll.u32 %v934, 16
      %v1103 = vrot.slane %v1101, 1
      %v1104 = vsel %vm422, %v1099, %v1103
      %v1106 = vshrl.u32 %v871, 16
      %v1108 = vshll.u32 %v871, 16
      %v1110 = vrot.slane %v1108, 1
      %v1111 = vor.u32 %v1106, %v1110
      %v1113 = vshll.u32 %v935, 16
      %v1115 = vrot.slane %v1113, 1
      %v1116 = vsel %vm422, %v1111, %v1115
      %v1118 = vshrl.u32 %v872, 16
      %v1120 = vshll.u32 %v872, 16
      %v1122 = vrot.slane %v1120, 1
      %v1123 = vor.u32 %v1118, %v1122
      %v1125 = vshll.u32 %v936, 16
      %v1127 = vrot.slane %v1125, 1
      %v1128 = vsel %vm422, %v1123, %v1127
      %v1145 = vrot.slane %v857, 1
      %v1146 = vrot.slane %v921, 1
      %v1147 = vsel %vm631, %v1145, %v1146
      %v1148 = vrot.slane %v858, 1
      %v1149 = vrot.slane %v922, 1
      %v1150 = vsel %vm631, %v1148, %v1149
      %v1151 = vrot.slane %v859, 1
      %v1152 = vrot.slane %v923, 1
      %v1153 = vsel %vm631, %v1151, %v1152
      %v1154 = vrot.slane %v860, 1
      %v1155 = vrot.slane %v924, 1
      %v1156 = vsel %vm631, %v1154, %v1155
      %v1157 = vrot.slane %v861, 1
      %v1158 = vrot.slane %v925, 1
      %v1159 = vsel %vm631, %v1157, %v1158
      %v1160 = vrot.slane %v862, 1
      %v1161 = vrot.slane %v926, 1
      %v1162 = vsel %vm631, %v1160, %v1161
      %v1163 = vrot.slane %v863, 1
      %v1164 = vrot.slane %v927, 1
      %v1165 = vsel %vm631, %v1163, %v1164
      %v1166 = vrot.slane %v864, 1
      %v1167 = vrot.slane %v928, 1
      %v1168 = vsel %vm631, %v1166, %v1167
      %v1169 = vrot.slane %v865, 1
      %v1170 = vrot.slane %v929, 1
      %v1171 = vsel %vm631, %v1169, %v1170
      %v1172 = vrot.slane %v866, 1
      %v1173 = vrot.slane %v930, 1
      %v1174 = vsel %vm631, %v1172, %v1173
      %v1175 = vrot.slane %v867, 1
      %v1176 = vrot.slane %v931, 1
      %v1177 = vsel %vm631, %v1175, %v1176
      %v1178 = vrot.slane %v868, 1
      %v1179 = vrot.slane %v932, 1
      %v1180 = vsel %vm631, %v1178, %v1179
      %v1181 = vrot.slane %v869, 1
      %v1182 = vrot.slane %v933, 1
      %v1183 = vsel %vm631, %v1181, %v1182
      %v1184 = vrot.slane %v870, 1
      %v1185 = vrot.slane %v934, 1
      %v1186 = vsel %vm631, %v1184, %v1185
      %v1187 = vrot.slane %v871, 1
      %v1188 = vrot.slane %v935, 1
      %v1189 = vsel %vm631, %v1187, %v1188
      %v1190 = vrot.slane %v872, 1
      %v1191 = vrot.slane %v936, 1
      %v1192 = vsel %vm631, %v1190, %v1191
      %s1209 = scalar_lea.vmem %s1, 192
      %v1210 = vld [vmem:[%s1209] sm:$0xf]
      %v1211 = vld [vmem:[%s1209 + $0x4] sm:$0xf]
      %v1212 = vld [vmem:[%s1209 + $0x8] sm:$0xf]
      %v1213 = vld [vmem:[%s1209 + $0xc] sm:$0xf]
      %v1214 = vld [vmem:[%s1209 + $0x10] sm:$0xf]
      %v1215 = vld [vmem:[%s1209 + $0x14] sm:$0xf]
      %v1216 = vld [vmem:[%s1209 + $0x18] sm:$0xf]
      %v1217 = vld [vmem:[%s1209 + $0x1c] sm:$0xf]
      %v1218 = vld [vmem:[%s1209 + $0x20] sm:$0xf]
      %v1219 = vld [vmem:[%s1209 + $0x24] sm:$0xf]
      %v1220 = vld [vmem:[%s1209 + $0x28] sm:$0xf]
      %v1221 = vld [vmem:[%s1209 + $0x2c] sm:$0xf]
      %v1222 = vld [vmem:[%s1209 + $0x30] sm:$0xf]
      %v1223 = vld [vmem:[%s1209 + $0x34] sm:$0xf]
      %v1224 = vld [vmem:[%s1209 + $0x38] sm:$0xf]
      %v1225 = vld [vmem:[%s1209 + $0x3c] sm:$0xf]
      %v1226 = vld [vmem:[%s1209 + $0x40] sm:$0xf]
      %v1227 = vld [vmem:[%s1209 + $0x44] sm:$0xf]
      %v1228 = vld [vmem:[%s1209 + $0x48] sm:$0xf]
      %v1229 = vld [vmem:[%s1209 + $0x4c] sm:$0xf]
      %v1230 = vld [vmem:[%s1209 + $0x50] sm:$0xf]
      %v1231 = vld [vmem:[%s1209 + $0x54] sm:$0xf]
      %v1232 = vld [vmem:[%s1209 + $0x58] sm:$0xf]
      %v1233 = vld [vmem:[%s1209 + $0x5c] sm:$0xf]
      %v1234 = vld [vmem:[%s1209 + $0x60] sm:$0xf]
      %v1235 = vld [vmem:[%s1209 + $0x64] sm:$0xf]
      %v1236 = vld [vmem:[%s1209 + $0x68] sm:$0xf]
      %v1237 = vld [vmem:[%s1209 + $0x6c] sm:$0xf]
      %v1238 = vld [vmem:[%s1209 + $0x70] sm:$0xf]
      %v1239 = vld [vmem:[%s1209 + $0x74] sm:$0xf]
      %v1240 = vld [vmem:[%s1209 + $0x78] sm:$0xf]
      %v1241 = vld [vmem:[%s1209 + $0x7c] sm:$0xf]
      %v1242 = vld [vmem:[%s1209 + $0x80] sm:$0xf]
      %v1243 = vld [vmem:[%s1209 + $0x84] sm:$0xf]
      %v1244 = vld [vmem:[%s1209 + $0x88] sm:$0xf]
      %v1245 = vld [vmem:[%s1209 + $0x8c] sm:$0xf]
      %v1246 = vld [vmem:[%s1209 + $0x90] sm:$0xf]
      %v1247 = vld [vmem:[%s1209 + $0x94] sm:$0xf]
      %v1248 = vld [vmem:[%s1209 + $0x98] sm:$0xf]
      %v1249 = vld [vmem:[%s1209 + $0x9c] sm:$0xf]
      %v1250 = vld [vmem:[%s1209 + $0xa0] sm:$0xf]
      %v1251 = vld [vmem:[%s1209 + $0xa4] sm:$0xf]
      %v1252 = vld [vmem:[%s1209 + $0xa8] sm:$0xf]
      %v1253 = vld [vmem:[%s1209 + $0xac] sm:$0xf]
      %v1254 = vld [vmem:[%s1209 + $0xb0] sm:$0xf]
      %v1255 = vld [vmem:[%s1209 + $0xb4] sm:$0xf]
      %v1256 = vld [vmem:[%s1209 + $0xb8] sm:$0xf]
      %v1257 = vld [vmem:[%s1209 + $0xbc] sm:$0xf]
      %v1306 = vunpack.c.l.b16 %v1210
      %v1307 = vunpack.c.l.b16 %v1211
      %v1308 = vunpack.c.l.b16 %v1212
      %v1309 = vunpack.c.l.b16 %v1213
      %v1310 = vunpack.c.l.b16 %v1214
      %v1311 = vunpack.c.l.b16 %v1215
      %v1312 = vunpack.c.l.b16 %v1216
      %v1313 = vunpack.c.l.b16 %v1217
      %v1314 = vunpack.c.l.b16 %v1218
      %v1315 = vunpack.c.l.b16 %v1219
      %v1316 = vunpack.c.l.b16 %v1220
      %v1317 = vunpack.c.l.b16 %v1221
      %v1318 = vunpack.c.l.b16 %v1222
      %v1319 = vunpack.c.l.b16 %v1223
      %v1320 = vunpack.c.l.b16 %v1224
      %v1321 = vunpack.c.l.b16 %v1225
      %v1322 = vunpack.c.l.b16 %v1226
      %v1323 = vunpack.c.l.b16 %v1227
      %v1324 = vunpack.c.l.b16 %v1228
      %v1325 = vunpack.c.l.b16 %v1229
      %v1326 = vunpack.c.l.b16 %v1230
      %v1327 = vunpack.c.l.b16 %v1231
      %v1328 = vunpack.c.l.b16 %v1232
      %v1329 = vunpack.c.l.b16 %v1233
      %v1330 = vunpack.c.l.b16 %v1234
      %v1331 = vunpack.c.l.b16 %v1235
      %v1332 = vunpack.c.l.b16 %v1236
      %v1333 = vunpack.c.l.b16 %v1237
      %v1334 = vunpack.c.l.b16 %v1238
      %v1335 = vunpack.c.l.b16 %v1239
      %v1336 = vunpack.c.l.b16 %v1240
      %v1337 = vunpack.c.l.b16 %v1241
      %v1338 = vunpack.c.l.b16 %v1242
      %v1339 = vunpack.c.l.b16 %v1243
      %v1340 = vunpack.c.l.b16 %v1244
      %v1341 = vunpack.c.l.b16 %v1245
      %v1342 = vunpack.c.l.b16 %v1246
      %v1343 = vunpack.c.l.b16 %v1247
      %v1344 = vunpack.c.l.b16 %v1248
      %v1345 = vunpack.c.l.b16 %v1249
      %v1346 = vunpack.c.l.b16 %v1250
      %v1347 = vunpack.c.l.b16 %v1251
      %v1348 = vunpack.c.l.b16 %v1252
      %v1349 = vunpack.c.l.b16 %v1253
      %v1350 = vunpack.c.l.b16 %v1254
      %v1351 = vunpack.c.l.b16 %v1255
      %v1352 = vunpack.c.l.b16 %v1256
      %v1353 = vunpack.c.l.b16 %v1257
      %v1354 = vpack.c.b16 %v1307, %v1306
      %v1355 = vpack.c.b16 %v1309, %v1308
      %v1356 = vpack.c.b16 %v1311, %v1310
      %v1357 = vpack.c.b16 %v1313, %v1312
      %v1358 = vpack.c.b16 %v1315, %v1314
      %v1359 = vpack.c.b16 %v1317, %v1316
      %v1360 = vpack.c.b16 %v1319, %v1318
      %v1361 = vpack.c.b16 %v1321, %v1320
      %v1362 = vpack.c.b16 %v1323, %v1322
      %v1363 = vpack.c.b16 %v1325, %v1324
      %v1364 = vpack.c.b16 %v1327, %v1326
      %v1365 = vpack.c.b16 %v1329, %v1328
      %v1366 = vpack.c.b16 %v1331, %v1330
      %v1367 = vpack.c.b16 %v1333, %v1332
      %v1368 = vpack.c.b16 %v1335, %v1334
      %v1369 = vpack.c.b16 %v1337, %v1336
      %v1370 = vpack.c.b16 %v1339, %v1338
      %v1371 = vpack.c.b16 %v1341, %v1340
      %v1372 = vpack.c.b16 %v1343, %v1342
      %v1373 = vpack.c.b16 %v1345, %v1344
      %v1374 = vpack.c.b16 %v1347, %v1346
      %v1375 = vpack.c.b16 %v1349, %v1348
      %v1376 = vpack.c.b16 %v1351, %v1350
      %v1377 = vpack.c.b16 %v1353, %v1352
      %1402 = vmatpush.bf16.msra.mxu0 %v1361
      %1403 = vmatpush.bf16.msra.mxu0 %v1360
      %1404 = vmatpush.bf16.msra.mxu0 %v1359
      %1405 = vmatpush.bf16.msra.mxu0 %v1358
      %1406 = vmatpush.bf16.msra.mxu0 %v1357
      %1407 = vmatpush.bf16.msra.mxu0 %v1356
      %1408 = vmatpush.bf16.msra.mxu0 %v1355
      %1409 = vmatpush.bf16.msra.mxu0 %v1354
      %1410 = vmatmul.bf16.gmra.mxu0 %v857
      %v1411 = vpop.f32.mrf.mxu0
      %v1412 = vadd.f32 0.0, %v1411
      %v1413 = vpop.f32.mrf.mxu0
      %v1414 = vadd.f32 0.0, %v1413
      %1415 = vmatmul.bf16.gmra.mxu0 %v858
      %v1416 = vpop.f32.mrf.mxu0
      %v1417 = vadd.f32 0.0, %v1416
      %v1418 = vpop.f32.mrf.mxu0
      %v1419 = vadd.f32 0.0, %v1418
      %1420 = vmatmul.bf16.gmra.mxu0 %v859
      %v1421 = vpop.f32.mrf.mxu0
      %v1422 = vadd.f32 0.0, %v1421
      %v1423 = vpop.f32.mrf.mxu0
      %v1424 = vadd.f32 0.0, %v1423
      %1425 = vmatmul.bf16.gmra.mxu0 %v860
      %v1426 = vpop.f32.mrf.mxu0
      %v1427 = vadd.f32 0.0, %v1426
      %v1428 = vpop.f32.mrf.mxu0
      %v1429 = vadd.f32 0.0, %v1428
      %1430 = vmatmul.bf16.gmra.mxu0 %v861
      %v1431 = vpop.f32.mrf.mxu0
      %v1432 = vadd.f32 0.0, %v1431
      %v1433 = vpop.f32.mrf.mxu0
      %v1434 = vadd.f32 0.0, %v1433
      %1435 = vmatmul.bf16.gmra.mxu0 %v862
      %v1436 = vpop.f32.mrf.mxu0
      %v1437 = vadd.f32 0.0, %v1436
      %v1438 = vpop.f32.mrf.mxu0
      %v1439 = vadd.f32 0.0, %v1438
      %1440 = vmatmul.bf16.gmra.mxu0 %v863
      %v1441 = vpop.f32.mrf.mxu0
      %v1442 = vadd.f32 0.0, %v1441
      %v1443 = vpop.f32.mrf.mxu0
      %v1444 = vadd.f32 0.0, %v1443
      %1445 = vmatmul.bf16.gmra.mxu0 %v864
      %v1446 = vpop.f32.mrf.mxu0
      %v1447 = vadd.f32 0.0, %v1446
      %v1448 = vpop.f32.mrf.mxu0
      %v1449 = vadd.f32 0.0, %v1448
      %1450 = vmatmul.bf16.gmra.mxu0 %v865
      %v1451 = vpop.f32.mrf.mxu0
      %v1452 = vadd.f32 0.0, %v1451
      %v1453 = vpop.f32.mrf.mxu0
      %v1454 = vadd.f32 0.0, %v1453
      %1455 = vmatmul.bf16.gmra.mxu0 %v866
      %v1456 = vpop.f32.mrf.mxu0
      %v1457 = vadd.f32 0.0, %v1456
      %v1458 = vpop.f32.mrf.mxu0
      %v1459 = vadd.f32 0.0, %v1458
      %1460 = vmatmul.bf16.gmra.mxu0 %v867
      %v1461 = vpop.f32.mrf.mxu0
      %v1462 = vadd.f32 0.0, %v1461
      %v1463 = vpop.f32.mrf.mxu0
      %v1464 = vadd.f32 0.0, %v1463
      %1465 = vmatmul.bf16.gmra.mxu0 %v868
      %v1466 = vpop.f32.mrf.mxu0
      %v1467 = vadd.f32 0.0, %v1466
      %v1468 = vpop.f32.mrf.mxu0
      %v1469 = vadd.f32 0.0, %v1468
      %1470 = vmatmul.bf16.gmra.mxu0 %v869
      %v1471 = vpop.f32.mrf.mxu0
      %v1472 = vadd.f32 0.0, %v1471
      %v1473 = vpop.f32.mrf.mxu0
      %v1474 = vadd.f32 0.0, %v1473
      %1475 = vmatmul.bf16.gmra.mxu0 %v870
      %v1476 = vpop.f32.mrf.mxu0
      %v1477 = vadd.f32 0.0, %v1476
      %v1478 = vpop.f32.mrf.mxu0
      %v1479 = vadd.f32 0.0, %v1478
      %1480 = vmatmul.bf16.gmra.mxu0 %v871
      %v1481 = vpop.f32.mrf.mxu0
      %v1482 = vadd.f32 0.0, %v1481
      %v1483 = vpop.f32.mrf.mxu0
      %v1484 = vadd.f32 0.0, %v1483
      %1485 = vmatmul.bf16.gmra.mxu0 %v872
      %v1486 = vpop.f32.mrf.mxu0
      %v1487 = vadd.f32 0.0, %v1486
      %v1488 = vpop.f32.mrf.mxu0
      %v1489 = vadd.f32 0.0, %v1488
      %1490 = vdwg.mxu0
      %1491 = vmatpush.bf16.msra.mxu0 %v1369
      %1492 = vmatpush.bf16.msra.mxu0 %v1368
      %1493 = vmatpush.bf16.msra.mxu0 %v1367
      %1494 = vmatpush.bf16.msra.mxu0 %v1366
      %1495 = vmatpush.bf16.msra.mxu0 %v1365
      %1496 = vmatpush.bf16.msra.mxu0 %v1364
      %1497 = vmatpush.bf16.msra.mxu0 %v1363
      %1498 = vmatpush.bf16.msra.mxu0 %v1362
      %1499 = vmatmul.bf16.gmra.mxu0 %v948
      %v1500 = vpop.f32.mrf.mxu0
      %v1501 = vadd.f32 %v1412, %v1500
      %v1502 = vpop.f32.mrf.mxu0
      %v1503 = vadd.f32 %v1414, %v1502
      %1504 = vmatmul.bf16.gmra.mxu0 %v960
      %v1505 = vpop.f32.mrf.mxu0
      %v1506 = vadd.f32 %v1417, %v1505
      %v1507 = vpop.f32.mrf.mxu0
      %v1508 = vadd.f32 %v1419, %v1507
      %1509 = vmatmul.bf16.gmra.mxu0 %v972
      %v1510 = vpop.f32.mrf.mxu0
      %v1511 = vadd.f32 %v1422, %v1510
      %v1512 = vpop.f32.mrf.mxu0
      %v1513 = vadd.f32 %v1424, %v1512
      %1514 = vmatmul.bf16.gmra.mxu0 %v984
      %v1515 = vpop.f32.mrf.mxu0
      %v1516 = vadd.f32 %v1427, %v1515
      %v1517 = vpop.f32.mrf.mxu0
      %v1518 = vadd.f32 %v1429, %v1517
      %1519 = vmatmul.bf16.gmra.mxu0 %v996
      %v1520 = vpop.f32.mrf.mxu0
      %v1521 = vadd.f32 %v1432, %v1520
      %v1522 = vpop.f32.mrf.mxu0
      %v1523 = vadd.f32 %v1434, %v1522
      %1524 = vmatmul.bf16.gmra.mxu0 %v1008
      %v1525 = vpop.f32.mrf.mxu0
      %v1526 = vadd.f32 %v1437, %v1525
      %v1527 = vpop.f32.mrf.mxu0
      %v1528 = vadd.f32 %v1439, %v1527
      %1529 = vmatmul.bf16.gmra.mxu0 %v1020
      %v1530 = vpop.f32.mrf.mxu0
      %v1531 = vadd.f32 %v1442, %v1530
      %v1532 = vpop.f32.mrf.mxu0
      %v1533 = vadd.f32 %v1444, %v1532
      %1534 = vmatmul.bf16.gmra.mxu0 %v1032
      %v1535 = vpop.f32.mrf.mxu0
      %v1536 = vadd.f32 %v1447, %v1535
      %v1537 = vpop.f32.mrf.mxu0
      %v1538 = vadd.f32 %v1449, %v1537
      %1539 = vmatmul.bf16.gmra.mxu0 %v1044
      %v1540 = vpop.f32.mrf.mxu0
      %v1541 = vadd.f32 %v1452, %v1540
      %v1542 = vpop.f32.mrf.mxu0
      %v1543 = vadd.f32 %v1454, %v1542
      %1544 = vmatmul.bf16.gmra.mxu0 %v1056
      %v1545 = vpop.f32.mrf.mxu0
      %v1546 = vadd.f32 %v1457, %v1545
      %v1547 = vpop.f32.mrf.mxu0
      %v1548 = vadd.f32 %v1459, %v1547
      %1549 = vmatmul.bf16.gmra.mxu0 %v1068
      %v1550 = vpop.f32.mrf.mxu0
      %v1551 = vadd.f32 %v1462, %v1550
      %v1552 = vpop.f32.mrf.mxu0
      %v1553 = vadd.f32 %v1464, %v1552
      %1554 = vmatmul.bf16.gmra.mxu0 %v1080
      %v1555 = vpop.f32.mrf.mxu0
      %v1556 = vadd.f32 %v1467, %v1555
      %v1557 = vpop.f32.mrf.mxu0
      %v1558 = vadd.f32 %v1469, %v1557
      %1559 = vmatmul.bf16.gmra.mxu0 %v1092
      %v1560 = vpop.f32.mrf.mxu0
      %v1561 = vadd.f32 %v1472, %v1560
      %v1562 = vpop.f32.mrf.mxu0
      %v1563 = vadd.f32 %v1474, %v1562
      %1564 = vmatmul.bf16.gmra.mxu0 %v1104
      %v1565 = vpop.f32.mrf.mxu0
      %v1566 = vadd.f32 %v1477, %v1565
      %v1567 = vpop.f32.mrf.mxu0
      %v1568 = vadd.f32 %v1479, %v1567
      %1569 = vmatmul.bf16.gmra.mxu0 %v1116
      %v1570 = vpop.f32.mrf.mxu0
      %v1571 = vadd.f32 %v1482, %v1570
      %v1572 = vpop.f32.mrf.mxu0
      %v1573 = vadd.f32 %v1484, %v1572
      %1574 = vmatmul.bf16.gmra.mxu0 %v1128
      %v1575 = vpop.f32.mrf.mxu0
      %v1576 = vadd.f32 %v1487, %v1575
      %v1577 = vpop.f32.mrf.mxu0
      %v1578 = vadd.f32 %v1489, %v1577
      %1579 = vdwg.mxu0
      %1580 = vmatpush.bf16.msra.mxu0 %v1377
      %1581 = vmatpush.bf16.msra.mxu0 %v1376
      %1582 = vmatpush.bf16.msra.mxu0 %v1375
      %1583 = vmatpush.bf16.msra.mxu0 %v1374
      %1584 = vmatpush.bf16.msra.mxu0 %v1373
      %1585 = vmatpush.bf16.msra.mxu0 %v1372
      %1586 = vmatpush.bf16.msra.mxu0 %v1371
      %1587 = vmatpush.bf16.msra.mxu0 %v1370
      %1588 = vmatmul.bf16.gmra.mxu0 %v1147
      %v1589 = vpop.f32.mrf.mxu0
      %v1590 = vadd.f32 %v1501, %v1589
      %v1591 = vpop.f32.mrf.mxu0
      %v1592 = vadd.f32 %v1503, %v1591
      %1593 = vmatmul.bf16.gmra.mxu0 %v1150
      %v1594 = vpop.f32.mrf.mxu0
      %v1595 = vadd.f32 %v1506, %v1594
      %v1596 = vpop.f32.mrf.mxu0
      %v1597 = vadd.f32 %v1508, %v1596
      %1598 = vmatmul.bf16.gmra.mxu0 %v1153
      %v1599 = vpop.f32.mrf.mxu0
      %v1600 = vadd.f32 %v1511, %v1599
      %v1601 = vpop.f32.mrf.mxu0
      %v1602 = vadd.f32 %v1513, %v1601
      %1603 = vmatmul.bf16.gmra.mxu0 %v1156
      %v1604 = vpop.f32.mrf.mxu0
      %v1605 = vadd.f32 %v1516, %v1604
      %v1606 = vpop.f32.mrf.mxu0
      %v1607 = vadd.f32 %v1518, %v1606
      %1608 = vmatmul.bf16.gmra.mxu0 %v1159
      %v1609 = vpop.f32.mrf.mxu0
      %v1610 = vadd.f32 %v1521, %v1609
      %v1611 = vpop.f32.mrf.mxu0
      %v1612 = vadd.f32 %v1523, %v1611
      %1613 = vmatmul.bf16.gmra.mxu0 %v1162
      %v1614 = vpop.f32.mrf.mxu0
      %v1615 = vadd.f32 %v1526, %v1614
      %v1616 = vpop.f32.mrf.mxu0
      %v1617 = vadd.f32 %v1528, %v1616
      %1618 = vmatmul.bf16.gmra.mxu0 %v1165
      %v1619 = vpop.f32.mrf.mxu0
      %v1620 = vadd.f32 %v1531, %v1619
      %v1621 = vpop.f32.mrf.mxu0
      %v1622 = vadd.f32 %v1533, %v1621
      %1623 = vmatmul.bf16.gmra.mxu0 %v1168
      %v1624 = vpop.f32.mrf.mxu0
      %v1625 = vadd.f32 %v1536, %v1624
      %v1626 = vpop.f32.mrf.mxu0
      %v1627 = vadd.f32 %v1538, %v1626
      %1628 = vmatmul.bf16.gmra.mxu0 %v1171
      %v1629 = vpop.f32.mrf.mxu0
      %v1630 = vadd.f32 %v1541, %v1629
      %v1631 = vpop.f32.mrf.mxu0
      %v1632 = vadd.f32 %v1543, %v1631
      %1633 = vmatmul.bf16.gmra.mxu0 %v1174
      %v1634 = vpop.f32.mrf.mxu0
      %v1635 = vadd.f32 %v1546, %v1634
      %v1636 = vpop.f32.mrf.mxu0
      %v1637 = vadd.f32 %v1548, %v1636
      %1638 = vmatmul.bf16.gmra.mxu0 %v1177
      %v1639 = vpop.f32.mrf.mxu0
      %v1640 = vadd.f32 %v1551, %v1639
      %v1641 = vpop.f32.mrf.mxu0
      %v1642 = vadd.f32 %v1553, %v1641
      %1643 = vmatmul.bf16.gmra.mxu0 %v1180
      %v1644 = vpop.f32.mrf.mxu0
      %v1645 = vadd.f32 %v1556, %v1644
      %v1646 = vpop.f32.mrf.mxu0
      %v1647 = vadd.f32 %v1558, %v1646
      %1648 = vmatmul.bf16.gmra.mxu0 %v1183
      %v1649 = vpop.f32.mrf.mxu0
      %v1650 = vadd.f32 %v1561, %v1649
      %v1651 = vpop.f32.mrf.mxu0
      %v1652 = vadd.f32 %v1563, %v1651
      %1653 = vmatmul.bf16.gmra.mxu0 %v1186
      %v1654 = vpop.f32.mrf.mxu0
      %v1655 = vadd.f32 %v1566, %v1654
      %v1656 = vpop.f32.mrf.mxu0
      %v1657 = vadd.f32 %v1568, %v1656
      %1658 = vmatmul.bf16.gmra.mxu0 %v1189
      %v1659 = vpop.f32.mrf.mxu0
      %v1660 = vadd.f32 %v1571, %v1659
      %v1661 = vpop.f32.mrf.mxu0
      %v1662 = vadd.f32 %v1573, %v1661
      %1663 = vmatmul.bf16.gmra.mxu0 %v1192
      %v1664 = vpop.f32.mrf.mxu0
      %v1665 = vadd.f32 %v1576, %v1664
      %v1666 = vpop.f32.mrf.mxu0
      %v1667 = vadd.f32 %v1578, %v1666
      %1668 = vdwg.mxu0
      %v1717 = vunpack.c.l.b16 %v696
      %v1718 = vunpack.c.l.b16 %v697
      %v1719 = vunpack.c.l.b16 %v698
      %v1720 = vunpack.c.l.b16 %v699
      %v1721 = vunpack.c.l.b16 %v700
      %v1722 = vunpack.c.l.b16 %v701
      %v1723 = vunpack.c.l.b16 %v702
      %v1724 = vunpack.c.l.b16 %v703
      %v1725 = vunpack.c.l.b16 %v704
      %v1726 = vunpack.c.l.b16 %v705
      %v1727 = vunpack.c.l.b16 %v706
      %v1728 = vunpack.c.l.b16 %v707
      %v1729 = vunpack.c.l.b16 %v708
      %v1730 = vunpack.c.l.b16 %v709
      %v1731 = vunpack.c.l.b16 %v710
      %v1732 = vunpack.c.l.b16 %v711
      %v1733 = vunpack.c.l.b16 %v712
      %v1734 = vunpack.c.l.b16 %v713
      %v1735 = vunpack.c.l.b16 %v714
      %v1736 = vunpack.c.l.b16 %v715
      %v1737 = vunpack.c.l.b16 %v716
      %v1738 = vunpack.c.l.b16 %v717
      %v1739 = vunpack.c.l.b16 %v718
      %v1740 = vunpack.c.l.b16 %v719
      %v1741 = vunpack.c.l.b16 %v720
      %v1742 = vunpack.c.l.b16 %v721
      %v1743 = vunpack.c.l.b16 %v722
      %v1744 = vunpack.c.l.b16 %v723
      %v1745 = vunpack.c.l.b16 %v724
      %v1746 = vunpack.c.l.b16 %v725
      %v1747 = vunpack.c.l.b16 %v726
      %v1748 = vunpack.c.l.b16 %v727
      %v1749 = vunpack.c.l.b16 %v728
      %v1750 = vunpack.c.l.b16 %v729
      %v1751 = vunpack.c.l.b16 %v730
      %v1752 = vunpack.c.l.b16 %v731
      %v1753 = vunpack.c.l.b16 %v732
      %v1754 = vunpack.c.l.b16 %v733
      %v1755 = vunpack.c.l.b16 %v734
      %v1756 = vunpack.c.l.b16 %v735
      %v1757 = vunpack.c.l.b16 %v736
      %v1758 = vunpack.c.l.b16 %v737
      %v1759 = vunpack.c.l.b16 %v738
      %v1760 = vunpack.c.l.b16 %v739
      %v1761 = vunpack.c.l.b16 %v740
      %v1762 = vunpack.c.l.b16 %v741
      %v1763 = vunpack.c.l.b16 %v742
      %v1764 = vunpack.c.l.b16 %v743
      %v1765 = vpack.c.b16 %v1718, %v1717
      %v1766 = vpack.c.b16 %v1720, %v1719
      %v1767 = vpack.c.b16 %v1722, %v1721
      %v1768 = vpack.c.b16 %v1724, %v1723
      %v1769 = vpack.c.b16 %v1726, %v1725
      %v1770 = vpack.c.b16 %v1728, %v1727
      %v1771 = vpack.c.b16 %v1730, %v1729
      %v1772 = vpack.c.b16 %v1732, %v1731
      %v1773 = vpack.c.b16 %v1734, %v1733
      %v1774 = vpack.c.b16 %v1736, %v1735
      %v1775 = vpack.c.b16 %v1738, %v1737
      %v1776 = vpack.c.b16 %v1740, %v1739
      %v1777 = vpack.c.b16 %v1742, %v1741
      %v1778 = vpack.c.b16 %v1744, %v1743
      %v1779 = vpack.c.b16 %v1746, %v1745
      %v1780 = vpack.c.b16 %v1748, %v1747
      %v1781 = vpack.c.b16 %v1750, %v1749
      %v1782 = vpack.c.b16 %v1752, %v1751
      %v1783 = vpack.c.b16 %v1754, %v1753
      %v1784 = vpack.c.b16 %v1756, %v1755
      %v1785 = vpack.c.b16 %v1758, %v1757
      %v1786 = vpack.c.b16 %v1760, %v1759
      %v1787 = vpack.c.b16 %v1762, %v1761
      %v1788 = vpack.c.b16 %v1764, %v1763
      %1813 = vmatpush.bf16.msra.mxu0 %v1772
      %1814 = vmatpush.bf16.msra.mxu0 %v1771
      %1815 = vmatpush.bf16.msra.mxu0 %v1770
      %1816 = vmatpush.bf16.msra.mxu0 %v1769
      %1817 = vmatpush.bf16.msra.mxu0 %v1768
      %1818 = vmatpush.bf16.msra.mxu0 %v1767
      %1819 = vmatpush.bf16.msra.mxu0 %v1766
      %1820 = vmatpush.bf16.msra.mxu0 %v1765
      %1821 = vmatmul.bf16.gmra.mxu0 %v342
      %v1822 = vpop.f32.mrf.mxu0
      %v1823 = vadd.f32 %v1590, %v1822
      %v1824 = vpop.f32.mrf.mxu0
      %v1825 = vadd.f32 %v1592, %v1824
      %1826 = vmatmul.bf16.gmra.mxu0 %v343
      %v1827 = vpop.f32.mrf.mxu0
      %v1828 = vadd.f32 %v1595, %v1827
      %v1829 = vpop.f32.mrf.mxu0
      %v1830 = vadd.f32 %v1597, %v1829
      %1831 = vmatmul.bf16.gmra.mxu0 %v344
      %v1832 = vpop.f32.mrf.mxu0
      %v1833 = vadd.f32 %v1600, %v1832
      %v1834 = vpop.f32.mrf.mxu0
      %v1835 = vadd.f32 %v1602, %v1834
      %1836 = vmatmul.bf16.gmra.mxu0 %v345
      %v1837 = vpop.f32.mrf.mxu0
      %v1838 = vadd.f32 %v1605, %v1837
      %v1839 = vpop.f32.mrf.mxu0
      %v1840 = vadd.f32 %v1607, %v1839
      %1841 = vmatmul.bf16.gmra.mxu0 %v346
      %v1842 = vpop.f32.mrf.mxu0
      %v1843 = vadd.f32 %v1610, %v1842
      %v1844 = vpop.f32.mrf.mxu0
      %v1845 = vadd.f32 %v1612, %v1844
      %1846 = vmatmul.bf16.gmra.mxu0 %v347
      %v1847 = vpop.f32.mrf.mxu0
      %v1848 = vadd.f32 %v1615, %v1847
      %v1849 = vpop.f32.mrf.mxu0
      %v1850 = vadd.f32 %v1617, %v1849
      %1851 = vmatmul.bf16.gmra.mxu0 %v348
      %v1852 = vpop.f32.mrf.mxu0
      %v1853 = vadd.f32 %v1620, %v1852
      %v1854 = vpop.f32.mrf.mxu0
      %v1855 = vadd.f32 %v1622, %v1854
      %1856 = vmatmul.bf16.gmra.mxu0 %v349
      %v1857 = vpop.f32.mrf.mxu0
      %v1858 = vadd.f32 %v1625, %v1857
      %v1859 = vpop.f32.mrf.mxu0
      %v1860 = vadd.f32 %v1627, %v1859
      %1861 = vmatmul.bf16.gmra.mxu0 %v350
      %v1862 = vpop.f32.mrf.mxu0
      %v1863 = vadd.f32 %v1630, %v1862
      %v1864 = vpop.f32.mrf.mxu0
      %v1865 = vadd.f32 %v1632, %v1864
      %1866 = vmatmul.bf16.gmra.mxu0 %v351
      %v1867 = vpop.f32.mrf.mxu0
      %v1868 = vadd.f32 %v1635, %v1867
      %v1869 = vpop.f32.mrf.mxu0
      %v1870 = vadd.f32 %v1637, %v1869
      %1871 = vmatmul.bf16.gmra.mxu0 %v352
      %v1872 = vpop.f32.mrf.mxu0
      %v1873 = vadd.f32 %v1640, %v1872
      %v1874 = vpop.f32.mrf.mxu0
      %v1875 = vadd.f32 %v1642, %v1874
      %1876 = vmatmul.bf16.gmra.mxu0 %v353
      %v1877 = vpop.f32.mrf.mxu0
      %v1878 = vadd.f32 %v1645, %v1877
      %v1879 = vpop.f32.mrf.mxu0
      %v1880 = vadd.f32 %v1647, %v1879
      %1881 = vmatmul.bf16.gmra.mxu0 %v354
      %v1882 = vpop.f32.mrf.mxu0
      %v1883 = vadd.f32 %v1650, %v1882
      %v1884 = vpop.f32.mrf.mxu0
      %v1885 = vadd.f32 %v1652, %v1884
      %1886 = vmatmul.bf16.gmra.mxu0 %v355
      %v1887 = vpop.f32.mrf.mxu0
      %v1888 = vadd.f32 %v1655, %v1887
      %v1889 = vpop.f32.mrf.mxu0
      %v1890 = vadd.f32 %v1657, %v1889
      %1891 = vmatmul.bf16.gmra.mxu0 %v356
      %v1892 = vpop.f32.mrf.mxu0
      %v1893 = vadd.f32 %v1660, %v1892
      %v1894 = vpop.f32.mrf.mxu0
      %v1895 = vadd.f32 %v1662, %v1894
      %1896 = vmatmul.bf16.gmra.mxu0 %v357
      %v1897 = vpop.f32.mrf.mxu0
      %v1898 = vadd.f32 %v1665, %v1897
      %v1899 = vpop.f32.mrf.mxu0
      %v1900 = vadd.f32 %v1667, %v1899
      %1901 = vdwg.mxu0
      %1902 = vmatpush.bf16.msra.mxu0 %v1780
      %1903 = vmatpush.bf16.msra.mxu0 %v1779
      %1904 = vmatpush.bf16.msra.mxu0 %v1778
      %1905 = vmatpush.bf16.msra.mxu0 %v1777
      %1906 = vmatpush.bf16.msra.mxu0 %v1776
      %1907 = vmatpush.bf16.msra.mxu0 %v1775
      %1908 = vmatpush.bf16.msra.mxu0 %v1774
      %1909 = vmatpush.bf16.msra.mxu0 %v1773
      %1910 = vmatmul.bf16.gmra.mxu0 %v434
      %v1911 = vpop.f32.mrf.mxu0
      %v1912 = vadd.f32 %v1823, %v1911
      %v1913 = vpop.f32.mrf.mxu0
      %v1914 = vadd.f32 %v1825, %v1913
      %1915 = vmatmul.bf16.gmra.mxu0 %v446
      %v1916 = vpop.f32.mrf.mxu0
      %v1917 = vadd.f32 %v1828, %v1916
      %v1918 = vpop.f32.mrf.mxu0
      %v1919 = vadd.f32 %v1830, %v1918
      %1920 = vmatmul.bf16.gmra.mxu0 %v458
      %v1921 = vpop.f32.mrf.mxu0
      %v1922 = vadd.f32 %v1833, %v1921
      %v1923 = vpop.f32.mrf.mxu0
      %v1924 = vadd.f32 %v1835, %v1923
      %1925 = vmatmul.bf16.gmra.mxu0 %v470
      %v1926 = vpop.f32.mrf.mxu0
      %v1927 = vadd.f32 %v1838, %v1926
      %v1928 = vpop.f32.mrf.mxu0
      %v1929 = vadd.f32 %v1840, %v1928
      %1930 = vmatmul.bf16.gmra.mxu0 %v482
      %v1931 = vpop.f32.mrf.mxu0
      %v1932 = vadd.f32 %v1843, %v1931
      %v1933 = vpop.f32.mrf.mxu0
      %v1934 = vadd.f32 %v1845, %v1933
      %1935 = vmatmul.bf16.gmra.mxu0 %v494
      %v1936 = vpop.f32.mrf.mxu0
      %v1937 = vadd.f32 %v1848, %v1936
      %v1938 = vpop.f32.mrf.mxu0
      %v1939 = vadd.f32 %v1850, %v1938
      %1940 = vmatmul.bf16.gmra.mxu0 %v506
      %v1941 = vpop.f32.mrf.mxu0
      %v1942 = vadd.f32 %v1853, %v1941
      %v1943 = vpop.f32.mrf.mxu0
      %v1944 = vadd.f32 %v1855, %v1943
      %1945 = vmatmul.bf16.gmra.mxu0 %v518
      %v1946 = vpop.f32.mrf.mxu0
      %v1947 = vadd.f32 %v1858, %v1946
      %v1948 = vpop.f32.mrf.mxu0
      %v1949 = vadd.f32 %v1860, %v1948
      %1950 = vmatmul.bf16.gmra.mxu0 %v530
      %v1951 = vpop.f32.mrf.mxu0
      %v1952 = vadd.f32 %v1863, %v1951
      %v1953 = vpop.f32.mrf.mxu0
      %v1954 = vadd.f32 %v1865, %v1953
      %1955 = vmatmul.bf16.gmra.mxu0 %v542
      %v1956 = vpop.f32.mrf.mxu0
      %v1957 = vadd.f32 %v1868, %v1956
      %v1958 = vpop.f32.mrf.mxu0
      %v1959 = vadd.f32 %v1870, %v1958
      %1960 = vmatmul.bf16.gmra.mxu0 %v554
      %v1961 = vpop.f32.mrf.mxu0
      %v1962 = vadd.f32 %v1873, %v1961
      %v1963 = vpop.f32.mrf.mxu0
      %v1964 = vadd.f32 %v1875, %v1963
      %1965 = vmatmul.bf16.gmra.mxu0 %v566
      %v1966 = vpop.f32.mrf.mxu0
      %v1967 = vadd.f32 %v1878, %v1966
      %v1968 = vpop.f32.mrf.mxu0
      %v1969 = vadd.f32 %v1880, %v1968
      %1970 = vmatmul.bf16.gmra.mxu0 %v578
      %v1971 = vpop.f32.mrf.mxu0
      %v1972 = vadd.f32 %v1883, %v1971
      %v1973 = vpop.f32.mrf.mxu0
      %v1974 = vadd.f32 %v1885, %v1973
      %1975 = vmatmul.bf16.gmra.mxu0 %v590
      %v1976 = vpop.f32.mrf.mxu0
      %v1977 = vadd.f32 %v1888, %v1976
      %v1978 = vpop.f32.mrf.mxu0
      %v1979 = vadd.f32 %v1890, %v1978
      %1980 = vmatmul.bf16.gmra.mxu0 %v602
      %v1981 = vpop.f32.mrf.mxu0
      %v1982 = vadd.f32 %v1893, %v1981
      %v1983 = vpop.f32.mrf.mxu0
      %v1984 = vadd.f32 %v1895, %v1983
      %1985 = vmatmul.bf16.gmra.mxu0 %v614
      %v1986 = vpop.f32.mrf.mxu0
      %v1987 = vadd.f32 %v1898, %v1986
      %v1988 = vpop.f32.mrf.mxu0
      %v1989 = vadd.f32 %v1900, %v1988
      %1990 = vdwg.mxu0
      %1991 = vmatpush.bf16.msra.mxu0 %v1788
      %1992 = vmatpush.bf16.msra.mxu0 %v1787
      %1993 = vmatpush.bf16.msra.mxu0 %v1786
      %1994 = vmatpush.bf16.msra.mxu0 %v1785
      %1995 = vmatpush.bf16.msra.mxu0 %v1784
      %1996 = vmatpush.bf16.msra.mxu0 %v1783
      %1997 = vmatpush.bf16.msra.mxu0 %v1782
      %1998 = vmatpush.bf16.msra.mxu0 %v1781
      %1999 = vmatmul.bf16.gmra.mxu0 %v634
      %v2000 = vpop.f32.mrf.mxu0
      %v2001 = vadd.f32 %v1912, %v2000
      %v2002 = vpop.f32.mrf.mxu0
      %v2003 = vadd.f32 %v1914, %v2002
      %2004 = vmatmul.bf16.gmra.mxu0 %v637
      %v2005 = vpop.f32.mrf.mxu0
      %v2006 = vadd.f32 %v1917, %v2005
      %v2007 = vpop.f32.mrf.mxu0
      %v2008 = vadd.f32 %v1919, %v2007
      %2009 = vmatmul.bf16.gmra.mxu0 %v640
      %v2010 = vpop.f32.mrf.mxu0
      %v2011 = vadd.f32 %v1922, %v2010
      %v2012 = vpop.f32.mrf.mxu0
      %v2013 = vadd.f32 %v1924, %v2012
      %2014 = vmatmul.bf16.gmra.mxu0 %v643
      %v2015 = vpop.f32.mrf.mxu0
      %v2016 = vadd.f32 %v1927, %v2015
      %v2017 = vpop.f32.mrf.mxu0
      %v2018 = vadd.f32 %v1929, %v2017
      %2019 = vmatmul.bf16.gmra.mxu0 %v646
      %v2020 = vpop.f32.mrf.mxu0
      %v2021 = vadd.f32 %v1932, %v2020
      %v2022 = vpop.f32.mrf.mxu0
      %v2023 = vadd.f32 %v1934, %v2022
      %2024 = vmatmul.bf16.gmra.mxu0 %v649
      %v2025 = vpop.f32.mrf.mxu0
      %v2026 = vadd.f32 %v1937, %v2025
      %v2027 = vpop.f32.mrf.mxu0
      %v2028 = vadd.f32 %v1939, %v2027
      %2029 = vmatmul.bf16.gmra.mxu0 %v652
      %v2030 = vpop.f32.mrf.mxu0
      %v2031 = vadd.f32 %v1942, %v2030
      %v2032 = vpop.f32.mrf.mxu0
      %v2033 = vadd.f32 %v1944, %v2032
      %2034 = vmatmul.bf16.gmra.mxu0 %v655
      %v2035 = vpop.f32.mrf.mxu0
      %v2036 = vadd.f32 %v1947, %v2035
      %v2037 = vpop.f32.mrf.mxu0
      %v2038 = vadd.f32 %v1949, %v2037
      %2039 = vmatmul.bf16.gmra.mxu0 %v658
      %v2040 = vpop.f32.mrf.mxu0
      %v2041 = vadd.f32 %v1952, %v2040
      %v2042 = vpop.f32.mrf.mxu0
      %v2043 = vadd.f32 %v1954, %v2042
      %2044 = vmatmul.bf16.gmra.mxu0 %v661
      %v2045 = vpop.f32.mrf.mxu0
      %v2046 = vadd.f32 %v1957, %v2045
      %v2047 = vpop.f32.mrf.mxu0
      %v2048 = vadd.f32 %v1959, %v2047
      %2049 = vmatmul.bf16.gmra.mxu0 %v664
      %v2050 = vpop.f32.mrf.mxu0
      %v2051 = vadd.f32 %v1962, %v2050
      %v2052 = vpop.f32.mrf.mxu0
      %v2053 = vadd.f32 %v1964, %v2052
      %2054 = vmatmul.bf16.gmra.mxu0 %v667
      %v2055 = vpop.f32.mrf.mxu0
      %v2056 = vadd.f32 %v1967, %v2055
      %v2057 = vpop.f32.mrf.mxu0
      %v2058 = vadd.f32 %v1969, %v2057
      %2059 = vmatmul.bf16.gmra.mxu0 %v670
      %v2060 = vpop.f32.mrf.mxu0
      %v2061 = vadd.f32 %v1972, %v2060
      %v2062 = vpop.f32.mrf.mxu0
      %v2063 = vadd.f32 %v1974, %v2062
      %2064 = vmatmul.bf16.gmra.mxu0 %v673
      %v2065 = vpop.f32.mrf.mxu0
      %v2066 = vadd.f32 %v1977, %v2065
      %v2067 = vpop.f32.mrf.mxu0
      %v2068 = vadd.f32 %v1979, %v2067
      %2069 = vmatmul.bf16.gmra.mxu0 %v676
      %v2070 = vpop.f32.mrf.mxu0
      %v2071 = vadd.f32 %v1982, %v2070
      %v2072 = vpop.f32.mrf.mxu0
      %v2073 = vadd.f32 %v1984, %v2072
      %2074 = vmatmul.bf16.gmra.mxu0 %v679
      %v2075 = vpop.f32.mrf.mxu0
      %v2076 = vadd.f32 %v1987, %v2075
      %v2077 = vpop.f32.mrf.mxu0
      %v2078 = vadd.f32 %v1989, %v2077
      %2079 = vdwg.mxu0
      %s2080 = scalar_lea.vmem %s217, 24
      %v2081 = vld [vmem:[%s2080] sm:$0xf]
      %v2082 = vld [vmem:[%s2080 + $0x4] sm:$0xf]
      %v2083 = vld [vmem:[%s2080 + $0x8] sm:$0x1]
      %v2084 = vld [vmem:[%s2080 + $0xc] sm:$0xf]
      %v2085 = vld [vmem:[%s2080 + $0x10] sm:$0xf]
      %v2086 = vld [vmem:[%s2080 + $0x14] sm:$0x1]
      %v2087 = vld [vmem:[%s2080 + $0x18] sm:$0xf]
      %v2088 = vld [vmem:[%s2080 + $0x1c] sm:$0xf]
      %v2089 = vld [vmem:[%s2080 + $0x20] sm:$0x1]
      %v2090 = vld [vmem:[%s2080 + $0x24] sm:$0xf]
      %v2091 = vld [vmem:[%s2080 + $0x28] sm:$0xf]
      %v2092 = vld [vmem:[%s2080 + $0x2c] sm:$0x1]
      %v2093 = vld [vmem:[%s2080 + $0x30] sm:$0xf]
      %v2094 = vld [vmem:[%s2080 + $0x34] sm:$0xf]
      %v2095 = vld [vmem:[%s2080 + $0x38] sm:$0x1]
      %v2096 = vld [vmem:[%s2080 + $0x3c] sm:$0xf]
      %v2097 = vld [vmem:[%s2080 + $0x40] sm:$0xf]
      %v2098 = vld [vmem:[%s2080 + $0x44] sm:$0x1]
      %v2099 = vld [vmem:[%s2080 + $0x48] sm:$0xf]
      %v2100 = vld [vmem:[%s2080 + $0x4c] sm:$0xf]
      %v2101 = vld [vmem:[%s2080 + $0x50] sm:$0x1]
      %v2102 = vld [vmem:[%s2080 + $0x54] sm:$0xf]
      %v2103 = vld [vmem:[%s2080 + $0x58] sm:$0xf]
      %v2104 = vld [vmem:[%s2080 + $0x5c] sm:$0x1]
      %v2105 = vld [vmem:[%s2080 + $0x60] sm:$0xf]
      %v2106 = vld [vmem:[%s2080 + $0x64] sm:$0xf]
      %v2107 = vld [vmem:[%s2080 + $0x68] sm:$0x1]
      %v2108 = vld [vmem:[%s2080 + $0x6c] sm:$0xf]
      %v2109 = vld [vmem:[%s2080 + $0x70] sm:$0xf]
      %v2110 = vld [vmem:[%s2080 + $0x74] sm:$0x1]
      %v2111 = vld [vmem:[%s2080 + $0x78] sm:$0xf]
      %v2112 = vld [vmem:[%s2080 + $0x7c] sm:$0xf]
      %v2113 = vld [vmem:[%s2080 + $0x80] sm:$0x1]
      %v2114 = vld [vmem:[%s2080 + $0x84] sm:$0xf]
      %v2115 = vld [vmem:[%s2080 + $0x88] sm:$0xf]
      %v2116 = vld [vmem:[%s2080 + $0x8c] sm:$0x1]
      %v2117 = vld [vmem:[%s2080 + $0x90] sm:$0xf]
      %v2118 = vld [vmem:[%s2080 + $0x94] sm:$0xf]
      %v2119 = vld [vmem:[%s2080 + $0x98] sm:$0x1]
      %v2120 = vld [vmem:[%s2080 + $0x9c] sm:$0xf]
      %v2121 = vld [vmem:[%s2080 + $0xa0] sm:$0xf]
      %v2122 = vld [vmem:[%s2080 + $0xa4] sm:$0x1]
      %v2123 = vld [vmem:[%s2080 + $0xa8] sm:$0xf]
      %v2124 = vld [vmem:[%s2080 + $0xac] sm:$0xf]
      %v2125 = vld [vmem:[%s2080 + $0xb0] sm:$0x1]
      %v2126 = vld [vmem:[%s2080 + $0xb4] sm:$0xf]
      %v2127 = vld [vmem:[%s2080 + $0xb8] sm:$0xf]
      %v2128 = vld [vmem:[%s2080 + $0xbc] sm:$0x1]
      %v2161 = vunpack.c.l.b16 %v2081
      %v2162 = vunpack.c.l.b16 %v2082
      %v2163 = vunpack.c.l.b16 %v2084
      %v2164 = vunpack.c.l.b16 %v2085
      %v2165 = vunpack.c.l.b16 %v2087
      %v2166 = vunpack.c.l.b16 %v2088
      %v2167 = vunpack.c.l.b16 %v2090
      %v2168 = vunpack.c.l.b16 %v2091
      %v2169 = vunpack.c.l.b16 %v2093
      %v2170 = vunpack.c.l.b16 %v2094
      %v2171 = vunpack.c.l.b16 %v2096
      %v2172 = vunpack.c.l.b16 %v2097
      %v2173 = vunpack.c.l.b16 %v2099
      %v2174 = vunpack.c.l.b16 %v2100
      %v2175 = vunpack.c.l.b16 %v2102
      %v2176 = vunpack.c.l.b16 %v2103
      %v2177 = vunpack.c.l.b16 %v2105
      %v2178 = vunpack.c.l.b16 %v2106
      %v2179 = vunpack.c.l.b16 %v2108
      %v2180 = vunpack.c.l.b16 %v2109
      %v2181 = vunpack.c.l.b16 %v2111
      %v2182 = vunpack.c.l.b16 %v2112
      %v2183 = vunpack.c.l.b16 %v2114
      %v2184 = vunpack.c.l.b16 %v2115
      %v2185 = vunpack.c.l.b16 %v2117
      %v2186 = vunpack.c.l.b16 %v2118
      %v2187 = vunpack.c.l.b16 %v2120
      %v2188 = vunpack.c.l.b16 %v2121
      %v2189 = vunpack.c.l.b16 %v2123
      %v2190 = vunpack.c.l.b16 %v2124
      %v2191 = vunpack.c.l.b16 %v2126
      %v2192 = vunpack.c.l.b16 %v2127
      %v2193 = vpack.c.b16 %v2162, %v2161
      %v2194 = vpack.c.b16 %v2164, %v2163
      %v2195 = vpack.c.b16 %v2166, %v2165
      %v2196 = vpack.c.b16 %v2168, %v2167
      %v2197 = vpack.c.b16 %v2170, %v2169
      %v2198 = vpack.c.b16 %v2172, %v2171
      %v2199 = vpack.c.b16 %v2174, %v2173
      %v2200 = vpack.c.b16 %v2176, %v2175
      %v2201 = vpack.c.b16 %v2178, %v2177
      %v2202 = vpack.c.b16 %v2180, %v2179
      %v2203 = vpack.c.b16 %v2182, %v2181
      %v2204 = vpack.c.b16 %v2184, %v2183
      %v2205 = vpack.c.b16 %v2186, %v2185
      %v2206 = vpack.c.b16 %v2188, %v2187
      %v2207 = vpack.c.b16 %v2190, %v2189
      %v2208 = vpack.c.b16 %v2192, %v2191
      %v2241 = vunpack.c.l.b16 %v2083
      %v2242 = vunpack.c.l.b16 %v2086
      %v2243 = vunpack.c.l.b16 %v2089
      %v2244 = vunpack.c.l.b16 %v2092
      %v2245 = vunpack.c.l.b16 %v2095
      %v2246 = vunpack.c.l.b16 %v2098
      %v2247 = vunpack.c.l.b16 %v2101
      %v2248 = vunpack.c.l.b16 %v2104
      %v2249 = vunpack.c.l.b16 %v2107
      %v2250 = vunpack.c.l.b16 %v2110
      %v2251 = vunpack.c.l.b16 %v2113
      %v2252 = vunpack.c.l.b16 %v2116
      %v2253 = vunpack.c.l.b16 %v2119
      %v2254 = vunpack.c.l.b16 %v2122
      %v2255 = vunpack.c.l.b16 %v2125
      %v2256 = vunpack.c.l.b16 %v2128
      %v2257 = vpack.c.b16 %v2241, %v2241
      %v2258 = vpack.c.b16 %v2242, %v2242
      %v2259 = vpack.c.b16 %v2243, %v2243
      %v2260 = vpack.c.b16 %v2244, %v2244
      %v2261 = vpack.c.b16 %v2245, %v2245
      %v2262 = vpack.c.b16 %v2246, %v2246
      %v2263 = vpack.c.b16 %v2247, %v2247
      %v2264 = vpack.c.b16 %v2248, %v2248
      %v2265 = vpack.c.b16 %v2249, %v2249
      %v2266 = vpack.c.b16 %v2250, %v2250
      %v2267 = vpack.c.b16 %v2251, %v2251
      %v2268 = vpack.c.b16 %v2252, %v2252
      %v2269 = vpack.c.b16 %v2253, %v2253
      %v2270 = vpack.c.b16 %v2254, %v2254
      %v2271 = vpack.c.b16 %v2255, %v2255
      %v2272 = vpack.c.b16 %v2256, %v2256
      %v2274 = vshrl.u32 %v2193, 16
      %v2276 = vshll.u32 %v2193, 16
      %v2278 = vrot.slane %v2276, 1
      %v2279 = vor.u32 %v2274, %v2278
      %v2281 = vshll.u32 %v2257, 16
      %v2283 = vrot.slane %v2281, 1
      %v2284 = vsel %vm422, %v2279, %v2283
      %v2286 = vshrl.u32 %v2194, 16
      %v2288 = vshll.u32 %v2194, 16
      %v2290 = vrot.slane %v2288, 1
      %v2291 = vor.u32 %v2286, %v2290
      %v2293 = vshll.u32 %v2258, 16
      %v2295 = vrot.slane %v2293, 1
      %v2296 = vsel %vm422, %v2291, %v2295
      %v2298 = vshrl.u32 %v2195, 16
      %v2300 = vshll.u32 %v2195, 16
      %v2302 = vrot.slane %v2300, 1
      %v2303 = vor.u32 %v2298, %v2302
      %v2305 = vshll.u32 %v2259, 16
      %v2307 = vrot.slane %v2305, 1
      %v2308 = vsel %vm422, %v2303, %v2307
      %v2310 = vshrl.u32 %v2196, 16
      %v2312 = vshll.u32 %v2196, 16
      %v2314 = vrot.slane %v2312, 1
      %v2315 = vor.u32 %v2310, %v2314
      %v2317 = vshll.u32 %v2260, 16
      %v2319 = vrot.slane %v2317, 1
      %v2320 = vsel %vm422, %v2315, %v2319
      %v2322 = vshrl.u32 %v2197, 16
      %v2324 = vshll.u32 %v2197, 16
      %v2326 = vrot.slane %v2324, 1
      %v2327 = vor.u32 %v2322, %v2326
      %v2329 = vshll.u32 %v2261, 16
      %v2331 = vrot.slane %v2329, 1
      %v2332 = vsel %vm422, %v2327, %v2331
      %v2334 = vshrl.u32 %v2198, 16
      %v2336 = vshll.u32 %v2198, 16
      %v2338 = vrot.slane %v2336, 1
      %v2339 = vor.u32 %v2334, %v2338
      %v2341 = vshll.u32 %v2262, 16
      %v2343 = vrot.slane %v2341, 1
      %v2344 = vsel %vm422, %v2339, %v2343
      %v2346 = vshrl.u32 %v2199, 16
      %v2348 = vshll.u32 %v2199, 16
      %v2350 = vrot.slane %v2348, 1
      %v2351 = vor.u32 %v2346, %v2350
      %v2353 = vshll.u32 %v2263, 16
      %v2355 = vrot.slane %v2353, 1
      %v2356 = vsel %vm422, %v2351, %v2355
      %v2358 = vshrl.u32 %v2200, 16
      %v2360 = vshll.u32 %v2200, 16
      %v2362 = vrot.slane %v2360, 1
      %v2363 = vor.u32 %v2358, %v2362
      %v2365 = vshll.u32 %v2264, 16
      %v2367 = vrot.slane %v2365, 1
      %v2368 = vsel %vm422, %v2363, %v2367
      %v2370 = vshrl.u32 %v2201, 16
      %v2372 = vshll.u32 %v2201, 16
      %v2374 = vrot.slane %v2372, 1
      %v2375 = vor.u32 %v2370, %v2374
      %v2377 = vshll.u32 %v2265, 16
      %v2379 = vrot.slane %v2377, 1
      %v2380 = vsel %vm422, %v2375, %v2379
      %v2382 = vshrl.u32 %v2202, 16
      %v2384 = vshll.u32 %v2202, 16
      %v2386 = vrot.slane %v2384, 1
      %v2387 = vor.u32 %v2382, %v2386
      %v2389 = vshll.u32 %v2266, 16
      %v2391 = vrot.slane %v2389, 1
      %v2392 = vsel %vm422, %v2387, %v2391
      %v2394 = vshrl.u32 %v2203, 16
      %v2396 = vshll.u32 %v2203, 16
      %v2398 = vrot.slane %v2396, 1
      %v2399 = vor.u32 %v2394, %v2398
      %v2401 = vshll.u32 %v2267, 16
      %v2403 = vrot.slane %v2401, 1
      %v2404 = vsel %vm422, %v2399, %v2403
      %v2406 = vshrl.u32 %v2204, 16
      %v2408 = vshll.u32 %v2204, 16
      %v2410 = vrot.slane %v2408, 1
      %v2411 = vor.u32 %v2406, %v2410
      %v2413 = vshll.u32 %v2268, 16
      %v2415 = vrot.slane %v2413, 1
      %v2416 = vsel %vm422, %v2411, %v2415
      %v2418 = vshrl.u32 %v2205, 16
      %v2420 = vshll.u32 %v2205, 16
      %v2422 = vrot.slane %v2420, 1
      %v2423 = vor.u32 %v2418, %v2422
      %v2425 = vshll.u32 %v2269, 16
      %v2427 = vrot.slane %v2425, 1
      %v2428 = vsel %vm422, %v2423, %v2427
      %v2430 = vshrl.u32 %v2206, 16
      %v2432 = vshll.u32 %v2206, 16
      %v2434 = vrot.slane %v2432, 1
      %v2435 = vor.u32 %v2430, %v2434
      %v2437 = vshll.u32 %v2270, 16
      %v2439 = vrot.slane %v2437, 1
      %v2440 = vsel %vm422, %v2435, %v2439
      %v2442 = vshrl.u32 %v2207, 16
      %v2444 = vshll.u32 %v2207, 16
      %v2446 = vrot.slane %v2444, 1
      %v2447 = vor.u32 %v2442, %v2446
      %v2449 = vshll.u32 %v2271, 16
      %v2451 = vrot.slane %v2449, 1
      %v2452 = vsel %vm422, %v2447, %v2451
      %v2454 = vshrl.u32 %v2208, 16
      %v2456 = vshll.u32 %v2208, 16
      %v2458 = vrot.slane %v2456, 1
      %v2459 = vor.u32 %v2454, %v2458
      %v2461 = vshll.u32 %v2272, 16
      %v2463 = vrot.slane %v2461, 1
      %v2464 = vsel %vm422, %v2459, %v2463
      %v2481 = vrot.slane %v2193, 1
      %v2482 = vrot.slane %v2257, 1
      %v2483 = vsel %vm631, %v2481, %v2482
      %v2484 = vrot.slane %v2194, 1
      %v2485 = vrot.slane %v2258, 1
      %v2486 = vsel %vm631, %v2484, %v2485
      %v2487 = vrot.slane %v2195, 1
      %v2488 = vrot.slane %v2259, 1
      %v2489 = vsel %vm631, %v2487, %v2488
      %v2490 = vrot.slane %v2196, 1
      %v2491 = vrot.slane %v2260, 1
      %v2492 = vsel %vm631, %v2490, %v2491
      %v2493 = vrot.slane %v2197, 1
      %v2494 = vrot.slane %v2261, 1
      %v2495 = vsel %vm631, %v2493, %v2494
      %v2496 = vrot.slane %v2198, 1
      %v2497 = vrot.slane %v2262, 1
      %v2498 = vsel %vm631, %v2496, %v2497
      %v2499 = vrot.slane %v2199, 1
      %v2500 = vrot.slane %v2263, 1
      %v2501 = vsel %vm631, %v2499, %v2500
      %v2502 = vrot.slane %v2200, 1
      %v2503 = vrot.slane %v2264, 1
      %v2504 = vsel %vm631, %v2502, %v2503
      %v2505 = vrot.slane %v2201, 1
      %v2506 = vrot.slane %v2265, 1
      %v2507 = vsel %vm631, %v2505, %v2506
      %v2508 = vrot.slane %v2202, 1
      %v2509 = vrot.slane %v2266, 1
      %v2510 = vsel %vm631, %v2508, %v2509
      %v2511 = vrot.slane %v2203, 1
      %v2512 = vrot.slane %v2267, 1
      %v2513 = vsel %vm631, %v2511, %v2512
      %v2514 = vrot.slane %v2204, 1
      %v2515 = vrot.slane %v2268, 1
      %v2516 = vsel %vm631, %v2514, %v2515
      %v2517 = vrot.slane %v2205, 1
      %v2518 = vrot.slane %v2269, 1
      %v2519 = vsel %vm631, %v2517, %v2518
      %v2520 = vrot.slane %v2206, 1
      %v2521 = vrot.slane %v2270, 1
      %v2522 = vsel %vm631, %v2520, %v2521
      %v2523 = vrot.slane %v2207, 1
      %v2524 = vrot.slane %v2271, 1
      %v2525 = vsel %vm631, %v2523, %v2524
      %v2526 = vrot.slane %v2208, 1
      %v2527 = vrot.slane %v2272, 1
      %v2528 = vsel %vm631, %v2526, %v2527
      %s2545 = scalar_lea.vmem %s1, 384
      %v2546 = vld [vmem:[%s2545] sm:$0xf]
      %v2547 = vld [vmem:[%s2545 + $0x4] sm:$0xf]
      %v2548 = vld [vmem:[%s2545 + $0x8] sm:$0xf]
      %v2549 = vld [vmem:[%s2545 + $0xc] sm:$0xf]
      %v2550 = vld [vmem:[%s2545 + $0x10] sm:$0xf]
      %v2551 = vld [vmem:[%s2545 + $0x14] sm:$0xf]
      %v2552 = vld [vmem:[%s2545 + $0x18] sm:$0xf]
      %v2553 = vld [vmem:[%s2545 + $0x1c] sm:$0xf]
      %v2554 = vld [vmem:[%s2545 + $0x20] sm:$0xf]
      %v2555 = vld [vmem:[%s2545 + $0x24] sm:$0xf]
      %v2556 = vld [vmem:[%s2545 + $0x28] sm:$0xf]
      %v2557 = vld [vmem:[%s2545 + $0x2c] sm:$0xf]
      %v2558 = vld [vmem:[%s2545 + $0x30] sm:$0xf]
      %v2559 = vld [vmem:[%s2545 + $0x34] sm:$0xf]
      %v2560 = vld [vmem:[%s2545 + $0x38] sm:$0xf]
      %v2561 = vld [vmem:[%s2545 + $0x3c] sm:$0xf]
      %v2562 = vld [vmem:[%s2545 + $0x40] sm:$0xf]
      %v2563 = vld [vmem:[%s2545 + $0x44] sm:$0xf]
      %v2564 = vld [vmem:[%s2545 + $0x48] sm:$0xf]
      %v2565 = vld [vmem:[%s2545 + $0x4c] sm:$0xf]
      %v2566 = vld [vmem:[%s2545 + $0x50] sm:$0xf]
      %v2567 = vld [vmem:[%s2545 + $0x54] sm:$0xf]
      %v2568 = vld [vmem:[%s2545 + $0x58] sm:$0xf]
      %v2569 = vld [vmem:[%s2545 + $0x5c] sm:$0xf]
      %v2570 = vld [vmem:[%s2545 + $0x60] sm:$0xf]
      %v2571 = vld [vmem:[%s2545 + $0x64] sm:$0xf]
      %v2572 = vld [vmem:[%s2545 + $0x68] sm:$0xf]
      %v2573 = vld [vmem:[%s2545 + $0x6c] sm:$0xf]
      %v2574 = vld [vmem:[%s2545 + $0x70] sm:$0xf]
      %v2575 = vld [vmem:[%s2545 + $0x74] sm:$0xf]
      %v2576 = vld [vmem:[%s2545 + $0x78] sm:$0xf]
      %v2577 = vld [vmem:[%s2545 + $0x7c] sm:$0xf]
      %v2578 = vld [vmem:[%s2545 + $0x80] sm:$0xf]
      %v2579 = vld [vmem:[%s2545 + $0x84] sm:$0xf]
      %v2580 = vld [vmem:[%s2545 + $0x88] sm:$0xf]
      %v2581 = vld [vmem:[%s2545 + $0x8c] sm:$0xf]
      %v2582 = vld [vmem:[%s2545 + $0x90] sm:$0xf]
      %v2583 = vld [vmem:[%s2545 + $0x94] sm:$0xf]
      %v2584 = vld [vmem:[%s2545 + $0x98] sm:$0xf]
      %v2585 = vld [vmem:[%s2545 + $0x9c] sm:$0xf]
      %v2586 = vld [vmem:[%s2545 + $0xa0] sm:$0xf]
      %v2587 = vld [vmem:[%s2545 + $0xa4] sm:$0xf]
      %v2588 = vld [vmem:[%s2545 + $0xa8] sm:$0xf]
      %v2589 = vld [vmem:[%s2545 + $0xac] sm:$0xf]
      %v2590 = vld [vmem:[%s2545 + $0xb0] sm:$0xf]
      %v2591 = vld [vmem:[%s2545 + $0xb4] sm:$0xf]
      %v2592 = vld [vmem:[%s2545 + $0xb8] sm:$0xf]
      %v2593 = vld [vmem:[%s2545 + $0xbc] sm:$0xf]
      %v2642 = vunpack.c.l.b16 %v2546
      %v2643 = vunpack.c.l.b16 %v2547
      %v2644 = vunpack.c.l.b16 %v2548
      %v2645 = vunpack.c.l.b16 %v2549
      %v2646 = vunpack.c.l.b16 %v2550
      %v2647 = vunpack.c.l.b16 %v2551
      %v2648 = vunpack.c.l.b16 %v2552
      %v2649 = vunpack.c.l.b16 %v2553
      %v2650 = vunpack.c.l.b16 %v2554
      %v2651 = vunpack.c.l.b16 %v2555
      %v2652 = vunpack.c.l.b16 %v2556
      %v2653 = vunpack.c.l.b16 %v2557
      %v2654 = vunpack.c.l.b16 %v2558
      %v2655 = vunpack.c.l.b16 %v2559
      %v2656 = vunpack.c.l.b16 %v2560
      %v2657 = vunpack.c.l.b16 %v2561
      %v2658 = vunpack.c.l.b16 %v2562
      %v2659 = vunpack.c.l.b16 %v2563
      %v2660 = vunpack.c.l.b16 %v2564
      %v2661 = vunpack.c.l.b16 %v2565
      %v2662 = vunpack.c.l.b16 %v2566
      %v2663 = vunpack.c.l.b16 %v2567
      %v2664 = vunpack.c.l.b16 %v2568
      %v2665 = vunpack.c.l.b16 %v2569
      %v2666 = vunpack.c.l.b16 %v2570
      %v2667 = vunpack.c.l.b16 %v2571
      %v2668 = vunpack.c.l.b16 %v2572
      %v2669 = vunpack.c.l.b16 %v2573
      %v2670 = vunpack.c.l.b16 %v2574
      %v2671 = vunpack.c.l.b16 %v2575
      %v2672 = vunpack.c.l.b16 %v2576
      %v2673 = vunpack.c.l.b16 %v2577
      %v2674 = vunpack.c.l.b16 %v2578
      %v2675 = vunpack.c.l.b16 %v2579
      %v2676 = vunpack.c.l.b16 %v2580
      %v2677 = vunpack.c.l.b16 %v2581
      %v2678 = vunpack.c.l.b16 %v2582
      %v2679 = vunpack.c.l.b16 %v2583
      %v2680 = vunpack.c.l.b16 %v2584
      %v2681 = vunpack.c.l.b16 %v2585
      %v2682 = vunpack.c.l.b16 %v2586
      %v2683 = vunpack.c.l.b16 %v2587
      %v2684 = vunpack.c.l.b16 %v2588
      %v2685 = vunpack.c.l.b16 %v2589
      %v2686 = vunpack.c.l.b16 %v2590
      %v2687 = vunpack.c.l.b16 %v2591
      %v2688 = vunpack.c.l.b16 %v2592
      %v2689 = vunpack.c.l.b16 %v2593
      %v2690 = vpack.c.b16 %v2643, %v2642
      %v2691 = vpack.c.b16 %v2645, %v2644
      %v2692 = vpack.c.b16 %v2647, %v2646
      %v2693 = vpack.c.b16 %v2649, %v2648
      %v2694 = vpack.c.b16 %v2651, %v2650
      %v2695 = vpack.c.b16 %v2653, %v2652
      %v2696 = vpack.c.b16 %v2655, %v2654
      %v2697 = vpack.c.b16 %v2657, %v2656
      %v2698 = vpack.c.b16 %v2659, %v2658
      %v2699 = vpack.c.b16 %v2661, %v2660
      %v2700 = vpack.c.b16 %v2663, %v2662
      %v2701 = vpack.c.b16 %v2665, %v2664
      %v2702 = vpack.c.b16 %v2667, %v2666
      %v2703 = vpack.c.b16 %v2669, %v2668
      %v2704 = vpack.c.b16 %v2671, %v2670
      %v2705 = vpack.c.b16 %v2673, %v2672
      %v2706 = vpack.c.b16 %v2675, %v2674
      %v2707 = vpack.c.b16 %v2677, %v2676
      %v2708 = vpack.c.b16 %v2679, %v2678
      %v2709 = vpack.c.b16 %v2681, %v2680
      %v2710 = vpack.c.b16 %v2683, %v2682
      %v2711 = vpack.c.b16 %v2685, %v2684
      %v2712 = vpack.c.b16 %v2687, %v2686
      %v2713 = vpack.c.b16 %v2689, %v2688
      %2738 = vmatpush.bf16.msra.mxu0 %v2697
      %2739 = vmatpush.bf16.msra.mxu0 %v2696
      %2740 = vmatpush.bf16.msra.mxu0 %v2695
      %2741 = vmatpush.bf16.msra.mxu0 %v2694
      %2742 = vmatpush.bf16.msra.mxu0 %v2693
      %2743 = vmatpush.bf16.msra.mxu0 %v2692
      %2744 = vmatpush.bf16.msra.mxu0 %v2691
      %2745 = vmatpush.bf16.msra.mxu0 %v2690
      %2746 = vmatmul.bf16.gmra.mxu0 %v2193
      %v2747 = vpop.f32.mrf.mxu0
      %v2748 = vadd.f32 0.0, %v2747
      %v2749 = vpop.f32.mrf.mxu0
      %v2750 = vadd.f32 0.0, %v2749
      %2751 = vmatmul.bf16.gmra.mxu0 %v2194
      %v2752 = vpop.f32.mrf.mxu0
      %v2753 = vadd.f32 0.0, %v2752
      %v2754 = vpop.f32.mrf.mxu0
      %v2755 = vadd.f32 0.0, %v2754
      %2756 = vmatmul.bf16.gmra.mxu0 %v2195
      %v2757 = vpop.f32.mrf.mxu0
      %v2758 = vadd.f32 0.0, %v2757
      %v2759 = vpop.f32.mrf.mxu0
      %v2760 = vadd.f32 0.0, %v2759
      %2761 = vmatmul.bf16.gmra.mxu0 %v2196
      %v2762 = vpop.f32.mrf.mxu0
      %v2763 = vadd.f32 0.0, %v2762
      %v2764 = vpop.f32.mrf.mxu0
      %v2765 = vadd.f32 0.0, %v2764
      %2766 = vmatmul.bf16.gmra.mxu0 %v2197
      %v2767 = vpop.f32.mrf.mxu0
      %v2768 = vadd.f32 0.0, %v2767
      %v2769 = vpop.f32.mrf.mxu0
      %v2770 = vadd.f32 0.0, %v2769
      %2771 = vmatmul.bf16.gmra.mxu0 %v2198
      %v2772 = vpop.f32.mrf.mxu0
      %v2773 = vadd.f32 0.0, %v2772
      %v2774 = vpop.f32.mrf.mxu0
      %v2775 = vadd.f32 0.0, %v2774
      %2776 = vmatmul.bf16.gmra.mxu0 %v2199
      %v2777 = vpop.f32.mrf.mxu0
      %v2778 = vadd.f32 0.0, %v2777
      %v2779 = vpop.f32.mrf.mxu0
      %v2780 = vadd.f32 0.0, %v2779
      %2781 = vmatmul.bf16.gmra.mxu0 %v2200
      %v2782 = vpop.f32.mrf.mxu0
      %v2783 = vadd.f32 0.0, %v2782
      %v2784 = vpop.f32.mrf.mxu0
      %v2785 = vadd.f32 0.0, %v2784
      %2786 = vmatmul.bf16.gmra.mxu0 %v2201
      %v2787 = vpop.f32.mrf.mxu0
      %v2788 = vadd.f32 0.0, %v2787
      %v2789 = vpop.f32.mrf.mxu0
      %v2790 = vadd.f32 0.0, %v2789
      %2791 = vmatmul.bf16.gmra.mxu0 %v2202
      %v2792 = vpop.f32.mrf.mxu0
      %v2793 = vadd.f32 0.0, %v2792
      %v2794 = vpop.f32.mrf.mxu0
      %v2795 = vadd.f32 0.0, %v2794
      %2796 = vmatmul.bf16.gmra.mxu0 %v2203
      %v2797 = vpop.f32.mrf.mxu0
      %v2798 = vadd.f32 0.0, %v2797
      %v2799 = vpop.f32.mrf.mxu0
      %v2800 = vadd.f32 0.0, %v2799
      %2801 = vmatmul.bf16.gmra.mxu0 %v2204
      %v2802 = vpop.f32.mrf.mxu0
      %v2803 = vadd.f32 0.0, %v2802
      %v2804 = vpop.f32.mrf.mxu0
      %v2805 = vadd.f32 0.0, %v2804
      %2806 = vmatmul.bf16.gmra.mxu0 %v2205
      %v2807 = vpop.f32.mrf.mxu0
      %v2808 = vadd.f32 0.0, %v2807
      %v2809 = vpop.f32.mrf.mxu0
      %v2810 = vadd.f32 0.0, %v2809
      %2811 = vmatmul.bf16.gmra.mxu0 %v2206
      %v2812 = vpop.f32.mrf.mxu0
      %v2813 = vadd.f32 0.0, %v2812
      %v2814 = vpop.f32.mrf.mxu0
      %v2815 = vadd.f32 0.0, %v2814
      %2816 = vmatmul.bf16.gmra.mxu0 %v2207
      %v2817 = vpop.f32.mrf.mxu0
      %v2818 = vadd.f32 0.0, %v2817
      %v2819 = vpop.f32.mrf.mxu0
      %v2820 = vadd.f32 0.0, %v2819
      %2821 = vmatmul.bf16.gmra.mxu0 %v2208
      %v2822 = vpop.f32.mrf.mxu0
      %v2823 = vadd.f32 0.0, %v2822
      %v2824 = vpop.f32.mrf.mxu0
      %v2825 = vadd.f32 0.0, %v2824
      %2826 = vdwg.mxu0
      %2827 = vmatpush.bf16.msra.mxu0 %v2705
      %2828 = vmatpush.bf16.msra.mxu0 %v2704
      %2829 = vmatpush.bf16.msra.mxu0 %v2703
      %2830 = vmatpush.bf16.msra.mxu0 %v2702
      %2831 = vmatpush.bf16.msra.mxu0 %v2701
      %2832 = vmatpush.bf16.msra.mxu0 %v2700
      %2833 = vmatpush.bf16.msra.mxu0 %v2699
      %2834 = vmatpush.bf16.msra.mxu0 %v2698
      %2835 = vmatmul.bf16.gmra.mxu0 %v2284
      %v2836 = vpop.f32.mrf.mxu0
      %v2837 = vadd.f32 %v2748, %v2836
      %v2838 = vpop.f32.mrf.mxu0
      %v2839 = vadd.f32 %v2750, %v2838
      %2840 = vmatmul.bf16.gmra.mxu0 %v2296
      %v2841 = vpop.f32.mrf.mxu0
      %v2842 = vadd.f32 %v2753, %v2841
      %v2843 = vpop.f32.mrf.mxu0
      %v2844 = vadd.f32 %v2755, %v2843
      %2845 = vmatmul.bf16.gmra.mxu0 %v2308
      %v2846 = vpop.f32.mrf.mxu0
      %v2847 = vadd.f32 %v2758, %v2846
      %v2848 = vpop.f32.mrf.mxu0
      %v2849 = vadd.f32 %v2760, %v2848
      %2850 = vmatmul.bf16.gmra.mxu0 %v2320
      %v2851 = vpop.f32.mrf.mxu0
      %v2852 = vadd.f32 %v2763, %v2851
      %v2853 = vpop.f32.mrf.mxu0
      %v2854 = vadd.f32 %v2765, %v2853
      %2855 = vmatmul.bf16.gmra.mxu0 %v2332
      %v2856 = vpop.f32.mrf.mxu0
      %v2857 = vadd.f32 %v2768, %v2856
      %v2858 = vpop.f32.mrf.mxu0
      %v2859 = vadd.f32 %v2770, %v2858
      %2860 = vmatmul.bf16.gmra.mxu0 %v2344
      %v2861 = vpop.f32.mrf.mxu0
      %v2862 = vadd.f32 %v2773, %v2861
      %v2863 = vpop.f32.mrf.mxu0
      %v2864 = vadd.f32 %v2775, %v2863
      %2865 = vmatmul.bf16.gmra.mxu0 %v2356
      %v2866 = vpop.f32.mrf.mxu0
      %v2867 = vadd.f32 %v2778, %v2866
      %v2868 = vpop.f32.mrf.mxu0
      %v2869 = vadd.f32 %v2780, %v2868
      %2870 = vmatmul.bf16.gmra.mxu0 %v2368
      %v2871 = vpop.f32.mrf.mxu0
      %v2872 = vadd.f32 %v2783, %v2871
      %v2873 = vpop.f32.mrf.mxu0
      %v2874 = vadd.f32 %v2785, %v2873
      %2875 = vmatmul.bf16.gmra.mxu0 %v2380
      %v2876 = vpop.f32.mrf.mxu0
      %v2877 = vadd.f32 %v2788, %v2876
      %v2878 = vpop.f32.mrf.mxu0
      %v2879 = vadd.f32 %v2790, %v2878
      %2880 = vmatmul.bf16.gmra.mxu0 %v2392
      %v2881 = vpop.f32.mrf.mxu0
      %v2882 = vadd.f32 %v2793, %v2881
      %v2883 = vpop.f32.mrf.mxu0
      %v2884 = vadd.f32 %v2795, %v2883
      %2885 = vmatmul.bf16.gmra.mxu0 %v2404
      %v2886 = vpop.f32.mrf.mxu0
      %v2887 = vadd.f32 %v2798, %v2886
      %v2888 = vpop.f32.mrf.mxu0
      %v2889 = vadd.f32 %v2800, %v2888
      %2890 = vmatmul.bf16.gmra.mxu0 %v2416
      %v2891 = vpop.f32.mrf.mxu0
      %v2892 = vadd.f32 %v2803, %v2891
      %v2893 = vpop.f32.mrf.mxu0
      %v2894 = vadd.f32 %v2805, %v2893
      %2895 = vmatmul.bf16.gmra.mxu0 %v2428
      %v2896 = vpop.f32.mrf.mxu0
      %v2897 = vadd.f32 %v2808, %v2896
      %v2898 = vpop.f32.mrf.mxu0
      %v2899 = vadd.f32 %v2810, %v2898
      %2900 = vmatmul.bf16.gmra.mxu0 %v2440
      %v2901 = vpop.f32.mrf.mxu0
      %v2902 = vadd.f32 %v2813, %v2901
      %v2903 = vpop.f32.mrf.mxu0
      %v2904 = vadd.f32 %v2815, %v2903
      %2905 = vmatmul.bf16.gmra.mxu0 %v2452
      %v2906 = vpop.f32.mrf.mxu0
      %v2907 = vadd.f32 %v2818, %v2906
      %v2908 = vpop.f32.mrf.mxu0
      %v2909 = vadd.f32 %v2820, %v2908
      %2910 = vmatmul.bf16.gmra.mxu0 %v2464
      %v2911 = vpop.f32.mrf.mxu0
      %v2912 = vadd.f32 %v2823, %v2911
      %v2913 = vpop.f32.mrf.mxu0
      %v2914 = vadd.f32 %v2825, %v2913
      %2915 = vdwg.mxu0
      %2916 = vmatpush.bf16.msra.mxu0 %v2713
      %2917 = vmatpush.bf16.msra.mxu0 %v2712
      %2918 = vmatpush.bf16.msra.mxu0 %v2711
      %2919 = vmatpush.bf16.msra.mxu0 %v2710
      %2920 = vmatpush.bf16.msra.mxu0 %v2709
      %2921 = vmatpush.bf16.msra.mxu0 %v2708
      %2922 = vmatpush.bf16.msra.mxu0 %v2707
      %2923 = vmatpush.bf16.msra.mxu0 %v2706
      %2924 = vmatmul.bf16.gmra.mxu0 %v2483
      %v2925 = vpop.f32.mrf.mxu0
      %v2926 = vadd.f32 %v2837, %v2925
      %v2927 = vpop.f32.mrf.mxu0
      %v2928 = vadd.f32 %v2839, %v2927
      %2929 = vmatmul.bf16.gmra.mxu0 %v2486
      %v2930 = vpop.f32.mrf.mxu0
      %v2931 = vadd.f32 %v2842, %v2930
      %v2932 = vpop.f32.mrf.mxu0
      %v2933 = vadd.f32 %v2844, %v2932
      %2934 = vmatmul.bf16.gmra.mxu0 %v2489
      %v2935 = vpop.f32.mrf.mxu0
      %v2936 = vadd.f32 %v2847, %v2935
      %v2937 = vpop.f32.mrf.mxu0
      %v2938 = vadd.f32 %v2849, %v2937
      %2939 = vmatmul.bf16.gmra.mxu0 %v2492
      %v2940 = vpop.f32.mrf.mxu0
      %v2941 = vadd.f32 %v2852, %v2940
      %v2942 = vpop.f32.mrf.mxu0
      %v2943 = vadd.f32 %v2854, %v2942
      %2944 = vmatmul.bf16.gmra.mxu0 %v2495
      %v2945 = vpop.f32.mrf.mxu0
      %v2946 = vadd.f32 %v2857, %v2945
      %v2947 = vpop.f32.mrf.mxu0
      %v2948 = vadd.f32 %v2859, %v2947
      %2949 = vmatmul.bf16.gmra.mxu0 %v2498
      %v2950 = vpop.f32.mrf.mxu0
      %v2951 = vadd.f32 %v2862, %v2950
      %v2952 = vpop.f32.mrf.mxu0
      %v2953 = vadd.f32 %v2864, %v2952
      %2954 = vmatmul.bf16.gmra.mxu0 %v2501
      %v2955 = vpop.f32.mrf.mxu0
      %v2956 = vadd.f32 %v2867, %v2955
      %v2957 = vpop.f32.mrf.mxu0
      %v2958 = vadd.f32 %v2869, %v2957
      %2959 = vmatmul.bf16.gmra.mxu0 %v2504
      %v2960 = vpop.f32.mrf.mxu0
      %v2961 = vadd.f32 %v2872, %v2960
      %v2962 = vpop.f32.mrf.mxu0
      %v2963 = vadd.f32 %v2874, %v2962
      %2964 = vmatmul.bf16.gmra.mxu0 %v2507
      %v2965 = vpop.f32.mrf.mxu0
      %v2966 = vadd.f32 %v2877, %v2965
      %v2967 = vpop.f32.mrf.mxu0
      %v2968 = vadd.f32 %v2879, %v2967
      %2969 = vmatmul.bf16.gmra.mxu0 %v2510
      %v2970 = vpop.f32.mrf.mxu0
      %v2971 = vadd.f32 %v2882, %v2970
      %v2972 = vpop.f32.mrf.mxu0
      %v2973 = vadd.f32 %v2884, %v2972
      %2974 = vmatmul.bf16.gmra.mxu0 %v2513
      %v2975 = vpop.f32.mrf.mxu0
      %v2976 = vadd.f32 %v2887, %v2975
      %v2977 = vpop.f32.mrf.mxu0
      %v2978 = vadd.f32 %v2889, %v2977
      %2979 = vmatmul.bf16.gmra.mxu0 %v2516
      %v2980 = vpop.f32.mrf.mxu0
      %v2981 = vadd.f32 %v2892, %v2980
      %v2982 = vpop.f32.mrf.mxu0
      %v2983 = vadd.f32 %v2894, %v2982
      %2984 = vmatmul.bf16.gmra.mxu0 %v2519
      %v2985 = vpop.f32.mrf.mxu0
      %v2986 = vadd.f32 %v2897, %v2985
      %v2987 = vpop.f32.mrf.mxu0
      %v2988 = vadd.f32 %v2899, %v2987
      %2989 = vmatmul.bf16.gmra.mxu0 %v2522
      %v2990 = vpop.f32.mrf.mxu0
      %v2991 = vadd.f32 %v2902, %v2990
      %v2992 = vpop.f32.mrf.mxu0
      %v2993 = vadd.f32 %v2904, %v2992
      %2994 = vmatmul.bf16.gmra.mxu0 %v2525
      %v2995 = vpop.f32.mrf.mxu0
      %v2996 = vadd.f32 %v2907, %v2995
      %v2997 = vpop.f32.mrf.mxu0
      %v2998 = vadd.f32 %v2909, %v2997
      %2999 = vmatmul.bf16.gmra.mxu0 %v2528
      %v3000 = vpop.f32.mrf.mxu0
      %v3001 = vadd.f32 %v2912, %v3000
      %v3002 = vpop.f32.mrf.mxu0
      %v3003 = vadd.f32 %v2914, %v3002
      %3004 = vdwg.mxu0
      %v3005 = vadd.f32 %v2001, %v2926
      %v3006 = vadd.f32 %v2003, %v2928
      %v3007 = vadd.f32 %v2006, %v2931
      %v3008 = vadd.f32 %v2008, %v2933
      %v3009 = vadd.f32 %v2011, %v2936
      %v3010 = vadd.f32 %v2013, %v2938
      %v3011 = vadd.f32 %v2016, %v2941
      %v3012 = vadd.f32 %v2018, %v2943
      %v3013 = vadd.f32 %v2021, %v2946
      %v3014 = vadd.f32 %v2023, %v2948
      %v3015 = vadd.f32 %v2026, %v2951
      %v3016 = vadd.f32 %v2028, %v2953
      %v3017 = vadd.f32 %v2031, %v2956
      %v3018 = vadd.f32 %v2033, %v2958
      %v3019 = vadd.f32 %v2036, %v2961
      %v3020 = vadd.f32 %v2038, %v2963
      %v3021 = vadd.f32 %v2041, %v2966
      %v3022 = vadd.f32 %v2043, %v2968
      %v3023 = vadd.f32 %v2046, %v2971
      %v3024 = vadd.f32 %v2048, %v2973
      %v3025 = vadd.f32 %v2051, %v2976
      %v3026 = vadd.f32 %v2053, %v2978
      %v3027 = vadd.f32 %v2056, %v2981
      %v3028 = vadd.f32 %v2058, %v2983
      %v3029 = vadd.f32 %v2061, %v2986
      %v3030 = vadd.f32 %v2063, %v2988
      %v3031 = vadd.f32 %v2066, %v2991
      %v3032 = vadd.f32 %v2068, %v2993
      %v3033 = vadd.f32 %v2071, %v2996
      %v3034 = vadd.f32 %v2073, %v2998
      %v3035 = vadd.f32 %v2076, %v3001
      %v3036 = vadd.f32 %v2078, %v3003
      %v3037 = vld [vmem:[%s2] sm:$0x1]
      %v3039 = vperm.slane %v3037, 0
      %v3041 = vmul.f32 %v3005, %v3039
      %v3042 = vmul.f32 %v3006, %v3039
      %v3043 = vmul.f32 %v3007, %v3039
      %v3044 = vmul.f32 %v3008, %v3039
      %v3045 = vmul.f32 %v3009, %v3039
      %v3046 = vmul.f32 %v3010, %v3039
      %v3047 = vmul.f32 %v3011, %v3039
      %v3048 = vmul.f32 %v3012, %v3039
      %v3049 = vmul.f32 %v3013, %v3039
      %v3050 = vmul.f32 %v3014, %v3039
      %v3051 = vmul.f32 %v3015, %v3039
      %v3052 = vmul.f32 %v3016, %v3039
      %v3053 = vmul.f32 %v3017, %v3039
      %v3054 = vmul.f32 %v3018, %v3039
      %v3055 = vmul.f32 %v3019, %v3039
      %v3056 = vmul.f32 %v3020, %v3039
      %v3057 = vmul.f32 %v3021, %v3039
      %v3058 = vmul.f32 %v3022, %v3039
      %v3059 = vmul.f32 %v3023, %v3039
      %v3060 = vmul.f32 %v3024, %v3039
      %v3061 = vmul.f32 %v3025, %v3039
      %v3062 = vmul.f32 %v3026, %v3039
      %v3063 = vmul.f32 %v3027, %v3039
      %v3064 = vmul.f32 %v3028, %v3039
      %v3065 = vmul.f32 %v3029, %v3039
      %v3066 = vmul.f32 %v3030, %v3039
      %v3067 = vmul.f32 %v3031, %v3039
      %v3068 = vmul.f32 %v3032, %v3039
      %v3069 = vmul.f32 %v3033, %v3039
      %v3070 = vmul.f32 %v3034, %v3039
      %v3071 = vmul.f32 %v3035, %v3039
      %v3072 = vmul.f32 %v3036, %v3039
      %v3073 = vld [vmem:[%s3] sm:$0x1]
      %v3075 = vperm.slane %v3073, 0
      %v3077 = vadd.f32 %v3041, %v3075
      %v3078 = vadd.f32 %v3042, %v3075
      %v3079 = vadd.f32 %v3043, %v3075
      %v3080 = vadd.f32 %v3044, %v3075
      %v3081 = vadd.f32 %v3045, %v3075
      %v3082 = vadd.f32 %v3046, %v3075
      %v3083 = vadd.f32 %v3047, %v3075
      %v3084 = vadd.f32 %v3048, %v3075
      %v3085 = vadd.f32 %v3049, %v3075
      %v3086 = vadd.f32 %v3050, %v3075
      %v3087 = vadd.f32 %v3051, %v3075
      %v3088 = vadd.f32 %v3052, %v3075
      %v3089 = vadd.f32 %v3053, %v3075
      %v3090 = vadd.f32 %v3054, %v3075
      %v3091 = vadd.f32 %v3055, %v3075
      %v3092 = vadd.f32 %v3056, %v3075
      %v3093 = vadd.f32 %v3057, %v3075
      %v3094 = vadd.f32 %v3058, %v3075
      %v3095 = vadd.f32 %v3059, %v3075
      %v3096 = vadd.f32 %v3060, %v3075
      %v3097 = vadd.f32 %v3061, %v3075
      %v3098 = vadd.f32 %v3062, %v3075
      %v3099 = vadd.f32 %v3063, %v3075
      %v3100 = vadd.f32 %v3064, %v3075
      %v3101 = vadd.f32 %v3065, %v3075
      %v3102 = vadd.f32 %v3066, %v3075
      %v3103 = vadd.f32 %v3067, %v3075
      %v3104 = vadd.f32 %v3068, %v3075
      %v3105 = vadd.f32 %v3069, %v3075
      %v3106 = vadd.f32 %v3070, %v3075
      %v3107 = vadd.f32 %v3071, %v3075
      %v3108 = vadd.f32 %v3072, %v3075
      %v3109 = vmax.f32 %v3077, 0.0
      %v3110 = vmax.f32 %v3078, 0.0
      %v3111 = vmax.f32 %v3079, 0.0
      %v3112 = vmax.f32 %v3080, 0.0
      %v3113 = vmax.f32 %v3081, 0.0
      %v3114 = vmax.f32 %v3082, 0.0
      %v3115 = vmax.f32 %v3083, 0.0
      %v3116 = vmax.f32 %v3084, 0.0
      %v3117 = vmax.f32 %v3085, 0.0
      %v3118 = vmax.f32 %v3086, 0.0
      %v3119 = vmax.f32 %v3087, 0.0
      %v3120 = vmax.f32 %v3088, 0.0
      %v3121 = vmax.f32 %v3089, 0.0
      %v3122 = vmax.f32 %v3090, 0.0
      %v3123 = vmax.f32 %v3091, 0.0
      %v3124 = vmax.f32 %v3092, 0.0
      %v3125 = vmax.f32 %v3093, 0.0
      %v3126 = vmax.f32 %v3094, 0.0
      %v3127 = vmax.f32 %v3095, 0.0
      %v3128 = vmax.f32 %v3096, 0.0
      %v3129 = vmax.f32 %v3097, 0.0
      %v3130 = vmax.f32 %v3098, 0.0
      %v3131 = vmax.f32 %v3099, 0.0
      %v3132 = vmax.f32 %v3100, 0.0
      %v3133 = vmax.f32 %v3101, 0.0
      %v3134 = vmax.f32 %v3102, 0.0
      %v3135 = vmax.f32 %v3103, 0.0
      %v3136 = vmax.f32 %v3104, 0.0
      %v3137 = vmax.f32 %v3105, 0.0
      %v3138 = vmax.f32 %v3106, 0.0
      %v3139 = vmax.f32 %v3107, 0.0
      %v3140 = vmax.f32 %v3108, 0.0
      %v3141 = vpack.c.bf16 %v3109, %v3109
      %v3142 = vpack.c.bf16 %v3110, %v3110
      %v3143 = vpack.c.bf16 %v3111, %v3111
      %v3144 = vpack.c.bf16 %v3112, %v3112
      %v3145 = vpack.c.bf16 %v3113, %v3113
      %v3146 = vpack.c.bf16 %v3114, %v3114
      %v3147 = vpack.c.bf16 %v3115, %v3115
      %v3148 = vpack.c.bf16 %v3116, %v3116
      %v3149 = vpack.c.bf16 %v3117, %v3117
      %v3150 = vpack.c.bf16 %v3118, %v3118
      %v3151 = vpack.c.bf16 %v3119, %v3119
      %v3152 = vpack.c.bf16 %v3120, %v3120
      %v3153 = vpack.c.bf16 %v3121, %v3121
      %v3154 = vpack.c.bf16 %v3122, %v3122
      %v3155 = vpack.c.bf16 %v3123, %v3123
      %v3156 = vpack.c.bf16 %v3124, %v3124
      %v3157 = vpack.c.bf16 %v3125, %v3125
      %v3158 = vpack.c.bf16 %v3126, %v3126
      %v3159 = vpack.c.bf16 %v3127, %v3127
      %v3160 = vpack.c.bf16 %v3128, %v3128
      %v3161 = vpack.c.bf16 %v3129, %v3129
      %v3162 = vpack.c.bf16 %v3130, %v3130
      %v3163 = vpack.c.bf16 %v3131, %v3131
      %v3164 = vpack.c.bf16 %v3132, %v3132
      %v3165 = vpack.c.bf16 %v3133, %v3133
      %v3166 = vpack.c.bf16 %v3134, %v3134
      %v3167 = vpack.c.bf16 %v3135, %v3135
      %v3168 = vpack.c.bf16 %v3136, %v3136
      %v3169 = vpack.c.bf16 %v3137, %v3137
      %v3170 = vpack.c.bf16 %v3138, %v3138
      %v3171 = vpack.c.bf16 %v3139, %v3139
      %v3172 = vpack.c.bf16 %v3140, %v3140
      %3173 = vst [vmem:[%s228] sm:$0xf] %v3141
      %3174 = vst [vmem:[%s228 + $0x4] sm:$0xf] %v3142
      %3175 = vst [vmem:[%s228 + $0x8] sm:$0xf] %v3143
      %3176 = vst [vmem:[%s228 + $0xc] sm:$0xf] %v3144
      %3177 = vst [vmem:[%s228 + $0x10] sm:$0xf] %v3145
      %3178 = vst [vmem:[%s228 + $0x14] sm:$0xf] %v3146
      %3179 = vst [vmem:[%s228 + $0x18] sm:$0xf] %v3147
      %3180 = vst [vmem:[%s228 + $0x1c] sm:$0xf] %v3148
      %3181 = vst [vmem:[%s228 + $0x20] sm:$0xf] %v3149
      %3182 = vst [vmem:[%s228 + $0x24] sm:$0xf] %v3150
      %3183 = vst [vmem:[%s228 + $0x28] sm:$0xf] %v3151
      %3184 = vst [vmem:[%s228 + $0x2c] sm:$0xf] %v3152
      %3185 = vst [vmem:[%s228 + $0x30] sm:$0xf] %v3153
      %3186 = vst [vmem:[%s228 + $0x34] sm:$0xf] %v3154
      %3187 = vst [vmem:[%s228 + $0x38] sm:$0xf] %v3155
      %3188 = vst [vmem:[%s228 + $0x3c] sm:$0xf] %v3156
      %3189 = vst [vmem:[%s228 + $0x40] sm:$0xf] %v3157
      %3190 = vst [vmem:[%s228 + $0x44] sm:$0xf] %v3158
      %3191 = vst [vmem:[%s228 + $0x48] sm:$0xf] %v3159
      %3192 = vst [vmem:[%s228 + $0x4c] sm:$0xf] %v3160
      %3193 = vst [vmem:[%s228 + $0x50] sm:$0xf] %v3161
      %3194 = vst [vmem:[%s228 + $0x54] sm:$0xf] %v3162
      %3195 = vst [vmem:[%s228 + $0x58] sm:$0xf] %v3163
      %3196 = vst [vmem:[%s228 + $0x5c] sm:$0xf] %v3164
      %3197 = vst [vmem:[%s228 + $0x60] sm:$0xf] %v3165
      %3198 = vst [vmem:[%s228 + $0x64] sm:$0xf] %v3166
      %3199 = vst [vmem:[%s228 + $0x68] sm:$0xf] %v3167
      %3200 = vst [vmem:[%s228 + $0x6c] sm:$0xf] %v3168
      %3201 = vst [vmem:[%s228 + $0x70] sm:$0xf] %v3169
      %3202 = vst [vmem:[%s228 + $0x74] sm:$0xf] %v3170
      %3203 = vst [vmem:[%s228 + $0x78] sm:$0xf] %v3171
      %3204 = vst [vmem:[%s228 + $0x7c] sm:$0xf] %v3172
      %s3205 = smul.u32 16, %s20
      %p3206 = scmp.lt.s32.totalorder %s19, 1
      %s3207 = scalar_select %p3206, %s19, 1
      %p3208 = scmp.lt.s32.totalorder %s3205, 15
      %s3209 = scalar_select %p3208, %s3205, 15
      %s3210 = smul.addr %s3209, 2
      %s3211 = smul.addr %s3207, 32
      %s3212 = sadd.s32 %s3210, %s3211
      %s3213 = smul.addr %s3212, 4
      %s3214 = scalar_lea.vmem %s4, %s3213
      // Predicated region
      $region37: #{_lambda_.3} parent=35 // pred_check
        %p3215 = pneg %p138
      $region38: #{_lambda_.3} parent=35 // pred_check_branch
        %3217 = sbr.rel (%p3215) target = $region40
      $region39: #{_lambda_.3} parent=35 // pred_region
        %s3218 = smul.u32 16, %s20
      $region40: #{_lambda_.3} parent=35 // pred_fallthru
        _
    $region36: #{_lambda_.3} parent=5 // pred_fallthru
      _
    %p3219 = scmp.le.s32.totalorder 2, %s10
    // Predicated region
    $region41: #{_lambda_.3} parent=5 // pred_check
      %p3220 = pneg %p3219
    $region42: #{_lambda_.3} parent=5 // pred_check_branch
      %3222 = sbr.rel (%p3220) target = $region44
    $region43: #{_lambda_.3} parent=5 // pred_region
      %s3223 = ssub.s32 %s10, 2
      // Predicated region
      $region45: #{_lambda_.3} parent=43 // pred_check
        %p3224 = pneg %p144
      $region46: #{_lambda_.3} parent=43 // pred_check_branch
        %3226 = sbr.rel (%p3224) target = $region48
      $region47: #{_lambda_.3} parent=43 // pred_region
        %s3227 = smul.u32 16, %s22
        %p3228 = scmp.lt.s32.totalorder %s21, 1
        %s3229 = scalar_select %p3228, %s21, 1
        %p3230 = scmp.lt.s32.totalorder %s3227, 15
        %s3231 = scalar_select %p3230, %s3227, 15
        %s3232 = smul.addr %s3231, 2
        %s3233 = smul.addr %s3229, 32
        %s3234 = sadd.s32 %s3232, %s3233
        %s3235 = smul.addr %s3234, 4
        %s3236 = scalar_lea.vmem %s4, %s3235
      $region48: #{_lambda_.3} parent=43 // pred_fallthru
        _
    $region44: #{_lambda_.3} parent=5 // pred_fallthru
      _
  $region6: #{_lambda_.3} parent=0 // loop_footer
    %s14 = sadd.s32 1, %s10
  $region7: #{_lambda_.3} parent=0 // loop_footer_branch
    %9 = sbr.rel target = $region3
  $region8: #{_lambda_.3} parent=0 // loop_exit
    _

</llo_original>
